<compile_context>
chip_gen: v7x
topology: tpu7x:2x2x1
jax: 0.10.0
libtpu: 0.0.40
codegen_flags: <defaults>
</compile_context>

<pallas_src>
import jax
import jax.numpy as jnp
from jax.experimental import pallas as pl
from jax.experimental.pallas import tpu as pltpu

# Module hyper-parameters (constants in the original repo).
INPUT_CHANNEL = 4
CODEBOOK_SIZE = 8
POWER_LEVEL = 4
H = W = 12                                    # implied by nn.Linear(12*12*8, 64)
_CONV_CHANNELS = (INPUT_CHANNEL, 8, 16, 8)    # conv channel chain


# ---------------------------------------------------------------------------
# In-kernel helpers
# ---------------------------------------------------------------------------
def _sigmoid(y):
    # exp + reciprocal both run on the EUP; approx=True would shave a couple of
    # VALU ops at large batch but exact keeps us bit-close to the reference.
    return pl.reciprocal(1.0 + jnp.exp(-y), approx=False)


def _conv3x3_sigmoid(src_ref, wb_ref, bt_ref):
    """3x3 same-conv + bias + sigmoid on a row-padded NHWC slab.

    src_ref: (H+2, W*Cin)        row-padded slab (rows 0 and H+1 are zero)
    wb_ref : (3, W*Cin, W*Cout)  banded weights, one band per kernel row dh
    bt_ref : (1, W*Cout)         bias tiled across the W positions
    returns: (H, W*Cout)         activation value (unpadded)
    """
    acc = jnp.dot(src_ref[0:H, :], wb_ref[0], preferred_element_type=jnp.float32)
    acc = acc + jnp.dot(src_ref[1:H + 1, :], wb_ref[1],
                        preferred_element_type=jnp.float32)
    acc = acc + jnp.dot(src_ref[2:H + 2, :], wb_ref[2],
                        preferred_element_type=jnp.float32)
    return _sigmoid(acc + bt_ref[...])


def _store_row_padded(dst_ref, y):
    """Write y into rows 1..H of dst_ref and zero the two border rows."""
    zero_row = jnp.zeros((1, y.shape[1]), y.dtype)
    dst_ref[0:1, :] = zero_row
    dst_ref[H + 1:H + 2, :] = zero_row
    dst_ref[1:H + 1, :] = y


def _dqn_kernel(x_ref, wb0_ref, bt0_ref, wb1_ref, bt1_ref, wb2_ref, bt2_ref,
                wf_ref, bf_ref, wo_ref, bo_ref, o_ref, a1_ref, a2_ref):
    # Conv stack: activations never leave VMEM.
    _store_row_padded(a1_ref, _conv3x3_sigmoid(x_ref, wb0_ref, bt0_ref))
    _store_row_padded(a2_ref, _conv3x3_sigmoid(a1_ref, wb1_ref, bt1_ref))
    y3 = _conv3x3_sigmoid(a2_ref, wb2_ref, bt2_ref)   # (H, W*8), stays in vregs

    # fullCon: contract the (h, w, c) activation against the fc weight whose
    # rows were pre-permuted to match torch's NCHW flatten order.
    acc = jnp.zeros((1, bf_ref.shape[1]), jnp.float32)
    for h in range(H):                                # unrolled: 12 tiny matmuls
        acc = acc + jnp.dot(y3[h:h + 1, :], wf_ref[h],
                            preferred_element_type=jnp.float32)
    hidden = _sigmoid(acc + bf_ref[...])              # (1, 64)

    # output head + relu
    out = jnp.dot(hidden, wo_ref[...], preferred_element_type=jnp.float32)
    o_ref[...] = jnp.maximum(out + bo_ref[...], 0.0)  # (1, 32)


# ---------------------------------------------------------------------------
# Parameters (PyTorch layout) and one-time conversion to the kernel layout
# ---------------------------------------------------------------------------
def _uniform(key, shape, fan_in):
    bound = 1.0 / float(fan_in) ** 0.5
    return jax.random.uniform(key, shape, jnp.float32, -bound, bound)


def init_params(key):
    """PyTorch-layout params: conv (OC, IC, 3, 3); linears stored as (in, out)
    so y = x @ w + b with x flattened in NCHW order (as torch.flatten)."""
    ks = jax.random.split(key, 10)
    p = {}
    p["w0"] = _uniform(ks[0], (8, INPUT_CHANNEL, 3, 3), INPUT_CHANNEL * 9)
    p["b0"] = _uniform(ks[1], (8,), INPUT_CHANNEL * 9)
    p["w1"] = _uniform(ks[2], (16, 8, 3, 3), 8 * 9)
    p["b1"] = _uniform(ks[3], (16,), 8 * 9)
    p["w2"] = _uniform(ks[4], (8, 16, 3, 3), 16 * 9)
    p["b2"] = _uniform(ks[5], (8,), 16 * 9)
    p["wf"] = _uniform(ks[6], (H * W * 8, 64), H * W * 8)
    p["bf"] = _uniform(ks[7], (64,), H * W * 8)
    p["wo"] = _uniform(ks[8], (64, CODEBOOK_SIZE * POWER_LEVEL), 64)
    p["bo"] = _uniform(ks[9], (CODEBOOK_SIZE * POWER_LEVEL,), 64)
    return p


def _banded_conv_weight(k):
    """PyTorch conv weight (OC, IC, 3, 3) -> banded (3, W*IC, W*OC).

    wb[dh, w_in*IC + c, w*OC + oc] = k[oc, c, dh, w_in - w + 1] inside the band
    (zero elsewhere), so for a row-padded NHWC slab s:
        conv_out[h, w*OC + oc] = sum_dh  (s[h + dh, :] @ wb[dh])[w*OC + oc].
    Width-edge zero padding is implicit (no taps outside w_in in [0, W))."""
    oc, ic = int(k.shape[0]), int(k.shape[1])
    wb = jnp.zeros((3, W * ic, W * oc), jnp.float32)
    for w in range(W):
        for dw in range(3):
            w_in = w + dw - 1
            if 0 <= w_in < W:
                blk = jnp.transpose(k[:, :, :, dw], (2, 1, 0))   # [dh, c, oc]
                wb = wb.at[:, w_in * ic:(w_in + 1) * ic,
                           w * oc:(w + 1) * oc].set(blk)
    return wb


def prepare_params(p):
    """Convert PyTorch-layout parameters to the fused-kernel layout (once)."""
    kp = {}
    for name in ("0", "1", "2"):
        kp["wb" + name] = _banded_conv_weight(p["w" + name])
        kp["bt" + name] = jnp.tile(p["b" + name], W).reshape(1, -1)
    c3 = int(p["w2"].shape[0])                 # channels entering the fc (8)
    # torch flattens NCHW (c, h, w); our slab columns are (w, c) per row h.
    h_i = jnp.arange(H)[:, None, None]
    w_i = jnp.arange(W)[None, :, None]
    c_i = jnp.arange(c3)[None, None, :]
    nchw_row = (c_i * (H * W) + h_i * W + w_i).reshape(H, W * c3)
    kp["wf3"] = p["wf"][nchw_row, :]           # (H, W*c3, 64)
    kp["bf"] = p["bf"].reshape(1, -1)
    kp["wo"] = p["wo"]
    kp["bo"] = p["bo"].reshape(1, -1)
    return kp


# ---------------------------------------------------------------------------
# Forward pass (single fused pallas_call)
# ---------------------------------------------------------------------------
def dqn_forward(kp, x):
    """x: (B, INPUT_CHANNEL, 12, 12) NCHW float32 -> (B, 32) float32."""
    B = x.shape[0]
    c0 = _CONV_CHANNELS[0]
    # One-time layout glue: NCHW -> row-padded NHWC slab (B, H+2, W*C0).
    x_slab = x.transpose(0, 2, 3, 1).reshape(B, H, W * c0)
    x_slab = jnp.pad(x_slab, ((0, 0), (1, 1), (0, 0)))

    n_out = kp["bo"].shape[1]
    weight_args = (kp["wb0"], kp["bt0"], kp["wb1"], kp["bt1"], kp["wb2"],
                   kp["bt2"], kp["wf3"], kp["bf"], kp["wo"], kp["bo"])

    conv_flops = sum(3 * 2 * H * (W * cin) * (W * cout)
                     for cin, cout in zip(_CONV_CHANNELS[:-1], _CONV_CHANNELS[1:]))
    fc_flops = 2 * H * (W * _CONV_CHANNELS[-1]) * kp["bf"].shape[1] \
        + 2 * kp["bf"].shape[1] * n_out
    trans = H * W * sum(_CONV_CHANNELS[1:]) + kp["bf"].shape[1]
    cost = pl.CostEstimate(
        flops=B * (conv_flops + fc_flops),
        transcendentals=B * trans,
        bytes_accessed=4 * (int(x_slab.size) + B * n_out
                            + sum(int(a.size) for a in weight_args)))

    resident2 = lambda b: (0, 0)      # weights/biases stay VMEM-resident
    resident3 = lambda b: (0, 0, 0)

    out = pl.pallas_call(
        _dqn_kernel,
        out_shape=jax.ShapeDtypeStruct((B, 1, n_out), jnp.float32),
        grid=(B,),
        in_specs=[
            pl.BlockSpec((None, H + 2, W * c0), lambda b: (b, 0, 0)),
            pl.BlockSpec(kp["wb0"].shape, resident3),
            pl.BlockSpec(kp["bt0"].shape, resident2),
            pl.BlockSpec(kp["wb1"].shape, resident3),
            pl.BlockSpec(kp["bt1"].shape, resident2),
            pl.BlockSpec(kp["wb2"].shape, resident3),
            pl.BlockSpec(kp["bt2"].shape, resident2),
            pl.BlockSpec(kp["wf3"].shape, resident3),
            pl.BlockSpec(kp["bf"].shape, resident2),
            pl.BlockSpec(kp["wo"].shape, resident2),
            pl.BlockSpec(kp["bo"].shape, resident2),
        ],
        out_specs=pl.BlockSpec((None, 1, n_out), lambda b: (b, 0, 0)),
        scratch_shapes=[
            pltpu.VMEM((H + 2, W * _CONV_CHANNELS[1]), jnp.float32),
            pltpu.VMEM((H + 2, W * _CONV_CHANNELS[2]), jnp.float32),
        ],
        compiler_params=pltpu.CompilerParams(
            dimension_semantics=("parallel",)),
        cost_estimate=cost,
    )(x_slab, *weight_args)
    return out.reshape(B, n_out)


# ---------------------------------------------------------------------------
# Pure-JAX reference (PyTorch semantics) for verification
# ---------------------------------------------------------------------------
def dqn_reference(p, x):
    hp = jax.lax.Precision.HIGHEST

    def conv(x, w, b):
        y = jax.lax.conv_general_dilated(
            x, w, window_strides=(1, 1), padding=((1, 1), (1, 1)),
            dimension_numbers=("NCHW", "OIHW", "NCHW"), precision=hp)
        return y + b[None, :, None, None]

    x = jax.nn.sigmoid(conv(x, p["w0"], p["b0"]))
    x = jax.nn.sigmoid(conv(x, p["w1"], p["b1"]))
    x = jax.nn.sigmoid(conv(x, p["w2"], p["b2"]))
    x = x.reshape(x.shape[0], -1)                       # NCHW flatten (torch)
    x = jax.nn.sigmoid(jnp.dot(x, p["wf"], precision=hp) + p["bf"])
    return jnp.maximum(jnp.dot(x, p["wo"], precision=hp) + p["bo"], 0.0)


if __name__ == "__main__":
    key = jax.random.PRNGKey(0)
    k_param, k_x = jax.random.split(key)
    params = init_params(k_param)          # PyTorch-layout parameters
    kparams = prepare_params(params)       # fused-kernel layout (one-time)

    batch = 2
    x = jax.random.normal(k_x, (batch, INPUT_CHANNEL, H, W), jnp.float32)

    out = jax.block_until_ready(jax.jit(dqn_forward)(kparams, x))

    assert out.shape == (batch, CODEBOOK_SIZE * POWER_LEVEL)
    assert out.dtype == jnp.float32
    assert bool(jnp.all(out >= 0.0))                     # relu output
    ref = dqn_reference(params, x)
    assert bool(jnp.allclose(out, ref, atol=2e-2, rtol=2e-2)), (
        "max abs diff vs reference: " + str(float(jnp.max(jnp.abs(out - ref)))))
    print("KERNEL_OK")
</pallas_src>

<mosaic_0001>
module attributes {stable_mosaic.version = 11 : i64} {
  func.func @_dqn_kernel(%arg0: i32, %arg1: memref<1x14x48xf32, #tpu.memory_space<vmem>>, %arg2: memref<3x48x96xf32, #tpu.memory_space<vmem>>, %arg3: memref<1x96xf32, #tpu.memory_space<vmem>>, %arg4: memref<3x96x192xf32, #tpu.memory_space<vmem>>, %arg5: memref<1x192xf32, #tpu.memory_space<vmem>>, %arg6: memref<3x192x96xf32, #tpu.memory_space<vmem>>, %arg7: memref<1x96xf32, #tpu.memory_space<vmem>>, %arg8: memref<12x96x64xf32, #tpu.memory_space<vmem>>, %arg9: memref<1x64xf32, #tpu.memory_space<vmem>>, %arg10: memref<64x32xf32, #tpu.memory_space<vmem>>, %arg11: memref<1x32xf32, #tpu.memory_space<vmem>>, %arg12: memref<1x1x32xf32, #tpu.memory_space<vmem>>, %arg13: memref<14x96xf32, #tpu.memory_space<vmem>>, %arg14: memref<14x192xf32, #tpu.memory_space<vmem>>) attributes {dimension_semantics = [#tpu.dimension_semantics<parallel>], iteration_bounds = array<i64: 2>, scalar_prefetch = 0 : i64, scratch_operands = 2 : i64, tpu.core_type = #tpu.core_type<tc>, window_params = [{transform_indices = @transform_0, window_bounds = array<i64: 1, 14, 48>}, {pipeline_mode = #tpu.pipeline_mode<synchronous>, transform_indices = @transform_1, window_bounds = array<i64: 3, 48, 96>}, {pipeline_mode = #tpu.pipeline_mode<synchronous>, transform_indices = @transform_2, window_bounds = array<i64: 1, 96>}, {pipeline_mode = #tpu.pipeline_mode<synchronous>, transform_indices = @transform_3, window_bounds = array<i64: 3, 96, 192>}, {pipeline_mode = #tpu.pipeline_mode<synchronous>, transform_indices = @transform_4, window_bounds = array<i64: 1, 192>}, {pipeline_mode = #tpu.pipeline_mode<synchronous>, transform_indices = @transform_5, window_bounds = array<i64: 3, 192, 96>}, {pipeline_mode = #tpu.pipeline_mode<synchronous>, transform_indices = @transform_6, window_bounds = array<i64: 1, 96>}, {pipeline_mode = #tpu.pipeline_mode<synchronous>, transform_indices = @transform_7, window_bounds = array<i64: 12, 96, 64>}, {pipeline_mode = #tpu.pipeline_mode<synchronous>, transform_indices = @transform_8, window_bounds = array<i64: 1, 64>}, {pipeline_mode = #tpu.pipeline_mode<synchronous>, transform_indices = @transform_9, window_bounds = array<i64: 64, 32>}, {pipeline_mode = #tpu.pipeline_mode<synchronous>, transform_indices = @transform_10, window_bounds = array<i64: 1, 32>}, {transform_indices = @transform_11, window_bounds = array<i64: 1, 1, 32>}]} {
    %c0 = arith.constant 0 : index
    %c0_0 = arith.constant 0 : index
    %c0_1 = arith.constant 0 : index
    %0 = vector.load %arg1[%c0, %c0_0, %c0_1] : memref<1x14x48xf32, #tpu.memory_space<vmem>>, vector<1x12x48xf32>
    %1 = vector.shape_cast %0 : vector<1x12x48xf32> to vector<12x48xf32>
    %c0_2 = arith.constant 0 : index
    %c0_3 = arith.constant 0 : index
    %c0_4 = arith.constant 0 : index
    %2 = vector.load %arg2[%c0_2, %c0_3, %c0_4] : memref<3x48x96xf32, #tpu.memory_space<vmem>>, vector<1x48x96xf32>
    %3 = vector.shape_cast %2 : vector<1x48x96xf32> to vector<48x96xf32>
    %cst = arith.constant dense<0.000000e+00> : vector<12x96xf32>
    %4 = tpu.matmul %1, %3, %cst {dimension_numbers = #tpu.dot_dimension_numbers<[1], [0], [0], [1], [0, 0, 1, 1], [], []>} : vector<12x48xf32>, vector<48x96xf32>, vector<12x96xf32> -> vector<12x96xf32>
    %c0_5 = arith.constant 0 : index
    %c1 = arith.constant 1 : index
    %c0_6 = arith.constant 0 : index
    %5 = vector.load %arg1[%c0_5, %c1, %c0_6] : memref<1x14x48xf32, #tpu.memory_space<vmem>>, vector<1x12x48xf32>
    %6 = vector.shape_cast %5 : vector<1x12x48xf32> to vector<12x48xf32>
    %c1_7 = arith.constant 1 : index
    %c0_8 = arith.constant 0 : index
    %c0_9 = arith.constant 0 : index
    %7 = vector.load %arg2[%c1_7, %c0_8, %c0_9] : memref<3x48x96xf32, #tpu.memory_space<vmem>>, vector<1x48x96xf32>
    %8 = vector.shape_cast %7 : vector<1x48x96xf32> to vector<48x96xf32>
    %cst_10 = arith.constant dense<0.000000e+00> : vector<12x96xf32>
    %9 = tpu.matmul %6, %8, %cst_10 {dimension_numbers = #tpu.dot_dimension_numbers<[1], [0], [0], [1], [0, 0, 1, 1], [], []>} : vector<12x48xf32>, vector<48x96xf32>, vector<12x96xf32> -> vector<12x96xf32>
    %10 = arith.addf %4, %9 : vector<12x96xf32>
    %c0_11 = arith.constant 0 : index
    %c2 = arith.constant 2 : index
    %c0_12 = arith.constant 0 : index
    %11 = vector.load %arg1[%c0_11, %c2, %c0_12] : memref<1x14x48xf32, #tpu.memory_space<vmem>>, vector<1x12x48xf32>
    %12 = vector.shape_cast %11 : vector<1x12x48xf32> to vector<12x48xf32>
    %c2_13 = arith.constant 2 : index
    %c0_14 = arith.constant 0 : index
    %c0_15 = arith.constant 0 : index
    %13 = vector.load %arg2[%c2_13, %c0_14, %c0_15] : memref<3x48x96xf32, #tpu.memory_space<vmem>>, vector<1x48x96xf32>
    %14 = vector.shape_cast %13 : vector<1x48x96xf32> to vector<48x96xf32>
    %cst_16 = arith.constant dense<0.000000e+00> : vector<12x96xf32>
    %15 = tpu.matmul %12, %14, %cst_16 {dimension_numbers = #tpu.dot_dimension_numbers<[1], [0], [0], [1], [0, 0, 1, 1], [], []>} : vector<12x48xf32>, vector<48x96xf32>, vector<12x96xf32> -> vector<12x96xf32>
    %16 = arith.addf %10, %15 : vector<12x96xf32>
    %c0_17 = arith.constant 0 : index
    %c0_18 = arith.constant 0 : index
    %17 = vector.load %arg3[%c0_17, %c0_18] : memref<1x96xf32, #tpu.memory_space<vmem>>, vector<1x96xf32>
    %18 = vector.broadcast %17 : vector<1x96xf32> to vector<12x96xf32>
    %19 = arith.addf %16, %18 : vector<12x96xf32>
    %cst_19 = arith.constant 0.000000e+00 : f32
    %20 = vector.broadcast %cst_19 : f32 to vector<12x96xf32>
    %21 = arith.subf %20, %19 : vector<12x96xf32>
    %22 = math.exp %21 : vector<12x96xf32>
    %cst_20 = arith.constant 1.000000e+00 : f32
    %23 = vector.broadcast %cst_20 : f32 to vector<12x96xf32>
    %24 = arith.addf %23, %22 : vector<12x96xf32>
    %25 = tpu.reciprocal %24 : vector<12x96xf32> -> vector<12x96xf32>
    %cst_21 = arith.constant 0.000000e+00 : f32
    %26 = vector.broadcast %cst_21 : f32 to vector<1x96xf32>
    %c0_22 = arith.constant 0 : index
    %c0_23 = arith.constant 0 : index
    %27 = vector.load %arg13[%c0_22, %c0_23] : memref<14x96xf32, #tpu.memory_space<vmem>>, vector<1x96xf32>
    tpu.vector_store %arg13[%c0_22, %c0_23], %26 {strides = array<i32>} : memref<14x96xf32, #tpu.memory_space<vmem>>, vector<1x96xf32>,
    %c13 = arith.constant 13 : index
    %c0_24 = arith.constant 0 : index
    %28 = vector.load %arg13[%c13, %c0_24] : memref<14x96xf32, #tpu.memory_space<vmem>>, vector<1x96xf32>
    tpu.vector_store %arg13[%c13, %c0_24], %26 {strides = array<i32>} : memref<14x96xf32, #tpu.memory_space<vmem>>, vector<1x96xf32>,
    %c1_25 = arith.constant 1 : index
    %c0_26 = arith.constant 0 : index
    %29 = vector.load %arg13[%c1_25, %c0_26] : memref<14x96xf32, #tpu.memory_space<vmem>>, vector<12x96xf32>
    tpu.vector_store %arg13[%c1_25, %c0_26], %25 {strides = array<i32>} : memref<14x96xf32, #tpu.memory_space<vmem>>, vector<12x96xf32>,
    %c0_27 = arith.constant 0 : index
    %c0_28 = arith.constant 0 : index
    %30 = vector.load %arg13[%c0_27, %c0_28] : memref<14x96xf32, #tpu.memory_space<vmem>>, vector<12x96xf32>
    %c0_29 = arith.constant 0 : index
    %c0_30 = arith.constant 0 : index
    %c0_31 = arith.constant 0 : index
    %31 = vector.load %arg4[%c0_29, %c0_30, %c0_31] : memref<3x96x192xf32, #tpu.memory_space<vmem>>, vector<1x96x192xf32>
    %32 = vector.shape_cast %31 : vector<1x96x192xf32> to vector<96x192xf32>
    %cst_32 = arith.constant dense<0.000000e+00> : vector<12x192xf32>
    %33 = tpu.matmul %30, %32, %cst_32 {dimension_numbers = #tpu.dot_dimension_numbers<[1], [0], [0], [1], [0, 0, 1, 1], [], []>} : vector<12x96xf32>, vector<96x192xf32>, vector<12x192xf32> -> vector<12x192xf32>
    %c1_33 = arith.constant 1 : index
    %c0_34 = arith.constant 0 : index
    %34 = vector.load %arg13[%c1_33, %c0_34] : memref<14x96xf32, #tpu.memory_space<vmem>>, vector<12x96xf32>
    %c1_35 = arith.constant 1 : index
    %c0_36 = arith.constant 0 : index
    %c0_37 = arith.constant 0 : index
    %35 = vector.load %arg4[%c1_35, %c0_36, %c0_37] : memref<3x96x192xf32, #tpu.memory_space<vmem>>, vector<1x96x192xf32>
    %36 = vector.shape_cast %35 : vector<1x96x192xf32> to vector<96x192xf32>
    %cst_38 = arith.constant dense<0.000000e+00> : vector<12x192xf32>
    %37 = tpu.matmul %34, %36, %cst_38 {dimension_numbers = #tpu.dot_dimension_numbers<[1], [0], [0], [1], [0, 0, 1, 1], [], []>} : vector<12x96xf32>, vector<96x192xf32>, vector<12x192xf32> -> vector<12x192xf32>
    %38 = arith.addf %33, %37 : vector<12x192xf32>
    %c2_39 = arith.constant 2 : index
    %c0_40 = arith.constant 0 : index
    %39 = vector.load %arg13[%c2_39, %c0_40] : memref<14x96xf32, #tpu.memory_space<vmem>>, vector<12x96xf32>
    %c2_41 = arith.constant 2 : index
    %c0_42 = arith.constant 0 : index
    %c0_43 = arith.constant 0 : index
    %40 = vector.load %arg4[%c2_41, %c0_42, %c0_43] : memref<3x96x192xf32, #tpu.memory_space<vmem>>, vector<1x96x192xf32>
    %41 = vector.shape_cast %40 : vector<1x96x192xf32> to vector<96x192xf32>
    %cst_44 = arith.constant dense<0.000000e+00> : vector<12x192xf32>
    %42 = tpu.matmul %39, %41, %cst_44 {dimension_numbers = #tpu.dot_dimension_numbers<[1], [0], [0], [1], [0, 0, 1, 1], [], []>} : vector<12x96xf32>, vector<96x192xf32>, vector<12x192xf32> -> vector<12x192xf32>
    %43 = arith.addf %38, %42 : vector<12x192xf32>
    %c0_45 = arith.constant 0 : index
    %c0_46 = arith.constant 0 : index
    %44 = vector.load %arg5[%c0_45, %c0_46] : memref<1x192xf32, #tpu.memory_space<vmem>>, vector<1x192xf32>
    %45 = vector.broadcast %44 : vector<1x192xf32> to vector<12x192xf32>
    %46 = arith.addf %43, %45 : vector<12x192xf32>
    %cst_47 = arith.constant 0.000000e+00 : f32
    %47 = vector.broadcast %cst_47 : f32 to vector<12x192xf32>
    %48 = arith.subf %47, %46 : vector<12x192xf32>
    %49 = math.exp %48 : vector<12x192xf32>
    %cst_48 = arith.constant 1.000000e+00 : f32
    %50 = vector.broadcast %cst_48 : f32 to vector<12x192xf32>
    %51 = arith.addf %50, %49 : vector<12x192xf32>
    %52 = tpu.reciprocal %51 : vector<12x192xf32> -> vector<12x192xf32>
    %cst_49 = arith.constant 0.000000e+00 : f32
    %53 = vector.broadcast %cst_49 : f32 to vector<1x192xf32>
    %c0_50 = arith.constant 0 : index
    %c0_51 = arith.constant 0 : index
    %54 = vector.load %arg14[%c0_50, %c0_51] : memref<14x192xf32, #tpu.memory_space<vmem>>, vector<1x192xf32>
    tpu.vector_store %arg14[%c0_50, %c0_51], %53 {strides = array<i32>} : memref<14x192xf32, #tpu.memory_space<vmem>>, vector<1x192xf32>,
    %c13_52 = arith.constant 13 : index
    %c0_53 = arith.constant 0 : index
    %55 = vector.load %arg14[%c13_52, %c0_53] : memref<14x192xf32, #tpu.memory_space<vmem>>, vector<1x192xf32>
    tpu.vector_store %arg14[%c13_52, %c0_53], %53 {strides = array<i32>} : memref<14x192xf32, #tpu.memory_space<vmem>>, vector<1x192xf32>,
    %c1_54 = arith.constant 1 : index
    %c0_55 = arith.constant 0 : index
    %56 = vector.load %arg14[%c1_54, %c0_55] : memref<14x192xf32, #tpu.memory_space<vmem>>, vector<12x192xf32>
    tpu.vector_store %arg14[%c1_54, %c0_55], %52 {strides = array<i32>} : memref<14x192xf32, #tpu.memory_space<vmem>>, vector<12x192xf32>,
    %c0_56 = arith.constant 0 : index
    %c0_57 = arith.constant 0 : index
    %57 = vector.load %arg14[%c0_56, %c0_57] : memref<14x192xf32, #tpu.memory_space<vmem>>, vector<12x192xf32>
    %c0_58 = arith.constant 0 : index
    %c0_59 = arith.constant 0 : index
    %c0_60 = arith.constant 0 : index
    %58 = vector.load %arg6[%c0_58, %c0_59, %c0_60] : memref<3x192x96xf32, #tpu.memory_space<vmem>>, vector<1x192x96xf32>
    %59 = vector.shape_cast %58 : vector<1x192x96xf32> to vector<192x96xf32>
    %cst_61 = arith.constant dense<0.000000e+00> : vector<12x96xf32>
    %60 = tpu.matmul %57, %59, %cst_61 {dimension_numbers = #tpu.dot_dimension_numbers<[1], [0], [0], [1], [0, 0, 1, 1], [], []>} : vector<12x192xf32>, vector<192x96xf32>, vector<12x96xf32> -> vector<12x96xf32>
    %c1_62 = arith.constant 1 : index
    %c0_63 = arith.constant 0 : index
    %61 = vector.load %arg14[%c1_62, %c0_63] : memref<14x192xf32, #tpu.memory_space<vmem>>, vector<12x192xf32>
    %c1_64 = arith.constant 1 : index
    %c0_65 = arith.constant 0 : index
    %c0_66 = arith.constant 0 : index
    %62 = vector.load %arg6[%c1_64, %c0_65, %c0_66] : memref<3x192x96xf32, #tpu.memory_space<vmem>>, vector<1x192x96xf32>
    %63 = vector.shape_cast %62 : vector<1x192x96xf32> to vector<192x96xf32>
    %cst_67 = arith.constant dense<0.000000e+00> : vector<12x96xf32>
    %64 = tpu.matmul %61, %63, %cst_67 {dimension_numbers = #tpu.dot_dimension_numbers<[1], [0], [0], [1], [0, 0, 1, 1], [], []>} : vector<12x192xf32>, vector<192x96xf32>, vector<12x96xf32> -> vector<12x96xf32>
    %65 = arith.addf %60, %64 : vector<12x96xf32>
    %c2_68 = arith.constant 2 : index
    %c0_69 = arith.constant 0 : index
    %66 = vector.load %arg14[%c2_68, %c0_69] : memref<14x192xf32, #tpu.memory_space<vmem>>, vector<12x192xf32>
    %c2_70 = arith.constant 2 : index
    %c0_71 = arith.constant 0 : index
    %c0_72 = arith.constant 0 : index
    %67 = vector.load %arg6[%c2_70, %c0_71, %c0_72] : memref<3x192x96xf32, #tpu.memory_space<vmem>>, vector<1x192x96xf32>
    %68 = vector.shape_cast %67 : vector<1x192x96xf32> to vector<192x96xf32>
    %cst_73 = arith.constant dense<0.000000e+00> : vector<12x96xf32>
    %69 = tpu.matmul %66, %68, %cst_73 {dimension_numbers = #tpu.dot_dimension_numbers<[1], [0], [0], [1], [0, 0, 1, 1], [], []>} : vector<12x192xf32>, vector<192x96xf32>, vector<12x96xf32> -> vector<12x96xf32>
    %70 = arith.addf %65, %69 : vector<12x96xf32>
    %c0_74 = arith.constant 0 : index
    %c0_75 = arith.constant 0 : index
    %71 = vector.load %arg7[%c0_74, %c0_75] : memref<1x96xf32, #tpu.memory_space<vmem>>, vector<1x96xf32>
    %72 = vector.broadcast %71 : vector<1x96xf32> to vector<12x96xf32>
    %73 = arith.addf %70, %72 : vector<12x96xf32>
    %cst_76 = arith.constant 0.000000e+00 : f32
    %74 = vector.broadcast %cst_76 : f32 to vector<12x96xf32>
    %75 = arith.subf %74, %73 : vector<12x96xf32>
    %76 = math.exp %75 : vector<12x96xf32>
    %cst_77 = arith.constant 1.000000e+00 : f32
    %77 = vector.broadcast %cst_77 : f32 to vector<12x96xf32>
    %78 = arith.addf %77, %76 : vector<12x96xf32>
    %79 = tpu.reciprocal %78 : vector<12x96xf32> -> vector<12x96xf32>
    %cst_78 = arith.constant 0.000000e+00 : f32
    %80 = vector.broadcast %cst_78 : f32 to vector<1x64xf32>
    %81 = vector.extract_strided_slice %79 {offsets = [0, 0], sizes = [1, 96], strides = [1, 1]} : vector<12x96xf32> to vector<1x96xf32>
    %c0_79 = arith.constant 0 : index
    %c0_80 = arith.constant 0 : index
    %c0_81 = arith.constant 0 : index
    %82 = vector.load %arg8[%c0_79, %c0_80, %c0_81] : memref<12x96x64xf32, #tpu.memory_space<vmem>>, vector<1x96x64xf32>
    %83 = vector.shape_cast %82 : vector<1x96x64xf32> to vector<96x64xf32>
    %cst_82 = arith.constant dense<0.000000e+00> : vector<1x64xf32>
    %84 = tpu.matmul %81, %83, %cst_82 {dimension_numbers = #tpu.dot_dimension_numbers<[1], [0], [0], [1], [0, 0, 1, 1], [], []>} : vector<1x96xf32>, vector<96x64xf32>, vector<1x64xf32> -> vector<1x64xf32>
    %85 = arith.addf %80, %84 : vector<1x64xf32>
    %86 = vector.extract_strided_slice %79 {offsets = [1, 0], sizes = [1, 96], strides = [1, 1]} : vector<12x96xf32> to vector<1x96xf32>
    %c1_83 = arith.constant 1 : index
    %c0_84 = arith.constant 0 : index
    %c0_85 = arith.constant 0 : index
    %87 = vector.load %arg8[%c1_83, %c0_84, %c0_85] : memref<12x96x64xf32, #tpu.memory_space<vmem>>, vector<1x96x64xf32>
    %88 = vector.shape_cast %87 : vector<1x96x64xf32> to vector<96x64xf32>
    %cst_86 = arith.constant dense<0.000000e+00> : vector<1x64xf32>
    %89 = tpu.matmul %86, %88, %cst_86 {dimension_numbers = #tpu.dot_dimension_numbers<[1], [0], [0], [1], [0, 0, 1, 1], [], []>} : vector<1x96xf32>, vector<96x64xf32>, vector<1x64xf32> -> vector<1x64xf32>
    %90 = arith.addf %85, %89 : vector<1x64xf32>
    %91 = vector.extract_strided_slice %79 {offsets = [2, 0], sizes = [1, 96], strides = [1, 1]} : vector<12x96xf32> to vector<1x96xf32>
    %c2_87 = arith.constant 2 : index
    %c0_88 = arith.constant 0 : index
    %c0_89 = arith.constant 0 : index
    %92 = vector.load %arg8[%c2_87, %c0_88, %c0_89] : memref<12x96x64xf32, #tpu.memory_space<vmem>>, vector<1x96x64xf32>
    %93 = vector.shape_cast %92 : vector<1x96x64xf32> to vector<96x64xf32>
    %cst_90 = arith.constant dense<0.000000e+00> : vector<1x64xf32>
    %94 = tpu.matmul %91, %93, %cst_90 {dimension_numbers = #tpu.dot_dimension_numbers<[1], [0], [0], [1], [0, 0, 1, 1], [], []>} : vector<1x96xf32>, vector<96x64xf32>, vector<1x64xf32> -> vector<1x64xf32>
    %95 = arith.addf %90, %94 : vector<1x64xf32>
    %96 = vector.extract_strided_slice %79 {offsets = [3, 0], sizes = [1, 96], strides = [1, 1]} : vector<12x96xf32> to vector<1x96xf32>
    %c3 = arith.constant 3 : index
    %c0_91 = arith.constant 0 : index
    %c0_92 = arith.constant 0 : index
    %97 = vector.load %arg8[%c3, %c0_91, %c0_92] : memref<12x96x64xf32, #tpu.memory_space<vmem>>, vector<1x96x64xf32>
    %98 = vector.shape_cast %97 : vector<1x96x64xf32> to vector<96x64xf32>
    %cst_93 = arith.constant dense<0.000000e+00> : vector<1x64xf32>
    %99 = tpu.matmul %96, %98, %cst_93 {dimension_numbers = #tpu.dot_dimension_numbers<[1], [0], [0], [1], [0, 0, 1, 1], [], []>} : vector<1x96xf32>, vector<96x64xf32>, vector<1x64xf32> -> vector<1x64xf32>
    %100 = arith.addf %95, %99 : vector<1x64xf32>
    %101 = vector.extract_strided_slice %79 {offsets = [4, 0], sizes = [1, 96], strides = [1, 1]} : vector<12x96xf32> to vector<1x96xf32>
    %c4 = arith.constant 4 : index
    %c0_94 = arith.constant 0 : index
    %c0_95 = arith.constant 0 : index
    %102 = vector.load %arg8[%c4, %c0_94, %c0_95] : memref<12x96x64xf32, #tpu.memory_space<vmem>>, vector<1x96x64xf32>
    %103 = vector.shape_cast %102 : vector<1x96x64xf32> to vector<96x64xf32>
    %cst_96 = arith.constant dense<0.000000e+00> : vector<1x64xf32>
    %104 = tpu.matmul %101, %103, %cst_96 {dimension_numbers = #tpu.dot_dimension_numbers<[1], [0], [0], [1], [0, 0, 1, 1], [], []>} : vector<1x96xf32>, vector<96x64xf32>, vector<1x64xf32> -> vector<1x64xf32>
    %105 = arith.addf %100, %104 : vector<1x64xf32>
    %106 = vector.extract_strided_slice %79 {offsets = [5, 0], sizes = [1, 96], strides = [1, 1]} : vector<12x96xf32> to vector<1x96xf32>
    %c5 = arith.constant 5 : index
    %c0_97 = arith.constant 0 : index
    %c0_98 = arith.constant 0 : index
    %107 = vector.load %arg8[%c5, %c0_97, %c0_98] : memref<12x96x64xf32, #tpu.memory_space<vmem>>, vector<1x96x64xf32>
    %108 = vector.shape_cast %107 : vector<1x96x64xf32> to vector<96x64xf32>
    %cst_99 = arith.constant dense<0.000000e+00> : vector<1x64xf32>
    %109 = tpu.matmul %106, %108, %cst_99 {dimension_numbers = #tpu.dot_dimension_numbers<[1], [0], [0], [1], [0, 0, 1, 1], [], []>} : vector<1x96xf32>, vector<96x64xf32>, vector<1x64xf32> -> vector<1x64xf32>
    %110 = arith.addf %105, %109 : vector<1x64xf32>
    %111 = vector.extract_strided_slice %79 {offsets = [6, 0], sizes = [1, 96], strides = [1, 1]} : vector<12x96xf32> to vector<1x96xf32>
    %c6 = arith.constant 6 : index
    %c0_100 = arith.constant 0 : index
    %c0_101 = arith.constant 0 : index
    %112 = vector.load %arg8[%c6, %c0_100, %c0_101] : memref<12x96x64xf32, #tpu.memory_space<vmem>>, vector<1x96x64xf32>
    %113 = vector.shape_cast %112 : vector<1x96x64xf32> to vector<96x64xf32>
    %cst_102 = arith.constant dense<0.000000e+00> : vector<1x64xf32>
    %114 = tpu.matmul %111, %113, %cst_102 {dimension_numbers = #tpu.dot_dimension_numbers<[1], [0], [0], [1], [0, 0, 1, 1], [], []>} : vector<1x96xf32>, vector<96x64xf32>, vector<1x64xf32> -> vector<1x64xf32>
    %115 = arith.addf %110, %114 : vector<1x64xf32>
    %116 = vector.extract_strided_slice %79 {offsets = [7, 0], sizes = [1, 96], strides = [1, 1]} : vector<12x96xf32> to vector<1x96xf32>
    %c7 = arith.constant 7 : index
    %c0_103 = arith.constant 0 : index
    %c0_104 = arith.constant 0 : index
    %117 = vector.load %arg8[%c7, %c0_103, %c0_104] : memref<12x96x64xf32, #tpu.memory_space<vmem>>, vector<1x96x64xf32>
    %118 = vector.shape_cast %117 : vector<1x96x64xf32> to vector<96x64xf32>
    %cst_105 = arith.constant dense<0.000000e+00> : vector<1x64xf32>
    %119 = tpu.matmul %116, %118, %cst_105 {dimension_numbers = #tpu.dot_dimension_numbers<[1], [0], [0], [1], [0, 0, 1, 1], [], []>} : vector<1x96xf32>, vector<96x64xf32>, vector<1x64xf32> -> vector<1x64xf32>
    %120 = arith.addf %115, %119 : vector<1x64xf32>
    %121 = vector.extract_strided_slice %79 {offsets = [8, 0], sizes = [1, 96], strides = [1, 1]} : vector<12x96xf32> to vector<1x96xf32>
    %c8 = arith.constant 8 : index
    %c0_106 = arith.constant 0 : index
    %c0_107 = arith.constant 0 : index
    %122 = vector.load %arg8[%c8, %c0_106, %c0_107] : memref<12x96x64xf32, #tpu.memory_space<vmem>>, vector<1x96x64xf32>
    %123 = vector.shape_cast %122 : vector<1x96x64xf32> to vector<96x64xf32>
    %cst_108 = arith.constant dense<0.000000e+00> : vector<1x64xf32>
    %124 = tpu.matmul %121, %123, %cst_108 {dimension_numbers = #tpu.dot_dimension_numbers<[1], [0], [0], [1], [0, 0, 1, 1], [], []>} : vector<1x96xf32>, vector<96x64xf32>, vector<1x64xf32> -> vector<1x64xf32>
    %125 = arith.addf %120, %124 : vector<1x64xf32>
    %126 = vector.extract_strided_slice %79 {offsets = [9, 0], sizes = [1, 96], strides = [1, 1]} : vector<12x96xf32> to vector<1x96xf32>
    %c9 = arith.constant 9 : index
    %c0_109 = arith.constant 0 : index
    %c0_110 = arith.constant 0 : index
    %127 = vector.load %arg8[%c9, %c0_109, %c0_110] : memref<12x96x64xf32, #tpu.memory_space<vmem>>, vector<1x96x64xf32>
    %128 = vector.shape_cast %127 : vector<1x96x64xf32> to vector<96x64xf32>
    %cst_111 = arith.constant dense<0.000000e+00> : vector<1x64xf32>
    %129 = tpu.matmul %126, %128, %cst_111 {dimension_numbers = #tpu.dot_dimension_numbers<[1], [0], [0], [1], [0, 0, 1, 1], [], []>} : vector<1x96xf32>, vector<96x64xf32>, vector<1x64xf32> -> vector<1x64xf32>
    %130 = arith.addf %125, %129 : vector<1x64xf32>
    %131 = vector.extract_strided_slice %79 {offsets = [10, 0], sizes = [1, 96], strides = [1, 1]} : vector<12x96xf32> to vector<1x96xf32>
    %c10 = arith.constant 10 : index
    %c0_112 = arith.constant 0 : index
    %c0_113 = arith.constant 0 : index
    %132 = vector.load %arg8[%c10, %c0_112, %c0_113] : memref<12x96x64xf32, #tpu.memory_space<vmem>>, vector<1x96x64xf32>
    %133 = vector.shape_cast %132 : vector<1x96x64xf32> to vector<96x64xf32>
    %cst_114 = arith.constant dense<0.000000e+00> : vector<1x64xf32>
    %134 = tpu.matmul %131, %133, %cst_114 {dimension_numbers = #tpu.dot_dimension_numbers<[1], [0], [0], [1], [0, 0, 1, 1], [], []>} : vector<1x96xf32>, vector<96x64xf32>, vector<1x64xf32> -> vector<1x64xf32>
    %135 = arith.addf %130, %134 : vector<1x64xf32>
    %136 = vector.extract_strided_slice %79 {offsets = [11, 0], sizes = [1, 96], strides = [1, 1]} : vector<12x96xf32> to vector<1x96xf32>
    %c11 = arith.constant 11 : index
    %c0_115 = arith.constant 0 : index
    %c0_116 = arith.constant 0 : index
    %137 = vector.load %arg8[%c11, %c0_115, %c0_116] : memref<12x96x64xf32, #tpu.memory_space<vmem>>, vector<1x96x64xf32>
    %138 = vector.shape_cast %137 : vector<1x96x64xf32> to vector<96x64xf32>
    %cst_117 = arith.constant dense<0.000000e+00> : vector<1x64xf32>
    %139 = tpu.matmul %136, %138, %cst_117 {dimension_numbers = #tpu.dot_dimension_numbers<[1], [0], [0], [1], [0, 0, 1, 1], [], []>} : vector<1x96xf32>, vector<96x64xf32>, vector<1x64xf32> -> vector<1x64xf32>
    %140 = arith.addf %135, %139 : vector<1x64xf32>
    %c0_118 = arith.constant 0 : index
    %c0_119 = arith.constant 0 : index
    %141 = vector.load %arg9[%c0_118, %c0_119] : memref<1x64xf32, #tpu.memory_space<vmem>>, vector<1x64xf32>
    %142 = arith.addf %140, %141 : vector<1x64xf32>
    %cst_120 = arith.constant 0.000000e+00 : f32
    %143 = vector.broadcast %cst_120 : f32 to vector<1x64xf32>
    %144 = arith.subf %143, %142 : vector<1x64xf32>
    %145 = math.exp %144 : vector<1x64xf32>
    %cst_121 = arith.constant 1.000000e+00 : f32
    %146 = vector.broadcast %cst_121 : f32 to vector<1x64xf32>
    %147 = arith.addf %146, %145 : vector<1x64xf32>
    %148 = tpu.reciprocal %147 : vector<1x64xf32> -> vector<1x64xf32>
    %c0_122 = arith.constant 0 : index
    %c0_123 = arith.constant 0 : index
    %149 = vector.load %arg10[%c0_122, %c0_123] : memref<64x32xf32, #tpu.memory_space<vmem>>, vector<64x32xf32>
    %cst_124 = arith.constant dense<0.000000e+00> : vector<1x32xf32>
    %150 = tpu.matmul %148, %149, %cst_124 {dimension_numbers = #tpu.dot_dimension_numbers<[1], [0], [0], [1], [0, 0, 1, 1], [], []>} : vector<1x64xf32>, vector<64x32xf32>, vector<1x32xf32> -> vector<1x32xf32>
    %c0_125 = arith.constant 0 : index
    %c0_126 = arith.constant 0 : index
    %151 = vector.load %arg11[%c0_125, %c0_126] : memref<1x32xf32, #tpu.memory_space<vmem>>, vector<1x32xf32>
    %152 = arith.addf %150, %151 : vector<1x32xf32>
    %cst_127 = arith.constant 0.000000e+00 : f32
    %153 = vector.broadcast %cst_127 : f32 to vector<1x32xf32>
    %154 = arith.maximumf %152, %153 : vector<1x32xf32>
    %c0_128 = arith.constant 0 : index
    %c0_129 = arith.constant 0 : index
    %c0_130 = arith.constant 0 : index
    %155 = vector.load %arg12[%c0_128, %c0_129, %c0_130] : memref<1x1x32xf32, #tpu.memory_space<vmem>>, vector<1x1x32xf32>
    %156 = vector.shape_cast %155 : vector<1x1x32xf32> to vector<1x32xf32>
    %157 = vector.shape_cast %154 : vector<1x32xf32> to vector<1x1x32xf32>
    tpu.vector_store %arg12[%c0_128, %c0_129, %c0_130], %157 {strides = array<i32>} : memref<1x1x32xf32, #tpu.memory_space<vmem>>, vector<1x1x32xf32>,
    return
  }
  func.func @transform_0(%arg0: i32) -> (i32, i32, i32) {
    %c0_i32 = arith.constant 0 : i32
    %c0_i32_0 = arith.constant 0 : i32
    %c0_i32_1 = arith.constant 0 : i32
    return %arg0, %c0_i32, %c0_i32_0 : i32, i32, i32
  }
  func.func @transform_1(%arg0: i32) -> (i32, i32, i32) {
    %c0_i32 = arith.constant 0 : i32
    %c0_i32_0 = arith.constant 0 : i32
    %c0_i32_1 = arith.constant 0 : i32
    %c0_i32_2 = arith.constant 0 : i32
    return %c0_i32, %c0_i32_0, %c0_i32_1 : i32, i32, i32
  }
  func.func @transform_2(%arg0: i32) -> (i32, i32) {
    %c0_i32 = arith.constant 0 : i32
    %c0_i32_0 = arith.constant 0 : i32
    %c0_i32_1 = arith.constant 0 : i32
    return %c0_i32, %c0_i32_0 : i32, i32
  }
  func.func @transform_3(%arg0: i32) -> (i32, i32, i32) {
    %c0_i32 = arith.constant 0 : i32
    %c0_i32_0 = arith.constant 0 : i32
    %c0_i32_1 = arith.constant 0 : i32
    %c0_i32_2 = arith.constant 0 : i32
    return %c0_i32, %c0_i32_0, %c0_i32_1 : i32, i32, i32
  }
  func.func @transform_4(%arg0: i32) -> (i32, i32) {
    %c0_i32 = arith.constant 0 : i32
    %c0_i32_0 = arith.constant 0 : i32
    %c0_i32_1 = arith.constant 0 : i32
    return %c0_i32, %c0_i32_0 : i32, i32
  }
  func.func @transform_5(%arg0: i32) -> (i32, i32, i32) {
    %c0_i32 = arith.constant 0 : i32
    %c0_i32_0 = arith.constant 0 : i32
    %c0_i32_1 = arith.constant 0 : i32
    %c0_i32_2 = arith.constant 0 : i32
    return %c0_i32, %c0_i32_0, %c0_i32_1 : i32, i32, i32
  }
  func.func @transform_6(%arg0: i32) -> (i32, i32) {
    %c0_i32 = arith.constant 0 : i32
    %c0_i32_0 = arith.constant 0 : i32
    %c0_i32_1 = arith.constant 0 : i32
    return %c0_i32, %c0_i32_0 : i32, i32
  }
  func.func @transform_7(%arg0: i32) -> (i32, i32, i32) {
    %c0_i32 = arith.constant 0 : i32
    %c0_i32_0 = arith.constant 0 : i32
    %c0_i32_1 = arith.constant 0 : i32
    %c0_i32_2 = arith.constant 0 : i32
    return %c0_i32, %c0_i32_0, %c0_i32_1 : i32, i32, i32
  }
  func.func @transform_8(%arg0: i32) -> (i32, i32) {
    %c0_i32 = arith.constant 0 : i32
    %c0_i32_0 = arith.constant 0 : i32
    %c0_i32_1 = arith.constant 0 : i32
    return %c0_i32, %c0_i32_0 : i32, i32
  }
  func.func @transform_9(%arg0: i32) -> (i32, i32) {
    %c0_i32 = arith.constant 0 : i32
    %c0_i32_0 = arith.constant 0 : i32
    %c0_i32_1 = arith.constant 0 : i32
    return %c0_i32, %c0_i32_0 : i32, i32
  }
  func.func @transform_10(%arg0: i32) -> (i32, i32) {
    %c0_i32 = arith.constant 0 : i32
    %c0_i32_0 = arith.constant 0 : i32
    %c0_i32_1 = arith.constant 0 : i32
    return %c0_i32, %c0_i32_0 : i32, i32
  }
  func.func @transform_11(%arg0: i32) -> (i32, i32, i32) {
    %c0_i32 = arith.constant 0 : i32
    %c0_i32_0 = arith.constant 0 : i32
    %c0_i32_1 = arith.constant 0 : i32
    return %arg0, %c0_i32, %c0_i32_0 : i32, i32, i32
  }
}

</mosaic_0001>

<llo_original>
// kernel: dqn_forward.1
$region0: #{dqn_forward.1}
  #allocation0 [shape = 'u32[]', space=smem, size = 0x4, offset = 0x4, fixed_abs, tag = 'smem constant byte address 0x4 - core index']
  #allocation1 [shape = 'u32[144,128]{1,0:T(1,128)}', space=vmem, size = 0x12000, scoped, tag = 'internal scratch']
  #allocation2 [shape = 'f32[14,96]{1,0:T(8,128)}', space=vmem, size = 0x2000, scoped, tag = 'scratch operand']
  #allocation3 [shape = 'f32[14,192]{1,0:T(8,128)}', space=vmem, size = 0x4000, scoped, tag = 'scratch operand']
  %s0 = inlined_call_operand.vmem [shape: f32[2,14,48], index: 0, kind: input, shape index: {}]
  %s1 = inlined_call_operand.vmem [shape: f32[3,48,96], index: 1, kind: input, shape index: {}]
  %s2 = inlined_call_operand.vmem [shape: f32[1,96], index: 2, kind: input, shape index: {}]
  %s3 = inlined_call_operand.vmem [shape: f32[3,96,192], index: 3, kind: input, shape index: {}]
  %s4 = inlined_call_operand.vmem [shape: f32[1,192], index: 4, kind: input, shape index: {}]
  %s5 = inlined_call_operand.vmem [shape: f32[3,192,96], index: 5, kind: input, shape index: {}]
  %s6 = inlined_call_operand.vmem [shape: f32[1,96], index: 6, kind: input, shape index: {}]
  %s7 = inlined_call_operand.vmem [shape: f32[12,96,64], index: 7, kind: input, shape index: {}]
  %s8 = inlined_call_operand.vmem [shape: f32[1,64], index: 8, kind: input, shape index: {}]
  %s9 = inlined_call_operand.vmem [shape: f32[64,32], index: 9, kind: input, shape index: {}]
  %s10 = inlined_call_operand.vmem [shape: f32[1,32], index: 10, kind: input, shape index: {}]
  %s11 = inlined_call_operand.hbm [shape: f32[2,1,32], index: 11, kind: output, shape index: {}]
  %s12 = sld [smem:[#allocation0]]
  $region77: #{dqn_forward.1} parent=0
    _
  %s14 = ssub.s32 1, %s12
  %s15 = scalar_select 0, %s14, %s12
  $region1: #{dqn_forward.1} parent=0
    #allocation4 [shape = 'u8[1024]{0}', space=vmem, size = 0x400, scoped, tag = 'output window, operand 0']
    #allocation5 [shape = 's32[2]{0}', space=sflag, size = 0x8, scoped, tag = 'scoped memory for dqn_forward.1']
    %16 = vsyncpa [#allocation5], 0
    %s17 = scalar_lea.sflag [#allocation5], 1
    %18 = vsyncpa %s17, 0
    loop: start=0, step=1, limit=4
    $region2: #{dqn_forward.1} parent=1 // loop_pre_header
      _
    $region3: #{dqn_forward.1} parent=1 // loop_header
      %s20 = sphi 0, %s24
      %p21 = scmp.ge.s32.totalorder %s20, 4
      %s30 = sphi 0, %s32
      %s33 = sphi 0, %s30
      %s34 = sphi 0, %s33
      %s50 = sphi 0, %s34
      %s54 = sphi 0, %s54
      %s56 = sphi 0, %s54
      %s57 = sphi 0, %s56
      %s71 = sphi 0, %s57
      %s75 = sphi 0, %s75
      %s77 = sphi 0, %s75
      %s78 = sphi 0, %s77
      %s92 = sphi 0, %s78
      %s96 = sphi 0, %s96
      %s98 = sphi 0, %s96
      %s99 = sphi 0, %s98
      %s113 = sphi 0, %s99
      %s117 = sphi 0, %s117
      %s119 = sphi 0, %s117
      %s120 = sphi 0, %s119
      %s134 = sphi 0, %s120
      %s138 = sphi 0, %s138
      %s140 = sphi 0, %s138
      %s141 = sphi 0, %s140
      %s155 = sphi 0, %s141
      %s159 = sphi 0, %s159
      %s161 = sphi 0, %s159
      %s162 = sphi 0, %s161
      %s176 = sphi 0, %s162
      %s180 = sphi 0, %s180
      %s182 = sphi 0, %s180
      %s183 = sphi 0, %s182
      %s197 = sphi 0, %s183
      %s201 = sphi 0, %s201
      %s203 = sphi 0, %s201
      %s204 = sphi 0, %s203
      %s218 = sphi 0, %s204
      %s222 = sphi 0, %s222
      %s224 = sphi 0, %s222
      %s225 = sphi 0, %s224
      %s239 = sphi 0, %s225
      %s243 = sphi 0, %s243
      %s245 = sphi 0, %s243
      %s246 = sphi 0, %s245
      %s260 = sphi 0, %s246
      %s266 = sphi 0, %s268
      %s269 = sphi 0, %s266
      %s270 = sphi 0, %s269
      %s286 = sphi 0, %s270
    $region4: #{dqn_forward.1} parent=1 // loop_header_branch
      %23 = sbr.rel (%p21) target = $region8
    $region5: #{dqn_forward.1} parent=1 // loop_body
      %s25 = ssub.s32 %s20, 1
      %s26 = ssub.s32 %s20, 2
      %s27 = sadd.s32 %s20, 1
      %s28 = ssub.s32 %s20, %s27
      %p29 = scmp.eq.s32.totalorder %s28, 0
      %s31 = sadd.s32 %s30, 1
      %s32 = scalar_select %p29, %s30, %s31
      %p35 = pneg %p29
      %p36 = scmp.eq.s32.totalorder %s20, 1
      %p37 = por %p35, %p36
      %p38 = scmp.ne.s32.totalorder %s30, %s33
      %p39 = scmp.eq.s32.totalorder %s20, 0
      %p40 = por %p38, %p39
      %p41 = scmp.ne.s32.totalorder %s30, %s33
      %p42 = scmp.eq.s32.totalorder %s25, 1
      %p43 = por %p41, %p42
      %p44 = scmp.ne.s32.totalorder %s33, %s34
      %p45 = scmp.eq.s32.totalorder %s25, 0
      %p46 = por %p44, %p45
      %p47 = scmp.ne.s32.totalorder %s33, %s34
      %p48 = scmp.eq.s32.totalorder %s26, 1
      %p49 = por %p47, %p48
      %p51 = scmp.ne.s32.totalorder %s34, %s50
      %p52 = scmp.eq.s32.totalorder %s26, 0
      %p53 = por %p51, %p52
      %s55 = sadd.s32 %s54, 1
      %p58 = scmp.eq.s32.totalorder %s20, 1
      %p59 = scmp.ne.s32.totalorder %s54, %s56
      %p60 = scmp.eq.s32.totalorder %s20, 0
      %p61 = por %p59, %p60
      %p62 = scmp.ne.s32.totalorder %s54, %s56
      %p63 = scmp.eq.s32.totalorder %s25, 1
      %p64 = por %p62, %p63
      %p65 = scmp.ne.s32.totalorder %s56, %s57
      %p66 = scmp.eq.s32.totalorder %s25, 0
      %p67 = por %p65, %p66
      %p68 = scmp.ne.s32.totalorder %s56, %s57
      %p69 = scmp.eq.s32.totalorder %s26, 1
      %p70 = por %p68, %p69
      %p72 = scmp.ne.s32.totalorder %s57, %s71
      %p73 = scmp.eq.s32.totalorder %s26, 0
      %p74 = por %p72, %p73
      %s76 = sadd.s32 %s75, 1
      %p79 = scmp.eq.s32.totalorder %s20, 1
      %p80 = scmp.ne.s32.totalorder %s75, %s77
      %p81 = scmp.eq.s32.totalorder %s20, 0
      %p82 = por %p80, %p81
      %p83 = scmp.ne.s32.totalorder %s75, %s77
      %p84 = scmp.eq.s32.totalorder %s25, 1
      %p85 = por %p83, %p84
      %p86 = scmp.ne.s32.totalorder %s77, %s78
      %p87 = scmp.eq.s32.totalorder %s25, 0
      %p88 = por %p86, %p87
      %p89 = scmp.ne.s32.totalorder %s77, %s78
      %p90 = scmp.eq.s32.totalorder %s26, 1
      %p91 = por %p89, %p90
      %p93 = scmp.ne.s32.totalorder %s78, %s92
      %p94 = scmp.eq.s32.totalorder %s26, 0
      %p95 = por %p93, %p94
      %s97 = sadd.s32 %s96, 1
      %p100 = scmp.eq.s32.totalorder %s20, 1
      %p101 = scmp.ne.s32.totalorder %s96, %s98
      %p102 = scmp.eq.s32.totalorder %s20, 0
      %p103 = por %p101, %p102
      %p104 = scmp.ne.s32.totalorder %s96, %s98
      %p105 = scmp.eq.s32.totalorder %s25, 1
      %p106 = por %p104, %p105
      %p107 = scmp.ne.s32.totalorder %s98, %s99
      %p108 = scmp.eq.s32.totalorder %s25, 0
      %p109 = por %p107, %p108
      %p110 = scmp.ne.s32.totalorder %s98, %s99
      %p111 = scmp.eq.s32.totalorder %s26, 1
      %p112 = por %p110, %p111
      %p114 = scmp.ne.s32.totalorder %s99, %s113
      %p115 = scmp.eq.s32.totalorder %s26, 0
      %p116 = por %p114, %p115
      %s118 = sadd.s32 %s117, 1
      %p121 = scmp.eq.s32.totalorder %s20, 1
      %p122 = scmp.ne.s32.totalorder %s117, %s119
      %p123 = scmp.eq.s32.totalorder %s20, 0
      %p124 = por %p122, %p123
      %p125 = scmp.ne.s32.totalorder %s117, %s119
      %p126 = scmp.eq.s32.totalorder %s25, 1
      %p127 = por %p125, %p126
      %p128 = scmp.ne.s32.totalorder %s119, %s120
      %p129 = scmp.eq.s32.totalorder %s25, 0
      %p130 = por %p128, %p129
      %p131 = scmp.ne.s32.totalorder %s119, %s120
      %p132 = scmp.eq.s32.totalorder %s26, 1
      %p133 = por %p131, %p132
      %p135 = scmp.ne.s32.totalorder %s120, %s134
      %p136 = scmp.eq.s32.totalorder %s26, 0
      %p137 = por %p135, %p136
      %s139 = sadd.s32 %s138, 1
      %p142 = scmp.eq.s32.totalorder %s20, 1
      %p143 = scmp.ne.s32.totalorder %s138, %s140
      %p144 = scmp.eq.s32.totalorder %s20, 0
      %p145 = por %p143, %p144
      %p146 = scmp.ne.s32.totalorder %s138, %s140
      %p147 = scmp.eq.s32.totalorder %s25, 1
      %p148 = por %p146, %p147
      %p149 = scmp.ne.s32.totalorder %s140, %s141
      %p150 = scmp.eq.s32.totalorder %s25, 0
      %p151 = por %p149, %p150
      %p152 = scmp.ne.s32.totalorder %s140, %s141
      %p153 = scmp.eq.s32.totalorder %s26, 1
      %p154 = por %p152, %p153
      %p156 = scmp.ne.s32.totalorder %s141, %s155
      %p157 = scmp.eq.s32.totalorder %s26, 0
      %p158 = por %p156, %p157
      %s160 = sadd.s32 %s159, 1
      %p163 = scmp.eq.s32.totalorder %s20, 1
      %p164 = scmp.ne.s32.totalorder %s159, %s161
      %p165 = scmp.eq.s32.totalorder %s20, 0
      %p166 = por %p164, %p165
      %p167 = scmp.ne.s32.totalorder %s159, %s161
      %p168 = scmp.eq.s32.totalorder %s25, 1
      %p169 = por %p167, %p168
      %p170 = scmp.ne.s32.totalorder %s161, %s162
      %p171 = scmp.eq.s32.totalorder %s25, 0
      %p172 = por %p170, %p171
      %p173 = scmp.ne.s32.totalorder %s161, %s162
      %p174 = scmp.eq.s32.totalorder %s26, 1
      %p175 = por %p173, %p174
      %p177 = scmp.ne.s32.totalorder %s162, %s176
      %p178 = scmp.eq.s32.totalorder %s26, 0
      %p179 = por %p177, %p178
      %s181 = sadd.s32 %s180, 1
      %p184 = scmp.eq.s32.totalorder %s20, 1
      %p185 = scmp.ne.s32.totalorder %s180, %s182
      %p186 = scmp.eq.s32.totalorder %s20, 0
      %p187 = por %p185, %p186
      %p188 = scmp.ne.s32.totalorder %s180, %s182
      %p189 = scmp.eq.s32.totalorder %s25, 1
      %p190 = por %p188, %p189
      %p191 = scmp.ne.s32.totalorder %s182, %s183
      %p192 = scmp.eq.s32.totalorder %s25, 0
      %p193 = por %p191, %p192
      %p194 = scmp.ne.s32.totalorder %s182, %s183
      %p195 = scmp.eq.s32.totalorder %s26, 1
      %p196 = por %p194, %p195
      %p198 = scmp.ne.s32.totalorder %s183, %s197
      %p199 = scmp.eq.s32.totalorder %s26, 0
      %p200 = por %p198, %p199
      %s202 = sadd.s32 %s201, 1
      %p205 = scmp.eq.s32.totalorder %s20, 1
      %p206 = scmp.ne.s32.totalorder %s201, %s203
      %p207 = scmp.eq.s32.totalorder %s20, 0
      %p208 = por %p206, %p207
      %p209 = scmp.ne.s32.totalorder %s201, %s203
      %p210 = scmp.eq.s32.totalorder %s25, 1
      %p211 = por %p209, %p210
      %p212 = scmp.ne.s32.totalorder %s203, %s204
      %p213 = scmp.eq.s32.totalorder %s25, 0
      %p214 = por %p212, %p213
      %p215 = scmp.ne.s32.totalorder %s203, %s204
      %p216 = scmp.eq.s32.totalorder %s26, 1
      %p217 = por %p215, %p216
      %p219 = scmp.ne.s32.totalorder %s204, %s218
      %p220 = scmp.eq.s32.totalorder %s26, 0
      %p221 = por %p219, %p220
      %s223 = sadd.s32 %s222, 1
      %p226 = scmp.eq.s32.totalorder %s20, 1
      %p227 = scmp.ne.s32.totalorder %s222, %s224
      %p228 = scmp.eq.s32.totalorder %s20, 0
      %p229 = por %p227, %p228
      %p230 = scmp.ne.s32.totalorder %s222, %s224
      %p231 = scmp.eq.s32.totalorder %s25, 1
      %p232 = por %p230, %p231
      %p233 = scmp.ne.s32.totalorder %s224, %s225
      %p234 = scmp.eq.s32.totalorder %s25, 0
      %p235 = por %p233, %p234
      %p236 = scmp.ne.s32.totalorder %s224, %s225
      %p237 = scmp.eq.s32.totalorder %s26, 1
      %p238 = por %p236, %p237
      %p240 = scmp.ne.s32.totalorder %s225, %s239
      %p241 = scmp.eq.s32.totalorder %s26, 0
      %p242 = por %p240, %p241
      %s244 = sadd.s32 %s243, 1
      %p247 = scmp.eq.s32.totalorder %s20, 1
      %p248 = scmp.ne.s32.totalorder %s243, %s245
      %p249 = scmp.eq.s32.totalorder %s20, 0
      %p250 = por %p248, %p249
      %p251 = scmp.ne.s32.totalorder %s243, %s245
      %p252 = scmp.eq.s32.totalorder %s25, 1
      %p253 = por %p251, %p252
      %p254 = scmp.ne.s32.totalorder %s245, %s246
      %p255 = scmp.eq.s32.totalorder %s25, 0
      %p256 = por %p254, %p255
      %p257 = scmp.ne.s32.totalorder %s245, %s246
      %p258 = scmp.eq.s32.totalorder %s26, 1
      %p259 = por %p257, %p258
      %p261 = scmp.ne.s32.totalorder %s246, %s260
      %p262 = scmp.eq.s32.totalorder %s26, 0
      %p263 = por %p261, %p262
      %s264 = ssub.s32 %s20, %s27
      %p265 = scmp.eq.s32.totalorder %s264, 0
      %s267 = sadd.s32 %s266, 1
      %s268 = scalar_select %p265, %s266, %s267
      %p271 = pneg %p265
      %p272 = scmp.eq.s32.totalorder %s20, 1
      %p273 = por %p271, %p272
      %p274 = scmp.ne.s32.totalorder %s266, %s269
      %p275 = scmp.eq.s32.totalorder %s20, 0
      %p276 = por %p274, %p275
      %p277 = scmp.ne.s32.totalorder %s266, %s269
      %p278 = scmp.eq.s32.totalorder %s25, 1
      %p279 = por %p277, %p278
      %p280 = scmp.ne.s32.totalorder %s269, %s270
      %p281 = scmp.eq.s32.totalorder %s25, 0
      %p282 = por %p280, %p281
      %p283 = scmp.ne.s32.totalorder %s269, %s270
      %p284 = scmp.eq.s32.totalorder %s26, 1
      %p285 = por %p283, %p284
      %p287 = scmp.ne.s32.totalorder %s270, %s286
      %p288 = scmp.eq.s32.totalorder %s26, 0
      %p289 = por %p287, %p288
      %p290 = scmp.le.s32.totalorder 1, %s20
      %p291 = scmp.lt.s32.totalorder %s20, 3
      %p292 = pnand %p290, %p291
      %p293 = pneg %p292
      // Predicated region
      $region9: #{dqn_forward.1} parent=5 // pred_check
        _
      $region10: #{dqn_forward.1} parent=5 // pred_check_branch
        %295 = sbr.rel (%p292) target = $region12
      $region11: #{dqn_forward.1} parent=5 // pred_region
        %s296 = ssub.s32 %s20, 1
        // Predicated region
        $region13: #{dqn_forward.1} parent=11 // pred_check
          %p297 = pneg %p67
        $region14: #{dqn_forward.1} parent=11 // pred_check_branch
          %299 = sbr.rel (%p297) target = $region16
        $region15: #{dqn_forward.1} parent=11 // pred_region
          _
        $region16: #{dqn_forward.1} parent=11 // pred_fallthru
          _
        // Predicated region
        $region17: #{dqn_forward.1} parent=11 // pred_check
          %p300 = pneg %p88
        $region18: #{dqn_forward.1} parent=11 // pred_check_branch
          %302 = sbr.rel (%p300) target = $region20
        $region19: #{dqn_forward.1} parent=11 // pred_region
          _
        $region20: #{dqn_forward.1} parent=11 // pred_fallthru
          _
        // Predicated region
        $region21: #{dqn_forward.1} parent=11 // pred_check
          %p303 = pneg %p109
        $region22: #{dqn_forward.1} parent=11 // pred_check_branch
          %305 = sbr.rel (%p303) target = $region24
        $region23: #{dqn_forward.1} parent=11 // pred_region
          _
        $region24: #{dqn_forward.1} parent=11 // pred_fallthru
          _
        // Predicated region
        $region25: #{dqn_forward.1} parent=11 // pred_check
          %p306 = pneg %p130
        $region26: #{dqn_forward.1} parent=11 // pred_check_branch
          %308 = sbr.rel (%p306) target = $region28
        $region27: #{dqn_forward.1} parent=11 // pred_region
          _
        $region28: #{dqn_forward.1} parent=11 // pred_fallthru
          _
        // Predicated region
        $region29: #{dqn_forward.1} parent=11 // pred_check
          %p309 = pneg %p151
        $region30: #{dqn_forward.1} parent=11 // pred_check_branch
          %311 = sbr.rel (%p309) target = $region32
        $region31: #{dqn_forward.1} parent=11 // pred_region
          _
        $region32: #{dqn_forward.1} parent=11 // pred_fallthru
          _
        // Predicated region
        $region33: #{dqn_forward.1} parent=11 // pred_check
          %p312 = pneg %p172
        $region34: #{dqn_forward.1} parent=11 // pred_check_branch
          %314 = sbr.rel (%p312) target = $region36
        $region35: #{dqn_forward.1} parent=11 // pred_region
          _
        $region36: #{dqn_forward.1} parent=11 // pred_fallthru
          _
        // Predicated region
        $region37: #{dqn_forward.1} parent=11 // pred_check
          %p315 = pneg %p193
        $region38: #{dqn_forward.1} parent=11 // pred_check_branch
          %317 = sbr.rel (%p315) target = $region40
        $region39: #{dqn_forward.1} parent=11 // pred_region
          _
        $region40: #{dqn_forward.1} parent=11 // pred_fallthru
          _
        // Predicated region
        $region41: #{dqn_forward.1} parent=11 // pred_check
          %p318 = pneg %p214
        $region42: #{dqn_forward.1} parent=11 // pred_check_branch
          %320 = sbr.rel (%p318) target = $region44
        $region43: #{dqn_forward.1} parent=11 // pred_region
          _
        $region44: #{dqn_forward.1} parent=11 // pred_fallthru
          _
        // Predicated region
        $region45: #{dqn_forward.1} parent=11 // pred_check
          %p321 = pneg %p235
        $region46: #{dqn_forward.1} parent=11 // pred_check_branch
          %323 = sbr.rel (%p321) target = $region48
        $region47: #{dqn_forward.1} parent=11 // pred_region
          _
        $region48: #{dqn_forward.1} parent=11 // pred_fallthru
          _
        // Predicated region
        $region49: #{dqn_forward.1} parent=11 // pred_check
          %p324 = pneg %p256
        $region50: #{dqn_forward.1} parent=11 // pred_check_branch
          %326 = sbr.rel (%p324) target = $region52
        $region51: #{dqn_forward.1} parent=11 // pred_region
          _
        $region52: #{dqn_forward.1} parent=11 // pred_fallthru
          _
      $region12: #{dqn_forward.1} parent=5 // pred_fallthru
        _
      %p327 = scmp.lt.s32.totalorder %s20, 2
      // Predicated region
      $region53: #{dqn_forward.1} parent=5 // pred_check
        %p328 = pneg %p327
      $region54: #{dqn_forward.1} parent=5 // pred_check_branch
        %330 = sbr.rel (%p328) target = $region56
      $region55: #{dqn_forward.1} parent=5 // pred_region
        // Predicated region
        $region57: #{dqn_forward.1} parent=55 // pred_check
          %p331 = pneg %p40
        $region58: #{dqn_forward.1} parent=55 // pred_check_branch
          %333 = sbr.rel (%p331) target = $region60
        $region59: #{dqn_forward.1} parent=55 // pred_region
          %p334 = scmp.lt.s32.totalorder %s20, 1
          %s335 = scalar_select %p334, %s20, 1
          %s336 = smul.addr %s335, 2
          %s337 = smul.addr %s336, 8
          %s338 = scalar_lea.vmem %s0, %s337
        $region60: #{dqn_forward.1} parent=55 // pred_fallthru
          _
      $region56: #{dqn_forward.1} parent=5 // pred_fallthru
        _
      %p339 = scmp.le.s32.totalorder 1, %s20
      %p340 = scmp.lt.s32.totalorder %s20, 3
      %p341 = pnand %p339, %p340
      %p342 = pneg %p341
      // Predicated region
      $region61: #{dqn_forward.1} parent=5 // pred_check
        _
      $region62: #{dqn_forward.1} parent=5 // pred_check_branch
        %344 = sbr.rel (%p341) target = $region64
      $region63: #{dqn_forward.1} parent=5 // pred_region
        %s345 = ssub.s32 %s20, 1
        %p346 = scmp.lt.s32.totalorder %s25, 1
        %s347 = scalar_select %p346, %s25, 1
        %s348 = smul.addr %s347, 2
        %s349 = smul.addr %s348, 8
        %s350 = scalar_lea.vmem %s0, %s349
        %p351 = pneg %p46
        %p352 = pneg %p43
        %p353 = pneg %p67
        %p354 = pneg %p64
        %p355 = pneg %p88
        %p356 = pneg %p85
        %p357 = pneg %p109
        %p358 = pneg %p106
        %p359 = pneg %p130
        %p360 = pneg %p127
        %p361 = pneg %p151
        %p362 = pneg %p148
        %p363 = pneg %p172
        %p364 = pneg %p169
        %p365 = pneg %p193
        %p366 = pneg %p190
        %p367 = pneg %p214
        %p368 = pneg %p211
        %p369 = pneg %p235
        %p370 = pneg %p232
        %p371 = pneg %p256
        %p372 = pneg %p253
        %p373 = pneg %p282
        %p374 = pneg %p279
        %s375 = sand.u32 %s269, 1
        %s376 = scalar_lea.sflag [#allocation5], %s375
        %s377 = sand.u32 %s269, 1
        %s378 = scalar_lea.vmem [#allocation4], %s377
        %p379 = scmp.lt.s32.totalorder %s25, 1
        %s380 = scalar_select %p379, %s25, 1
        %s381 = smul.addr %s380, 2
        %s382 = smul.addr %s381, 8
        %s383 = scalar_lea.vmem %s0, %s382
        %v384 = vld [vmem:[%s383] sm:$0xff]
        %v385 = vld [vmem:[%s383 + $0x8] sm:$0xf]
        %v386 = vld [vmem:[%s1] sm:$0xff]
        %v387 = vld [vmem:[%s1 + $0x8] sm:$0xff]
        %v388 = vld [vmem:[%s1 + $0x10] sm:$0xff]
        %v389 = vld [vmem:[%s1 + $0x18] sm:$0xff]
        %v390 = vld [vmem:[%s1 + $0x20] sm:$0xff]
        %v391 = vld [vmem:[%s1 + $0x28] sm:$0xff]
        %v392 = vld [vmem:[%s383 + $0x1] sm:$0xff]
        %v393 = vld [vmem:[%s383 + $0x9] sm:$0xf]
        %s394 = scalar_lea.vmem %s1, 48
        %v395 = vld [vmem:[%s394] sm:$0xff]
        %v396 = vld [vmem:[%s394 + $0x8] sm:$0xff]
        %v397 = vld [vmem:[%s394 + $0x10] sm:$0xff]
        %v398 = vld [vmem:[%s394 + $0x18] sm:$0xff]
        %v399 = vld [vmem:[%s394 + $0x20] sm:$0xff]
        %v400 = vld [vmem:[%s394 + $0x28] sm:$0xff]
        %vm401 = vcmask 392192
        %v403 = vsel %vm401, %v392, 0
        %v406 = vsel %vm401, %v393, 0
        %408 = vmatprep.subr.mxu0 0.0
        %409 = vmatpush1.msra.mxu0 %v395
        %410 = vmatprep.subr.mxu0 0.0
        %411 = vmatpush1.msra.mxu0 %v396
        %412 = vmatprep.subr.mxu0 0.0
        %413 = vmatpush1.msra.mxu0 %v397
        %414 = vmatprep.subr.mxu0 0.0
        %415 = vmatpush1.msra.mxu0 %v398
        %416 = vmatprep.subr.mxu0 0.0
        %417 = vmatpush1.msra.mxu0 %v399
        %418 = vmatprep.subr.mxu0 0.0
        %419 = vmatpush1.msra.mxu0 %v400
        %420 = vmatprep.subr.mxu0 0.0
        %421 = vmatpush1.msra.mxu0 0.0
        %422 = vmatprep.subr.mxu0 0.0
        %423 = vmatpush1.msra.mxu0 0.0
        %424 = vmatprep.subr.mxu0 0.0
        %425 = vmatpush1.msra.mxu0 0.0
        %426 = vmatprep.subr.mxu0 0.0
        %427 = vmatpush1.msra.mxu0 0.0
        %428 = vmatprep.subr.mxu0 0.0
        %429 = vmatpush1.msra.mxu0 0.0
        %430 = vmatprep.subr.mxu0 0.0
        %431 = vmatpush1.msra.mxu0 0.0
        %432 = vmatprep.subr.mxu0 0.0
        %433 = vmatpush1.msra.mxu0 0.0
        %434 = vmatprep.subr.mxu0 0.0
        %435 = vmatpush1.msra.mxu0 0.0
        %436 = vmatprep.subr.mxu0 0.0
        %437 = vmatpush1.msra.mxu0 0.0
        %438 = vmatprep.subr.mxu0 0.0
        %439 = vmatpush1.msra.mxu0 0.0
        %440 = vmatprep.subr.mxu0 0.0
        %441 = vmatpush1.msra.mxu0 0.0
        %442 = vmatprep.subr.mxu0 0.0
        %443 = vmatpush1.msra.mxu0 0.0
        %444 = vmatprep.subr.mxu0 0.0
        %445 = vmatpush1.msra.mxu0 0.0
        %446 = vmatprep.subr.mxu0 0.0
        %447 = vmatpush1.msra.mxu0 0.0
        %448 = vmatprep.subr.mxu0 0.0
        %449 = vmatpush1.msra.mxu0 0.0
        %450 = vmatprep.subr.mxu0 0.0
        %451 = vmatpush1.msra.mxu0 0.0
        %452 = vmatprep.subr.mxu0 0.0
        %453 = vmatpush1.msra.mxu0 0.0
        %454 = vmatprep.subr.mxu0 0.0
        %455 = vmatpush1.msra.mxu0 0.0
        %456 = vmatprep.subr.mxu0 0.0
        %457 = vmatpush1.msra.mxu0 0.0
        %458 = vmatprep.subr.mxu0 0.0
        %459 = vmatpush1.msra.mxu0 0.0
        %460 = vmatprep.subr.mxu0 0.0
        %461 = vmatpush1.msra.mxu0 0.0
        %462 = vmatprep.subr.mxu0 0.0
        %463 = vmatpush1.msra.mxu0 0.0
        %464 = vmatprep.subr.mxu0 0.0
        %465 = vmatpush1.msra.mxu0 0.0
        %466 = vmatprep.subr.mxu0 0.0
        %467 = vmatpush1.msra.mxu0 0.0
        %468 = vmatprep.subr.mxu0 0.0
        %469 = vmatpush1.msra.mxu0 0.0
        %470 = vmatprep.subr.mxu0 0.0
        %471 = vmatpush1.msra.mxu0 0.0
        %472 = vmatprep.mubr.f32.mxu0 0.0
        %473 = vmatmul.mubr.f32.gmra.mrb[0].mxu0 %v403
        %v474 = vpop.f32.mrb[0].mxu0
        %v475 = vadd.f32 0.0, %v474
        %v476 = vpop.f32.mrb[0].mxu0
        %477 = vmatprep.mubr.f32.mxu0 0.0
        %478 = vmatmul.mubr.f32.gmra.mrb[0].mxu0 %v406
        %v479 = vpop.f32.mrb[0].mxu0
        %v480 = vadd.f32 0.0, %v479
        %v481 = vpop.f32.mrb[0].mxu0
        %482 = vdwg.mxu0
        %v484 = vsel %vm401, %v384, 0
        %v487 = vsel %vm401, %v385, 0
        %489 = vmatprep.subr.mxu0 0.0
        %490 = vmatpush1.msra.mxu0 %v386
        %491 = vmatprep.subr.mxu0 0.0
        %492 = vmatpush1.msra.mxu0 %v387
        %493 = vmatprep.subr.mxu0 0.0
        %494 = vmatpush1.msra.mxu0 %v388
        %495 = vmatprep.subr.mxu0 0.0
        %496 = vmatpush1.msra.mxu0 %v389
        %497 = vmatprep.subr.mxu0 0.0
        %498 = vmatpush1.msra.mxu0 %v390
        %499 = vmatprep.subr.mxu0 0.0
        %500 = vmatpush1.msra.mxu0 %v391
        %501 = vmatprep.subr.mxu0 0.0
        %502 = vmatpush1.msra.mxu0 0.0
        %503 = vmatprep.subr.mxu0 0.0
        %504 = vmatpush1.msra.mxu0 0.0
        %505 = vmatprep.subr.mxu0 0.0
        %506 = vmatpush1.msra.mxu0 0.0
        %507 = vmatprep.subr.mxu0 0.0
        %508 = vmatpush1.msra.mxu0 0.0
        %509 = vmatprep.subr.mxu0 0.0
        %510 = vmatpush1.msra.mxu0 0.0
        %511 = vmatprep.subr.mxu0 0.0
        %512 = vmatpush1.msra.mxu0 0.0
        %513 = vmatprep.subr.mxu0 0.0
        %514 = vmatpush1.msra.mxu0 0.0
        %515 = vmatprep.subr.mxu0 0.0
        %516 = vmatpush1.msra.mxu0 0.0
        %517 = vmatprep.subr.mxu0 0.0
        %518 = vmatpush1.msra.mxu0 0.0
        %519 = vmatprep.subr.mxu0 0.0
        %520 = vmatpush1.msra.mxu0 0.0
        %521 = vmatprep.subr.mxu0 0.0
        %522 = vmatpush1.msra.mxu0 0.0
        %523 = vmatprep.subr.mxu0 0.0
        %524 = vmatpush1.msra.mxu0 0.0
        %525 = vmatprep.subr.mxu0 0.0
        %526 = vmatpush1.msra.mxu0 0.0
        %527 = vmatprep.subr.mxu0 0.0
        %528 = vmatpush1.msra.mxu0 0.0
        %529 = vmatprep.subr.mxu0 0.0
        %530 = vmatpush1.msra.mxu0 0.0
        %531 = vmatprep.subr.mxu0 0.0
        %532 = vmatpush1.msra.mxu0 0.0
        %533 = vmatprep.subr.mxu0 0.0
        %534 = vmatpush1.msra.mxu0 0.0
        %535 = vmatprep.subr.mxu0 0.0
        %536 = vmatpush1.msra.mxu0 0.0
        %537 = vmatprep.subr.mxu0 0.0
        %538 = vmatpush1.msra.mxu0 0.0
        %539 = vmatprep.subr.mxu0 0.0
        %540 = vmatpush1.msra.mxu0 0.0
        %541 = vmatprep.subr.mxu0 0.0
        %542 = vmatpush1.msra.mxu0 0.0
        %543 = vmatprep.subr.mxu0 0.0
        %544 = vmatpush1.msra.mxu0 0.0
        %545 = vmatprep.subr.mxu0 0.0
        %546 = vmatpush1.msra.mxu0 0.0
        %547 = vmatprep.subr.mxu0 0.0
        %548 = vmatpush1.msra.mxu0 0.0
        %549 = vmatprep.subr.mxu0 0.0
        %550 = vmatpush1.msra.mxu0 0.0
        %551 = vmatprep.subr.mxu0 0.0
        %552 = vmatpush1.msra.mxu0 0.0
        %553 = vmatprep.mubr.f32.mxu0 0.0
        %554 = vmatmul.mubr.f32.gmra.mrb[0].mxu0 %v484
        %v555 = vpop.f32.mrb[0].mxu0
        %v556 = vadd.f32 %v475, %v555
        %v557 = vpop.f32.mrb[0].mxu0
        %558 = vmatprep.mubr.f32.mxu0 0.0
        %559 = vmatmul.mubr.f32.gmra.mrb[0].mxu0 %v487
        %v560 = vpop.f32.mrb[0].mxu0
        %v561 = vadd.f32 %v480, %v560
        %v562 = vpop.f32.mrb[0].mxu0
        %563 = vdwg.mxu0
        %v564 = vld [vmem:[%s383 + $0x2] sm:$0xff]
        %v565 = vld [vmem:[%s383 + $0xa] sm:$0xf]
        %s566 = scalar_lea.vmem %s1, 96
        %v567 = vld [vmem:[%s566] sm:$0xff]
        %v568 = vld [vmem:[%s566 + $0x8] sm:$0xff]
        %v569 = vld [vmem:[%s566 + $0x10] sm:$0xff]
        %v570 = vld [vmem:[%s566 + $0x18] sm:$0xff]
        %v571 = vld [vmem:[%s566 + $0x20] sm:$0xff]
        %v572 = vld [vmem:[%s566 + $0x28] sm:$0xff]
        %v574 = vsel %vm401, %v564, 0
        %v577 = vsel %vm401, %v565, 0
        %579 = vmatprep.subr.mxu0 0.0
        %580 = vmatpush1.msra.mxu0 %v567
        %581 = vmatprep.subr.mxu0 0.0
        %582 = vmatpush1.msra.mxu0 %v568
        %583 = vmatprep.subr.mxu0 0.0
        %584 = vmatpush1.msra.mxu0 %v569
        %585 = vmatprep.subr.mxu0 0.0
        %586 = vmatpush1.msra.mxu0 %v570
        %587 = vmatprep.subr.mxu0 0.0
        %588 = vmatpush1.msra.mxu0 %v571
        %589 = vmatprep.subr.mxu0 0.0
        %590 = vmatpush1.msra.mxu0 %v572
        %591 = vmatprep.subr.mxu0 0.0
        %592 = vmatpush1.msra.mxu0 0.0
        %593 = vmatprep.subr.mxu0 0.0
        %594 = vmatpush1.msra.mxu0 0.0
        %595 = vmatprep.subr.mxu0 0.0
        %596 = vmatpush1.msra.mxu0 0.0
        %597 = vmatprep.subr.mxu0 0.0
        %598 = vmatpush1.msra.mxu0 0.0
        %599 = vmatprep.subr.mxu0 0.0
        %600 = vmatpush1.msra.mxu0 0.0
        %601 = vmatprep.subr.mxu0 0.0
        %602 = vmatpush1.msra.mxu0 0.0
        %603 = vmatprep.subr.mxu0 0.0
        %604 = vmatpush1.msra.mxu0 0.0
        %605 = vmatprep.subr.mxu0 0.0
        %606 = vmatpush1.msra.mxu0 0.0
        %607 = vmatprep.subr.mxu0 0.0
        %608 = vmatpush1.msra.mxu0 0.0
        %609 = vmatprep.subr.mxu0 0.0
        %610 = vmatpush1.msra.mxu0 0.0
        %611 = vmatprep.subr.mxu0 0.0
        %612 = vmatpush1.msra.mxu0 0.0
        %613 = vmatprep.subr.mxu0 0.0
        %614 = vmatpush1.msra.mxu0 0.0
        %615 = vmatprep.subr.mxu0 0.0
        %616 = vmatpush1.msra.mxu0 0.0
        %617 = vmatprep.subr.mxu0 0.0
        %618 = vmatpush1.msra.mxu0 0.0
        %619 = vmatprep.subr.mxu0 0.0
        %620 = vmatpush1.msra.mxu0 0.0
        %621 = vmatprep.subr.mxu0 0.0
        %622 = vmatpush1.msra.mxu0 0.0
        %623 = vmatprep.subr.mxu0 0.0
        %624 = vmatpush1.msra.mxu0 0.0
        %625 = vmatprep.subr.mxu0 0.0
        %626 = vmatpush1.msra.mxu0 0.0
        %627 = vmatprep.subr.mxu0 0.0
        %628 = vmatpush1.msra.mxu0 0.0
        %629 = vmatprep.subr.mxu0 0.0
        %630 = vmatpush1.msra.mxu0 0.0
        %631 = vmatprep.subr.mxu0 0.0
        %632 = vmatpush1.msra.mxu0 0.0
        %633 = vmatprep.subr.mxu0 0.0
        %634 = vmatpush1.msra.mxu0 0.0
        %635 = vmatprep.subr.mxu0 0.0
        %636 = vmatpush1.msra.mxu0 0.0
        %637 = vmatprep.subr.mxu0 0.0
        %638 = vmatpush1.msra.mxu0 0.0
        %639 = vmatprep.subr.mxu0 0.0
        %640 = vmatpush1.msra.mxu0 0.0
        %641 = vmatprep.subr.mxu0 0.0
        %642 = vmatpush1.msra.mxu0 0.0
        %643 = vmatprep.mubr.f32.mxu0 0.0
        %644 = vmatmul.mubr.f32.gmra.mrb[0].mxu0 %v574
        %v645 = vpop.f32.mrb[0].mxu0
        %v646 = vadd.f32 0.0, %v645
        %v647 = vpop.f32.mrb[0].mxu0
        %648 = vmatprep.mubr.f32.mxu0 0.0
        %649 = vmatmul.mubr.f32.gmra.mrb[0].mxu0 %v577
        %v650 = vpop.f32.mrb[0].mxu0
        %v651 = vadd.f32 0.0, %v650
        %v652 = vpop.f32.mrb[0].mxu0
        %653 = vdwg.mxu0
        %v654 = vadd.f32 %v556, %v646
        %v655 = vadd.f32 %v561, %v651
        %v656 = vld [vmem:[%s2] sm:$0x1]
        %v658 = vlaneseq
        %v659 = vshrl.u32 %v658, 7
        %v660 = vsub.s32 0, %v659
        %v661 = vrot.slane %v656, %v660
        %v663 = vadd.f32 %v654, %v661
        %v664 = vadd.f32 %v655, %v661
        %v665 = vsub.f32 0.0, %v663
        %v666 = vsub.f32 0.0, %v664
        %v667 = vmul.f32 %v665, 1.442695
        %v668 = vpow.pop %v667
        %v669 = vmul.f32 %v666, 1.442695
        %v670 = vpow.pop %v669
        %v671 = vadd.f32 %v668, 1.0
        %v672 = vadd.f32 %v670, 1.0
        %v673 = vrcp.pop %v671
        %v674 = vrcp.pop %v672
        %vm675 = vcmask 778240
        %676 = vst.msk [vmem:[#allocation2] sm:$0x1] %vm675, 0.0
        %677 = vst.msk [vmem:[#allocation2 + $0xd] sm:$0x1] %vm675, 0.0
        %vm678 = vcmask 785408
        %679 = vst.msk [vmem:[#allocation2 + $0x1] sm:$0xff] %vm678, %v673
        %vm680 = vcmask 781312
        %681 = vst.msk [vmem:[#allocation2 + $0x9] sm:$0xf] %vm680, %v674
        %v682 = vld [vmem:[#allocation2] sm:$0xff]
        %v683 = vld [vmem:[#allocation2 + $0x8] sm:$0xf]
        %v684 = vld [vmem:[%s3] sm:$0xff]
        %v685 = vld [vmem:[%s3 + $0x8] sm:$0xff]
        %v686 = vld [vmem:[%s3 + $0x10] sm:$0xff]
        %v687 = vld [vmem:[%s3 + $0x18] sm:$0xff]
        %v688 = vld [vmem:[%s3 + $0x20] sm:$0xff]
        %v689 = vld [vmem:[%s3 + $0x28] sm:$0xff]
        %v690 = vld [vmem:[%s3 + $0x30] sm:$0xff]
        %v691 = vld [vmem:[%s3 + $0x38] sm:$0xff]
        %v692 = vld [vmem:[%s3 + $0x40] sm:$0xff]
        %v693 = vld [vmem:[%s3 + $0x48] sm:$0xff]
        %v694 = vld [vmem:[%s3 + $0x50] sm:$0xff]
        %v695 = vld [vmem:[%s3 + $0x58] sm:$0xff]
        %v696 = vld [vmem:[%s3 + $0x60] sm:$0xff]
        %v697 = vld [vmem:[%s3 + $0x68] sm:$0xff]
        %v698 = vld [vmem:[%s3 + $0x70] sm:$0xff]
        %v699 = vld [vmem:[%s3 + $0x78] sm:$0xff]
        %v700 = vld [vmem:[%s3 + $0x80] sm:$0xff]
        %v701 = vld [vmem:[%s3 + $0x88] sm:$0xff]
        %v702 = vld [vmem:[%s3 + $0x90] sm:$0xff]
        %v703 = vld [vmem:[%s3 + $0x98] sm:$0xff]
        %v704 = vld [vmem:[%s3 + $0xa0] sm:$0xff]
        %v705 = vld [vmem:[%s3 + $0xa8] sm:$0xff]
        %v706 = vld [vmem:[%s3 + $0xb0] sm:$0xff]
        %v707 = vld [vmem:[%s3 + $0xb8] sm:$0xff]
        %v708 = vld [vmem:[#allocation2 + $0x1] sm:$0xff]
        %v709 = vld [vmem:[#allocation2 + $0x9] sm:$0xf]
        %s710 = scalar_lea.vmem %s3, 192
        %v711 = vld [vmem:[%s710] sm:$0xff]
        %v712 = vld [vmem:[%s710 + $0x8] sm:$0xff]
        %v713 = vld [vmem:[%s710 + $0x10] sm:$0xff]
        %v714 = vld [vmem:[%s710 + $0x18] sm:$0xff]
        %v715 = vld [vmem:[%s710 + $0x20] sm:$0xff]
        %v716 = vld [vmem:[%s710 + $0x28] sm:$0xff]
        %v717 = vld [vmem:[%s710 + $0x30] sm:$0xff]
        %v718 = vld [vmem:[%s710 + $0x38] sm:$0xff]
        %v719 = vld [vmem:[%s710 + $0x40] sm:$0xff]
        %v720 = vld [vmem:[%s710 + $0x48] sm:$0xff]
        %v721 = vld [vmem:[%s710 + $0x50] sm:$0xff]
        %v722 = vld [vmem:[%s710 + $0x58] sm:$0xff]
        %v723 = vld [vmem:[%s710 + $0x60] sm:$0xff]
        %v724 = vld [vmem:[%s710 + $0x68] sm:$0xff]
        %v725 = vld [vmem:[%s710 + $0x70] sm:$0xff]
        %v726 = vld [vmem:[%s710 + $0x78] sm:$0xff]
        %v727 = vld [vmem:[%s710 + $0x80] sm:$0xff]
        %v728 = vld [vmem:[%s710 + $0x88] sm:$0xff]
        %v729 = vld [vmem:[%s710 + $0x90] sm:$0xff]
        %v730 = vld [vmem:[%s710 + $0x98] sm:$0xff]
        %v731 = vld [vmem:[%s710 + $0xa0] sm:$0xff]
        %v732 = vld [vmem:[%s710 + $0xa8] sm:$0xff]
        %v733 = vld [vmem:[%s710 + $0xb0] sm:$0xff]
        %v734 = vld [vmem:[%s710 + $0xb8] sm:$0xff]
        %v736 = vsel %vm678, %v708, 0
        %v739 = vsel %vm678, %v709, 0
        %741 = vmatprep.subr.mxu0 %v712
        %742 = vmatpush1.msra.mxu0 %v711
        %743 = vmatprep.subr.mxu0 %v714
        %744 = vmatpush1.msra.mxu0 %v713
        %745 = vmatprep.subr.mxu0 %v716
        %746 = vmatpush1.msra.mxu0 %v715
        %747 = vmatprep.subr.mxu0 %v718
        %748 = vmatpush1.msra.mxu0 %v717
        %749 = vmatprep.subr.mxu0 %v720
        %750 = vmatpush1.msra.mxu0 %v719
        %751 = vmatprep.subr.mxu0 %v722
        %752 = vmatpush1.msra.mxu0 %v721
        %753 = vmatprep.subr.mxu0 %v724
        %754 = vmatpush1.msra.mxu0 %v723
        %755 = vmatprep.subr.mxu0 %v726
        %756 = vmatpush1.msra.mxu0 %v725
        %757 = vmatprep.subr.mxu0 %v728
        %758 = vmatpush1.msra.mxu0 %v727
        %759 = vmatprep.subr.mxu0 %v730
        %760 = vmatpush1.msra.mxu0 %v729
        %761 = vmatprep.subr.mxu0 %v732
        %762 = vmatpush1.msra.mxu0 %v731
        %763 = vmatprep.subr.mxu0 %v734
        %764 = vmatpush1.msra.mxu0 %v733
        %765 = vmatprep.subr.mxu0 0.0
        %766 = vmatpush1.msra.mxu0 0.0
        %767 = vmatprep.subr.mxu0 0.0
        %768 = vmatpush1.msra.mxu0 0.0
        %769 = vmatprep.subr.mxu0 0.0
        %770 = vmatpush1.msra.mxu0 0.0
        %771 = vmatprep.subr.mxu0 0.0
        %772 = vmatpush1.msra.mxu0 0.0
        %773 = vmatprep.subr.mxu0 0.0
        %774 = vmatpush1.msra.mxu0 0.0
        %775 = vmatprep.subr.mxu0 0.0
        %776 = vmatpush1.msra.mxu0 0.0
        %777 = vmatprep.subr.mxu0 0.0
        %778 = vmatpush1.msra.mxu0 0.0
        %779 = vmatprep.subr.mxu0 0.0
        %780 = vmatpush1.msra.mxu0 0.0
        %781 = vmatprep.subr.mxu0 0.0
        %782 = vmatpush1.msra.mxu0 0.0
        %783 = vmatprep.subr.mxu0 0.0
        %784 = vmatpush1.msra.mxu0 0.0
        %785 = vmatprep.subr.mxu0 0.0
        %786 = vmatpush1.msra.mxu0 0.0
        %787 = vmatprep.subr.mxu0 0.0
        %788 = vmatpush1.msra.mxu0 0.0
        %789 = vmatprep.subr.mxu0 0.0
        %790 = vmatpush1.msra.mxu0 0.0
        %791 = vmatprep.subr.mxu0 0.0
        %792 = vmatpush1.msra.mxu0 0.0
        %793 = vmatprep.subr.mxu0 0.0
        %794 = vmatpush1.msra.mxu0 0.0
        %795 = vmatprep.subr.mxu0 0.0
        %796 = vmatpush1.msra.mxu0 0.0
        %797 = vmatprep.subr.mxu0 0.0
        %798 = vmatpush1.msra.mxu0 0.0
        %799 = vmatprep.subr.mxu0 0.0
        %800 = vmatpush1.msra.mxu0 0.0
        %801 = vmatprep.subr.mxu0 0.0
        %802 = vmatpush1.msra.mxu0 0.0
        %803 = vmatprep.subr.mxu0 0.0
        %804 = vmatpush1.msra.mxu0 0.0
        %805 = vmatprep.mubr.f32.mxu0 0.0
        %806 = vmatmul.mubr.f32.gmra.mrb[0].mxu0 %v736
        %v807 = vpop.f32.mrb[0].mxu0
        %v808 = vadd.f32 0.0, %v807
        %v809 = vpop.f32.mrb[0].mxu0
        %v810 = vadd.f32 0.0, %v809
        %811 = vmatprep.mubr.f32.mxu0 0.0
        %812 = vmatmul.mubr.f32.gmra.mrb[0].mxu0 %v739
        %v813 = vpop.f32.mrb[0].mxu0
        %v814 = vadd.f32 0.0, %v813
        %v815 = vpop.f32.mrb[0].mxu0
        %v816 = vadd.f32 0.0, %v815
        %817 = vdwg.mxu0
        %v819 = vsel %vm678, %v682, 0
        %v822 = vsel %vm678, %v683, 0
        %824 = vmatprep.subr.mxu0 %v685
        %825 = vmatpush1.msra.mxu0 %v684
        %826 = vmatprep.subr.mxu0 %v687
        %827 = vmatpush1.msra.mxu0 %v686
        %828 = vmatprep.subr.mxu0 %v689
        %829 = vmatpush1.msra.mxu0 %v688
        %830 = vmatprep.subr.mxu0 %v691
        %831 = vmatpush1.msra.mxu0 %v690
        %832 = vmatprep.subr.mxu0 %v693
        %833 = vmatpush1.msra.mxu0 %v692
        %834 = vmatprep.subr.mxu0 %v695
        %835 = vmatpush1.msra.mxu0 %v694
        %836 = vmatprep.subr.mxu0 %v697
        %837 = vmatpush1.msra.mxu0 %v696
        %838 = vmatprep.subr.mxu0 %v699
        %839 = vmatpush1.msra.mxu0 %v698
        %840 = vmatprep.subr.mxu0 %v701
        %841 = vmatpush1.msra.mxu0 %v700
        %842 = vmatprep.subr.mxu0 %v703
        %843 = vmatpush1.msra.mxu0 %v702
        %844 = vmatprep.subr.mxu0 %v705
        %845 = vmatpush1.msra.mxu0 %v704
        %846 = vmatprep.subr.mxu0 %v707
        %847 = vmatpush1.msra.mxu0 %v706
        %848 = vmatprep.subr.mxu0 0.0
        %849 = vmatpush1.msra.mxu0 0.0
        %850 = vmatprep.subr.mxu0 0.0
        %851 = vmatpush1.msra.mxu0 0.0
        %852 = vmatprep.subr.mxu0 0.0
        %853 = vmatpush1.msra.mxu0 0.0
        %854 = vmatprep.subr.mxu0 0.0
        %855 = vmatpush1.msra.mxu0 0.0
        %856 = vmatprep.subr.mxu0 0.0
        %857 = vmatpush1.msra.mxu0 0.0
        %858 = vmatprep.subr.mxu0 0.0
        %859 = vmatpush1.msra.mxu0 0.0
        %860 = vmatprep.subr.mxu0 0.0
        %861 = vmatpush1.msra.mxu0 0.0
        %862 = vmatprep.subr.mxu0 0.0
        %863 = vmatpush1.msra.mxu0 0.0
        %864 = vmatprep.subr.mxu0 0.0
        %865 = vmatpush1.msra.mxu0 0.0
        %866 = vmatprep.subr.mxu0 0.0
        %867 = vmatpush1.msra.mxu0 0.0
        %868 = vmatprep.subr.mxu0 0.0
        %869 = vmatpush1.msra.mxu0 0.0
        %870 = vmatprep.subr.mxu0 0.0
        %871 = vmatpush1.msra.mxu0 0.0
        %872 = vmatprep.subr.mxu0 0.0
        %873 = vmatpush1.msra.mxu0 0.0
        %874 = vmatprep.subr.mxu0 0.0
        %875 = vmatpush1.msra.mxu0 0.0
        %876 = vmatprep.subr.mxu0 0.0
        %877 = vmatpush1.msra.mxu0 0.0
        %878 = vmatprep.subr.mxu0 0.0
        %879 = vmatpush1.msra.mxu0 0.0
        %880 = vmatprep.subr.mxu0 0.0
        %881 = vmatpush1.msra.mxu0 0.0
        %882 = vmatprep.subr.mxu0 0.0
        %883 = vmatpush1.msra.mxu0 0.0
        %884 = vmatprep.subr.mxu0 0.0
        %885 = vmatpush1.msra.mxu0 0.0
        %886 = vmatprep.subr.mxu0 0.0
        %887 = vmatpush1.msra.mxu0 0.0
        %888 = vmatprep.mubr.f32.mxu0 0.0
        %889 = vmatmul.mubr.f32.gmra.mrb[0].mxu0 %v819
        %v890 = vpop.f32.mrb[0].mxu0
        %v891 = vadd.f32 %v808, %v890
        %v892 = vpop.f32.mrb[0].mxu0
        %v893 = vadd.f32 %v810, %v892
        %894 = vmatprep.mubr.f32.mxu0 0.0
        %895 = vmatmul.mubr.f32.gmra.mrb[0].mxu0 %v822
        %v896 = vpop.f32.mrb[0].mxu0
        %v897 = vadd.f32 %v814, %v896
        %v898 = vpop.f32.mrb[0].mxu0
        %v899 = vadd.f32 %v816, %v898
        %900 = vdwg.mxu0
        %v901 = vld [vmem:[#allocation2 + $0x2] sm:$0xff]
        %v902 = vld [vmem:[#allocation2 + $0xa] sm:$0xf]
        %s903 = scalar_lea.vmem %s3, 384
        %v904 = vld [vmem:[%s903] sm:$0xff]
        %v905 = vld [vmem:[%s903 + $0x8] sm:$0xff]
        %v906 = vld [vmem:[%s903 + $0x10] sm:$0xff]
        %v907 = vld [vmem:[%s903 + $0x18] sm:$0xff]
        %v908 = vld [vmem:[%s903 + $0x20] sm:$0xff]
        %v909 = vld [vmem:[%s903 + $0x28] sm:$0xff]
        %v910 = vld [vmem:[%s903 + $0x30] sm:$0xff]
        %v911 = vld [vmem:[%s903 + $0x38] sm:$0xff]
        %v912 = vld [vmem:[%s903 + $0x40] sm:$0xff]
        %v913 = vld [vmem:[%s903 + $0x48] sm:$0xff]
        %v914 = vld [vmem:[%s903 + $0x50] sm:$0xff]
        %v915 = vld [vmem:[%s903 + $0x58] sm:$0xff]
        %v916 = vld [vmem:[%s903 + $0x60] sm:$0xff]
        %v917 = vld [vmem:[%s903 + $0x68] sm:$0xff]
        %v918 = vld [vmem:[%s903 + $0x70] sm:$0xff]
        %v919 = vld [vmem:[%s903 + $0x78] sm:$0xff]
        %v920 = vld [vmem:[%s903 + $0x80] sm:$0xff]
        %v921 = vld [vmem:[%s903 + $0x88] sm:$0xff]
        %v922 = vld [vmem:[%s903 + $0x90] sm:$0xff]
        %v923 = vld [vmem:[%s903 + $0x98] sm:$0xff]
        %v924 = vld [vmem:[%s903 + $0xa0] sm:$0xff]
        %v925 = vld [vmem:[%s903 + $0xa8] sm:$0xff]
        %v926 = vld [vmem:[%s903 + $0xb0] sm:$0xff]
        %v927 = vld [vmem:[%s903 + $0xb8] sm:$0xff]
        %v929 = vsel %vm678, %v901, 0
        %v932 = vsel %vm678, %v902, 0
        %934 = vmatprep.subr.mxu0 %v905
        %935 = vmatpush1.msra.mxu0 %v904
        %936 = vmatprep.subr.mxu0 %v907
        %937 = vmatpush1.msra.mxu0 %v906
        %938 = vmatprep.subr.mxu0 %v909
        %939 = vmatpush1.msra.mxu0 %v908
        %940 = vmatprep.subr.mxu0 %v911
        %941 = vmatpush1.msra.mxu0 %v910
        %942 = vmatprep.subr.mxu0 %v913
        %943 = vmatpush1.msra.mxu0 %v912
        %944 = vmatprep.subr.mxu0 %v915
        %945 = vmatpush1.msra.mxu0 %v914
        %946 = vmatprep.subr.mxu0 %v917
        %947 = vmatpush1.msra.mxu0 %v916
        %948 = vmatprep.subr.mxu0 %v919
        %949 = vmatpush1.msra.mxu0 %v918
        %950 = vmatprep.subr.mxu0 %v921
        %951 = vmatpush1.msra.mxu0 %v920
        %952 = vmatprep.subr.mxu0 %v923
        %953 = vmatpush1.msra.mxu0 %v922
        %954 = vmatprep.subr.mxu0 %v925
        %955 = vmatpush1.msra.mxu0 %v924
        %956 = vmatprep.subr.mxu0 %v927
        %957 = vmatpush1.msra.mxu0 %v926
        %958 = vmatprep.subr.mxu0 0.0
        %959 = vmatpush1.msra.mxu0 0.0
        %960 = vmatprep.subr.mxu0 0.0
        %961 = vmatpush1.msra.mxu0 0.0
        %962 = vmatprep.subr.mxu0 0.0
        %963 = vmatpush1.msra.mxu0 0.0
        %964 = vmatprep.subr.mxu0 0.0
        %965 = vmatpush1.msra.mxu0 0.0
        %966 = vmatprep.subr.mxu0 0.0
        %967 = vmatpush1.msra.mxu0 0.0
        %968 = vmatprep.subr.mxu0 0.0
        %969 = vmatpush1.msra.mxu0 0.0
        %970 = vmatprep.subr.mxu0 0.0
        %971 = vmatpush1.msra.mxu0 0.0
        %972 = vmatprep.subr.mxu0 0.0
        %973 = vmatpush1.msra.mxu0 0.0
        %974 = vmatprep.subr.mxu0 0.0
        %975 = vmatpush1.msra.mxu0 0.0
        %976 = vmatprep.subr.mxu0 0.0
        %977 = vmatpush1.msra.mxu0 0.0
        %978 = vmatprep.subr.mxu0 0.0
        %979 = vmatpush1.msra.mxu0 0.0
        %980 = vmatprep.subr.mxu0 0.0
        %981 = vmatpush1.msra.mxu0 0.0
        %982 = vmatprep.subr.mxu0 0.0
        %983 = vmatpush1.msra.mxu0 0.0
        %984 = vmatprep.subr.mxu0 0.0
        %985 = vmatpush1.msra.mxu0 0.0
        %986 = vmatprep.subr.mxu0 0.0
        %987 = vmatpush1.msra.mxu0 0.0
        %988 = vmatprep.subr.mxu0 0.0
        %989 = vmatpush1.msra.mxu0 0.0
        %990 = vmatprep.subr.mxu0 0.0
        %991 = vmatpush1.msra.mxu0 0.0
        %992 = vmatprep.subr.mxu0 0.0
        %993 = vmatpush1.msra.mxu0 0.0
        %994 = vmatprep.subr.mxu0 0.0
        %995 = vmatpush1.msra.mxu0 0.0
        %996 = vmatprep.subr.mxu0 0.0
        %997 = vmatpush1.msra.mxu0 0.0
        %998 = vmatprep.mubr.f32.mxu0 0.0
        %999 = vmatmul.mubr.f32.gmra.mrb[0].mxu0 %v929
        %v1000 = vpop.f32.mrb[0].mxu0
        %v1001 = vadd.f32 0.0, %v1000
        %v1002 = vpop.f32.mrb[0].mxu0
        %v1003 = vadd.f32 0.0, %v1002
        %1004 = vmatprep.mubr.f32.mxu0 0.0
        %1005 = vmatmul.mubr.f32.gmra.mrb[0].mxu0 %v932
        %v1006 = vpop.f32.mrb[0].mxu0
        %v1007 = vadd.f32 0.0, %v1006
        %v1008 = vpop.f32.mrb[0].mxu0
        %v1009 = vadd.f32 0.0, %v1008
        %1010 = vdwg.mxu0
        %v1011 = vadd.f32 %v891, %v1001
        %v1012 = vadd.f32 %v893, %v1003
        %v1013 = vadd.f32 %v897, %v1007
        %v1014 = vadd.f32 %v899, %v1009
        %v1015 = vld [vmem:[%s4] sm:$0x3]
        %v1017 = vlaneseq
        %v1018 = vshrl.u32 %v1017, 7
        %v1019 = vsub.s32 0, %v1018
        %v1020 = vrot.slane %v1015, %v1019
        %v1021 = vlaneseq
        %v1022 = vshrl.u32 %v1021, 7
        %v1023 = vsub.s32 1, %v1022
        %v1024 = vrot.slane %v1015, %v1023
        %v1027 = vadd.f32 %v1011, %v1020
        %v1028 = vadd.f32 %v1012, %v1024
        %v1029 = vadd.f32 %v1013, %v1020
        %v1030 = vadd.f32 %v1014, %v1024
        %v1031 = vsub.f32 0.0, %v1027
        %v1032 = vsub.f32 0.0, %v1028
        %v1033 = vsub.f32 0.0, %v1029
        %v1034 = vsub.f32 0.0, %v1030
        %v1035 = vmul.f32 %v1031, 1.442695
        %v1036 = vpow.pop %v1035
        %v1037 = vmul.f32 %v1032, 1.442695
        %v1038 = vpow.pop %v1037
        %v1039 = vmul.f32 %v1033, 1.442695
        %v1040 = vpow.pop %v1039
        %v1041 = vmul.f32 %v1034, 1.442695
        %v1042 = vpow.pop %v1041
        %v1043 = vadd.f32 %v1036, 1.0
        %v1044 = vadd.f32 %v1038, 1.0
        %v1045 = vadd.f32 %v1040, 1.0
        %v1046 = vadd.f32 %v1042, 1.0
        %v1047 = vrcp.pop %v1043
        %v1048 = vrcp.pop %v1044
        %v1049 = vrcp.pop %v1045
        %v1050 = vrcp.pop %v1046
        %v1051 = vlaneseq
        %vm1052 = vcmp.ge.s32.totalorder %v1051, 0
        %vm1053 = vcmp.lt.s32.totalorder %v1051, 192
        %vm1054 = vmand %vm1052, %vm1053
        %1055 = vst.msk [vmem:[#allocation3] ss:$8 sm:$0x3] %vm1054, 0.0
        %1056 = vst.msk [vmem:[#allocation3] ss:$8 sm:$0x0] %vm1054, 0.0
        %s1057 = scalar_lea.vmem [#allocation3], 21
        %1058 = vst.msk [vmem:[%s1057] ss:$8 sm:$0x3] %vm1054, 0.0
        %1059 = vst.msk [vmem:[%s1057] ss:$8 sm:$0x0] %vm1054, 0.0
        %vm1064 = vcmask 1040384
        %v1065 = vrot.slane %v1047, 7
        %v1066 = vrot.slane %v1048, 7
        %v1067 = vrot.slane %v1049, 7
        %v1068 = vsel %vm1064, %v1065, %v1067
        %v1069 = vrot.slane %v1050, 7
        %v1070 = vsel %vm1064, %v1066, %v1069
        %1075 = vst [vmem:[#allocation3] sm:$0xfe] %v1065
        %vm1076 = vcmask 523265
        %1077 = vst.msk [vmem:[#allocation3 + $0x8] sm:$0xfe] %vm1076, %v1066
        %1078 = vst [vmem:[#allocation3 + $0x10] sm:$0x1f] %v1068
        %vm1079 = vcmask 520192
        %1080 = vst.msk [vmem:[#allocation3 + $0x18] sm:$0x1f] %vm1079, %v1070
        %v1081 = vld [vmem:[#allocation3] sm:$0xff]
        %v1082 = vld [vmem:[#allocation3 + $0x8] sm:$0xff]
        %v1083 = vld [vmem:[#allocation3 + $0x10] sm:$0xf]
        %v1084 = vld [vmem:[#allocation3 + $0x18] sm:$0xf]
        %v1085 = vld [vmem:[%s5] sm:$0xff]
        %v1086 = vld [vmem:[%s5 + $0x8] sm:$0xff]
        %v1087 = vld [vmem:[%s5 + $0x10] sm:$0xff]
        %v1088 = vld [vmem:[%s5 + $0x18] sm:$0xff]
        %v1089 = vld [vmem:[%s5 + $0x20] sm:$0xff]
        %v1090 = vld [vmem:[%s5 + $0x28] sm:$0xff]
        %v1091 = vld [vmem:[%s5 + $0x30] sm:$0xff]
        %v1092 = vld [vmem:[%s5 + $0x38] sm:$0xff]
        %v1093 = vld [vmem:[%s5 + $0x40] sm:$0xff]
        %v1094 = vld [vmem:[%s5 + $0x48] sm:$0xff]
        %v1095 = vld [vmem:[%s5 + $0x50] sm:$0xff]
        %v1096 = vld [vmem:[%s5 + $0x58] sm:$0xff]
        %v1097 = vld [vmem:[%s5 + $0x60] sm:$0xff]
        %v1098 = vld [vmem:[%s5 + $0x68] sm:$0xff]
        %v1099 = vld [vmem:[%s5 + $0x70] sm:$0xff]
        %v1100 = vld [vmem:[%s5 + $0x78] sm:$0xff]
        %v1101 = vld [vmem:[%s5 + $0x80] sm:$0xff]
        %v1102 = vld [vmem:[%s5 + $0x88] sm:$0xff]
        %v1103 = vld [vmem:[%s5 + $0x90] sm:$0xff]
        %v1104 = vld [vmem:[%s5 + $0x98] sm:$0xff]
        %v1105 = vld [vmem:[%s5 + $0xa0] sm:$0xff]
        %v1106 = vld [vmem:[%s5 + $0xa8] sm:$0xff]
        %v1107 = vld [vmem:[%s5 + $0xb0] sm:$0xff]
        %v1108 = vld [vmem:[%s5 + $0xb8] sm:$0xff]
        %v1109 = vld [vmem:[#allocation3] sm:$0xfe]
        %v1110 = vld [vmem:[#allocation3 + $0x8] sm:$0xfe]
        %v1111 = vld [vmem:[#allocation3 + $0x10] sm:$0x1f]
        %v1112 = vld [vmem:[#allocation3 + $0x18] sm:$0x1f]
        %s1113 = scalar_lea.vmem %s5, 192
        %v1114 = vld [vmem:[%s1113] sm:$0xff]
        %v1115 = vld [vmem:[%s1113 + $0x8] sm:$0xff]
        %v1116 = vld [vmem:[%s1113 + $0x10] sm:$0xff]
        %v1117 = vld [vmem:[%s1113 + $0x18] sm:$0xff]
        %v1118 = vld [vmem:[%s1113 + $0x20] sm:$0xff]
        %v1119 = vld [vmem:[%s1113 + $0x28] sm:$0xff]
        %v1120 = vld [vmem:[%s1113 + $0x30] sm:$0xff]
        %v1121 = vld [vmem:[%s1113 + $0x38] sm:$0xff]
        %v1122 = vld [vmem:[%s1113 + $0x40] sm:$0xff]
        %v1123 = vld [vmem:[%s1113 + $0x48] sm:$0xff]
        %v1124 = vld [vmem:[%s1113 + $0x50] sm:$0xff]
        %v1125 = vld [vmem:[%s1113 + $0x58] sm:$0xff]
        %v1126 = vld [vmem:[%s1113 + $0x60] sm:$0xff]
        %v1127 = vld [vmem:[%s1113 + $0x68] sm:$0xff]
        %v1128 = vld [vmem:[%s1113 + $0x70] sm:$0xff]
        %v1129 = vld [vmem:[%s1113 + $0x78] sm:$0xff]
        %v1130 = vld [vmem:[%s1113 + $0x80] sm:$0xff]
        %v1131 = vld [vmem:[%s1113 + $0x88] sm:$0xff]
        %v1132 = vld [vmem:[%s1113 + $0x90] sm:$0xff]
        %v1133 = vld [vmem:[%s1113 + $0x98] sm:$0xff]
        %v1134 = vld [vmem:[%s1113 + $0xa0] sm:$0xff]
        %v1135 = vld [vmem:[%s1113 + $0xa8] sm:$0xff]
        %v1136 = vld [vmem:[%s1113 + $0xb0] sm:$0xff]
        %v1137 = vld [vmem:[%s1113 + $0xb8] sm:$0xff]
        %vm1142 = vcmask 1046528
        %v1143 = vrot.slane %v1109, 1
        %v1144 = vrot.slane %v1111, 1
        %v1145 = vsel %vm1142, %v1143, %v1144
        %v1146 = vrot.slane %v1110, 1
        %v1147 = vrot.slane %v1112, 1
        %v1148 = vsel %vm1142, %v1146, %v1147
        %vm1151 = vcmask 523264
        %v1152 = vsel %vm1151, %v1148, 0
        %v1154 = vsel %vm1151, %v1147, 0
        %1156 = vmatprep.subr.mxu0 0.0
        %1157 = vmatpush1.msra.mxu0 %v1114
        %1158 = vmatprep.subr.mxu0 0.0
        %1159 = vmatpush1.msra.mxu0 %v1115
        %1160 = vmatprep.subr.mxu0 0.0
        %1161 = vmatpush1.msra.mxu0 %v1116
        %1162 = vmatprep.subr.mxu0 0.0
        %1163 = vmatpush1.msra.mxu0 %v1117
        %1164 = vmatprep.subr.mxu0 0.0
        %1165 = vmatpush1.msra.mxu0 %v1118
        %1166 = vmatprep.subr.mxu0 0.0
        %1167 = vmatpush1.msra.mxu0 %v1119
        %1168 = vmatprep.subr.mxu0 0.0
        %1169 = vmatpush1.msra.mxu0 %v1120
        %1170 = vmatprep.subr.mxu0 0.0
        %1171 = vmatpush1.msra.mxu0 %v1121
        %1172 = vmatprep.subr.mxu0 0.0
        %1173 = vmatpush1.msra.mxu0 %v1122
        %1174 = vmatprep.subr.mxu0 0.0
        %1175 = vmatpush1.msra.mxu0 %v1123
        %1176 = vmatprep.subr.mxu0 0.0
        %1177 = vmatpush1.msra.mxu0 %v1124
        %1178 = vmatprep.subr.mxu0 0.0
        %1179 = vmatpush1.msra.mxu0 %v1125
        %1180 = vmatprep.subr.mxu0 0.0
        %1181 = vmatpush1.msra.mxu0 %v1126
        %1182 = vmatprep.subr.mxu0 0.0
        %1183 = vmatpush1.msra.mxu0 %v1127
        %1184 = vmatprep.subr.mxu0 0.0
        %1185 = vmatpush1.msra.mxu0 %v1128
        %1186 = vmatprep.subr.mxu0 0.0
        %1187 = vmatpush1.msra.mxu0 %v1129
        %1188 = vmatprep.subr.mxu0 0.0
        %1189 = vmatpush1.msra.mxu0 %v1130
        %1190 = vmatprep.subr.mxu0 0.0
        %1191 = vmatpush1.msra.mxu0 %v1131
        %1192 = vmatprep.subr.mxu0 0.0
        %1193 = vmatpush1.msra.mxu0 %v1132
        %1194 = vmatprep.subr.mxu0 0.0
        %1195 = vmatpush1.msra.mxu0 %v1133
        %1196 = vmatprep.subr.mxu0 0.0
        %1197 = vmatpush1.msra.mxu0 %v1134
        %1198 = vmatprep.subr.mxu0 0.0
        %1199 = vmatpush1.msra.mxu0 %v1135
        %1200 = vmatprep.subr.mxu0 0.0
        %1201 = vmatpush1.msra.mxu0 %v1136
        %1202 = vmatprep.subr.mxu0 0.0
        %1203 = vmatpush1.msra.mxu0 %v1137
        %1204 = vmatprep.subr.mxu0 0.0
        %1205 = vmatpush1.msra.mxu0 0.0
        %1206 = vmatprep.subr.mxu0 0.0
        %1207 = vmatpush1.msra.mxu0 0.0
        %1208 = vmatprep.subr.mxu0 0.0
        %1209 = vmatpush1.msra.mxu0 0.0
        %1210 = vmatprep.subr.mxu0 0.0
        %1211 = vmatpush1.msra.mxu0 0.0
        %1212 = vmatprep.subr.mxu0 0.0
        %1213 = vmatpush1.msra.mxu0 0.0
        %1214 = vmatprep.subr.mxu0 0.0
        %1215 = vmatpush1.msra.mxu0 0.0
        %1216 = vmatprep.subr.mxu0 0.0
        %1217 = vmatpush1.msra.mxu0 0.0
        %1218 = vmatprep.subr.mxu0 0.0
        %1219 = vmatpush1.msra.mxu0 0.0
        %1220 = vmatprep.mubr.f32.mxu0 %v1152
        %1221 = vmatmul.mubr.f32.gmra.mrb[0].mxu0 %v1145
        %v1222 = vpop.f32.mrb[0].mxu0
        %v1223 = vadd.f32 0.0, %v1222
        %v1224 = vpop.f32.mrb[0].mxu0
        %1225 = vmatprep.mubr.f32.mxu0 %v1154
        %1226 = vmatmul.mubr.f32.gmra.mrb[0].mxu0 %v1144
        %v1227 = vpop.f32.mrb[0].mxu0
        %v1228 = vadd.f32 0.0, %v1227
        %v1229 = vpop.f32.mrb[0].mxu0
        %1230 = vdwg.mxu0
        %v1232 = vsel %vm1151, %v1082, 0
        %v1235 = vsel %vm1151, %v1084, 0
        %1237 = vmatprep.subr.mxu0 0.0
        %1238 = vmatpush1.msra.mxu0 %v1085
        %1239 = vmatprep.subr.mxu0 0.0
        %1240 = vmatpush1.msra.mxu0 %v1086
        %1241 = vmatprep.subr.mxu0 0.0
        %1242 = vmatpush1.msra.mxu0 %v1087
        %1243 = vmatprep.subr.mxu0 0.0
        %1244 = vmatpush1.msra.mxu0 %v1088
        %1245 = vmatprep.subr.mxu0 0.0
        %1246 = vmatpush1.msra.mxu0 %v1089
        %1247 = vmatprep.subr.mxu0 0.0
        %1248 = vmatpush1.msra.mxu0 %v1090
        %1249 = vmatprep.subr.mxu0 0.0
        %1250 = vmatpush1.msra.mxu0 %v1091
        %1251 = vmatprep.subr.mxu0 0.0
        %1252 = vmatpush1.msra.mxu0 %v1092
        %1253 = vmatprep.subr.mxu0 0.0
        %1254 = vmatpush1.msra.mxu0 %v1093
        %1255 = vmatprep.subr.mxu0 0.0
        %1256 = vmatpush1.msra.mxu0 %v1094
        %1257 = vmatprep.subr.mxu0 0.0
        %1258 = vmatpush1.msra.mxu0 %v1095
        %1259 = vmatprep.subr.mxu0 0.0
        %1260 = vmatpush1.msra.mxu0 %v1096
        %1261 = vmatprep.subr.mxu0 0.0
        %1262 = vmatpush1.msra.mxu0 %v1097
        %1263 = vmatprep.subr.mxu0 0.0
        %1264 = vmatpush1.msra.mxu0 %v1098
        %1265 = vmatprep.subr.mxu0 0.0
        %1266 = vmatpush1.msra.mxu0 %v1099
        %1267 = vmatprep.subr.mxu0 0.0
        %1268 = vmatpush1.msra.mxu0 %v1100
        %1269 = vmatprep.subr.mxu0 0.0
        %1270 = vmatpush1.msra.mxu0 %v1101
        %1271 = vmatprep.subr.mxu0 0.0
        %1272 = vmatpush1.msra.mxu0 %v1102
        %1273 = vmatprep.subr.mxu0 0.0
        %1274 = vmatpush1.msra.mxu0 %v1103
        %1275 = vmatprep.subr.mxu0 0.0
        %1276 = vmatpush1.msra.mxu0 %v1104
        %1277 = vmatprep.subr.mxu0 0.0
        %1278 = vmatpush1.msra.mxu0 %v1105
        %1279 = vmatprep.subr.mxu0 0.0
        %1280 = vmatpush1.msra.mxu0 %v1106
        %1281 = vmatprep.subr.mxu0 0.0
        %1282 = vmatpush1.msra.mxu0 %v1107
        %1283 = vmatprep.subr.mxu0 0.0
        %1284 = vmatpush1.msra.mxu0 %v1108
        %1285 = vmatprep.subr.mxu0 0.0
        %1286 = vmatpush1.msra.mxu0 0.0
        %1287 = vmatprep.subr.mxu0 0.0
        %1288 = vmatpush1.msra.mxu0 0.0
        %1289 = vmatprep.subr.mxu0 0.0
        %1290 = vmatpush1.msra.mxu0 0.0
        %1291 = vmatprep.subr.mxu0 0.0
        %1292 = vmatpush1.msra.mxu0 0.0
        %1293 = vmatprep.subr.mxu0 0.0
        %1294 = vmatpush1.msra.mxu0 0.0
        %1295 = vmatprep.subr.mxu0 0.0
        %1296 = vmatpush1.msra.mxu0 0.0
        %1297 = vmatprep.subr.mxu0 0.0
        %1298 = vmatpush1.msra.mxu0 0.0
        %1299 = vmatprep.subr.mxu0 0.0
        %1300 = vmatpush1.msra.mxu0 0.0
        %1301 = vmatprep.mubr.f32.mxu0 %v1232
        %1302 = vmatmul.mubr.f32.gmra.mrb[0].mxu0 %v1081
        %v1303 = vpop.f32.mrb[0].mxu0
        %v1304 = vadd.f32 %v1223, %v1303
        %v1305 = vpop.f32.mrb[0].mxu0
        %1306 = vmatprep.mubr.f32.mxu0 %v1235
        %1307 = vmatmul.mubr.f32.gmra.mrb[0].mxu0 %v1083
        %v1308 = vpop.f32.mrb[0].mxu0
        %v1309 = vadd.f32 %v1228, %v1308
        %v1310 = vpop.f32.mrb[0].mxu0
        %1311 = vdwg.mxu0
        %v1312 = vld [vmem:[#allocation3] sm:$0xfc]
        %v1313 = vld [vmem:[#allocation3 + $0x8] sm:$0xfc]
        %v1314 = vld [vmem:[#allocation3 + $0x10] sm:$0x3f]
        %v1315 = vld [vmem:[#allocation3 + $0x18] sm:$0x3f]
        %s1316 = scalar_lea.vmem %s5, 384
        %v1317 = vld [vmem:[%s1316] sm:$0xff]
        %v1318 = vld [vmem:[%s1316 + $0x8] sm:$0xff]
        %v1319 = vld [vmem:[%s1316 + $0x10] sm:$0xff]
        %v1320 = vld [vmem:[%s1316 + $0x18] sm:$0xff]
        %v1321 = vld [vmem:[%s1316 + $0x20] sm:$0xff]
        %v1322 = vld [vmem:[%s1316 + $0x28] sm:$0xff]
        %v1323 = vld [vmem:[%s1316 + $0x30] sm:$0xff]
        %v1324 = vld [vmem:[%s1316 + $0x38] sm:$0xff]
        %v1325 = vld [vmem:[%s1316 + $0x40] sm:$0xff]
        %v1326 = vld [vmem:[%s1316 + $0x48] sm:$0xff]
        %v1327 = vld [vmem:[%s1316 + $0x50] sm:$0xff]
        %v1328 = vld [vmem:[%s1316 + $0x58] sm:$0xff]
        %v1329 = vld [vmem:[%s1316 + $0x60] sm:$0xff]
        %v1330 = vld [vmem:[%s1316 + $0x68] sm:$0xff]
        %v1331 = vld [vmem:[%s1316 + $0x70] sm:$0xff]
        %v1332 = vld [vmem:[%s1316 + $0x78] sm:$0xff]
        %v1333 = vld [vmem:[%s1316 + $0x80] sm:$0xff]
        %v1334 = vld [vmem:[%s1316 + $0x88] sm:$0xff]
        %v1335 = vld [vmem:[%s1316 + $0x90] sm:$0xff]
        %v1336 = vld [vmem:[%s1316 + $0x98] sm:$0xff]
        %v1337 = vld [vmem:[%s1316 + $0xa0] sm:$0xff]
        %v1338 = vld [vmem:[%s1316 + $0xa8] sm:$0xff]
        %v1339 = vld [vmem:[%s1316 + $0xb0] sm:$0xff]
        %v1340 = vld [vmem:[%s1316 + $0xb8] sm:$0xff]
        %vm1345 = vcmask 1045504
        %v1346 = vrot.slane %v1312, 2
        %v1347 = vrot.slane %v1314, 2
        %v1348 = vsel %vm1345, %v1346, %v1347
        %v1349 = vrot.slane %v1313, 2
        %v1350 = vrot.slane %v1315, 2
        %v1351 = vsel %vm1345, %v1349, %v1350
        %v1354 = vsel %vm1151, %v1351, 0
        %v1356 = vsel %vm1151, %v1350, 0
        %1358 = vmatprep.subr.mxu0 0.0
        %1359 = vmatpush1.msra.mxu0 %v1317
        %1360 = vmatprep.subr.mxu0 0.0
        %1361 = vmatpush1.msra.mxu0 %v1318
        %1362 = vmatprep.subr.mxu0 0.0
        %1363 = vmatpush1.msra.mxu0 %v1319
        %1364 = vmatprep.subr.mxu0 0.0
        %1365 = vmatpush1.msra.mxu0 %v1320
        %1366 = vmatprep.subr.mxu0 0.0
        %1367 = vmatpush1.msra.mxu0 %v1321
        %1368 = vmatprep.subr.mxu0 0.0
        %1369 = vmatpush1.msra.mxu0 %v1322
        %1370 = vmatprep.subr.mxu0 0.0
        %1371 = vmatpush1.msra.mxu0 %v1323
        %1372 = vmatprep.subr.mxu0 0.0
        %1373 = vmatpush1.msra.mxu0 %v1324
        %1374 = vmatprep.subr.mxu0 0.0
        %1375 = vmatpush1.msra.mxu0 %v1325
        %1376 = vmatprep.subr.mxu0 0.0
        %1377 = vmatpush1.msra.mxu0 %v1326
        %1378 = vmatprep.subr.mxu0 0.0
        %1379 = vmatpush1.msra.mxu0 %v1327
        %1380 = vmatprep.subr.mxu0 0.0
        %1381 = vmatpush1.msra.mxu0 %v1328
        %1382 = vmatprep.subr.mxu0 0.0
        %1383 = vmatpush1.msra.mxu0 %v1329
        %1384 = vmatprep.subr.mxu0 0.0
        %1385 = vmatpush1.msra.mxu0 %v1330
        %1386 = vmatprep.subr.mxu0 0.0
        %1387 = vmatpush1.msra.mxu0 %v1331
        %1388 = vmatprep.subr.mxu0 0.0
        %1389 = vmatpush1.msra.mxu0 %v1332
        %1390 = vmatprep.subr.mxu0 0.0
        %1391 = vmatpush1.msra.mxu0 %v1333
        %1392 = vmatprep.subr.mxu0 0.0
        %1393 = vmatpush1.msra.mxu0 %v1334
        %1394 = vmatprep.subr.mxu0 0.0
        %1395 = vmatpush1.msra.mxu0 %v1335
        %1396 = vmatprep.subr.mxu0 0.0
        %1397 = vmatpush1.msra.mxu0 %v1336
        %1398 = vmatprep.subr.mxu0 0.0
        %1399 = vmatpush1.msra.mxu0 %v1337
        %1400 = vmatprep.subr.mxu0 0.0
        %1401 = vmatpush1.msra.mxu0 %v1338
        %1402 = vmatprep.subr.mxu0 0.0
        %1403 = vmatpush1.msra.mxu0 %v1339
        %1404 = vmatprep.subr.mxu0 0.0
        %1405 = vmatpush1.msra.mxu0 %v1340
        %1406 = vmatprep.subr.mxu0 0.0
        %1407 = vmatpush1.msra.mxu0 0.0
        %1408 = vmatprep.subr.mxu0 0.0
        %1409 = vmatpush1.msra.mxu0 0.0
        %1410 = vmatprep.subr.mxu0 0.0
        %1411 = vmatpush1.msra.mxu0 0.0
        %1412 = vmatprep.subr.mxu0 0.0
        %1413 = vmatpush1.msra.mxu0 0.0
        %1414 = vmatprep.subr.mxu0 0.0
        %1415 = vmatpush1.msra.mxu0 0.0
        %1416 = vmatprep.subr.mxu0 0.0
        %1417 = vmatpush1.msra.mxu0 0.0
        %1418 = vmatprep.subr.mxu0 0.0
        %1419 = vmatpush1.msra.mxu0 0.0
        %1420 = vmatprep.subr.mxu0 0.0
        %1421 = vmatpush1.msra.mxu0 0.0
        %1422 = vmatprep.mubr.f32.mxu0 %v1354
        %1423 = vmatmul.mubr.f32.gmra.mrb[0].mxu0 %v1348
        %v1424 = vpop.f32.mrb[0].mxu0
        %v1425 = vadd.f32 0.0, %v1424
        %v1426 = vpop.f32.mrb[0].mxu0
        %1427 = vmatprep.mubr.f32.mxu0 %v1356
        %1428 = vmatmul.mubr.f32.gmra.mrb[0].mxu0 %v1347
        %v1429 = vpop.f32.mrb[0].mxu0
        %v1430 = vadd.f32 0.0, %v1429
        %v1431 = vpop.f32.mrb[0].mxu0
        %1432 = vdwg.mxu0
        %v1433 = vadd.f32 %v1304, %v1425
        %v1434 = vadd.f32 %v1309, %v1430
        %v1435 = vld [vmem:[%s6] sm:$0x1]
        %v1437 = vlaneseq
        %v1438 = vshrl.u32 %v1437, 7
        %v1439 = vsub.s32 0, %v1438
        %v1440 = vrot.slane %v1435, %v1439
        %v1442 = vadd.f32 %v1433, %v1440
        %v1443 = vadd.f32 %v1434, %v1440
        %v1444 = vsub.f32 0.0, %v1442
        %v1445 = vsub.f32 0.0, %v1443
        %v1446 = vmul.f32 %v1444, 1.442695
        %v1447 = vpow.pop %v1446
        %v1448 = vmul.f32 %v1445, 1.442695
        %v1449 = vpow.pop %v1448
        %v1450 = vadd.f32 %v1447, 1.0
        %v1451 = vadd.f32 %v1449, 1.0
        %v1452 = vrcp.pop %v1450
        %v1453 = vrcp.pop %v1451
        %v1454 = vld [vmem:[%s7] sm:$0xff]
        %v1455 = vld [vmem:[%s7 + $0x8] sm:$0xff]
        %v1456 = vld [vmem:[%s7 + $0x10] sm:$0xff]
        %v1457 = vld [vmem:[%s7 + $0x18] sm:$0xff]
        %v1458 = vld [vmem:[%s7 + $0x20] sm:$0xff]
        %v1459 = vld [vmem:[%s7 + $0x28] sm:$0xff]
        %v1460 = vld [vmem:[%s7 + $0x30] sm:$0xff]
        %v1461 = vld [vmem:[%s7 + $0x38] sm:$0xff]
        %v1462 = vld [vmem:[%s7 + $0x40] sm:$0xff]
        %v1463 = vld [vmem:[%s7 + $0x48] sm:$0xff]
        %v1464 = vld [vmem:[%s7 + $0x50] sm:$0xff]
        %v1465 = vld [vmem:[%s7 + $0x58] sm:$0xff]
        %s1466 = scalar_lea.vmem %s7, 96
        %v1467 = vld [vmem:[%s1466] sm:$0xff]
        %v1468 = vld [vmem:[%s1466 + $0x8] sm:$0xff]
        %v1469 = vld [vmem:[%s1466 + $0x10] sm:$0xff]
        %v1470 = vld [vmem:[%s1466 + $0x18] sm:$0xff]
        %v1471 = vld [vmem:[%s1466 + $0x20] sm:$0xff]
        %v1472 = vld [vmem:[%s1466 + $0x28] sm:$0xff]
        %v1473 = vld [vmem:[%s1466 + $0x30] sm:$0xff]
        %v1474 = vld [vmem:[%s1466 + $0x38] sm:$0xff]
        %v1475 = vld [vmem:[%s1466 + $0x40] sm:$0xff]
        %v1476 = vld [vmem:[%s1466 + $0x48] sm:$0xff]
        %v1477 = vld [vmem:[%s1466 + $0x50] sm:$0xff]
        %v1478 = vld [vmem:[%s1466 + $0x58] sm:$0xff]
        %v1480 = vrot.slane %v1452, 1
        %v1481 = vsel %vm678, %v1480, 0
        %1483 = vmatprep.subr.mxu0 0.0
        %1484 = vmatpush1.msra.mxu0 %v1467
        %1485 = vmatprep.subr.mxu0 0.0
        %1486 = vmatpush1.msra.mxu0 %v1468
        %1487 = vmatprep.subr.mxu0 0.0
        %1488 = vmatpush1.msra.mxu0 %v1469
        %1489 = vmatprep.subr.mxu0 0.0
        %1490 = vmatpush1.msra.mxu0 %v1470
        %1491 = vmatprep.subr.mxu0 0.0
        %1492 = vmatpush1.msra.mxu0 %v1471
        %1493 = vmatprep.subr.mxu0 0.0
        %1494 = vmatpush1.msra.mxu0 %v1472
        %1495 = vmatprep.subr.mxu0 0.0
        %1496 = vmatpush1.msra.mxu0 %v1473
        %1497 = vmatprep.subr.mxu0 0.0
        %1498 = vmatpush1.msra.mxu0 %v1474
        %1499 = vmatprep.subr.mxu0 0.0
        %1500 = vmatpush1.msra.mxu0 %v1475
        %1501 = vmatprep.subr.mxu0 0.0
        %1502 = vmatpush1.msra.mxu0 %v1476
        %1503 = vmatprep.subr.mxu0 0.0
        %1504 = vmatpush1.msra.mxu0 %v1477
        %1505 = vmatprep.subr.mxu0 0.0
        %1506 = vmatpush1.msra.mxu0 %v1478
        %1507 = vmatprep.subr.mxu0 0.0
        %1508 = vmatpush1.msra.mxu0 0.0
        %1509 = vmatprep.subr.mxu0 0.0
        %1510 = vmatpush1.msra.mxu0 0.0
        %1511 = vmatprep.subr.mxu0 0.0
        %1512 = vmatpush1.msra.mxu0 0.0
        %1513 = vmatprep.subr.mxu0 0.0
        %1514 = vmatpush1.msra.mxu0 0.0
        %1515 = vmatprep.subr.mxu0 0.0
        %1516 = vmatpush1.msra.mxu0 0.0
        %1517 = vmatprep.subr.mxu0 0.0
        %1518 = vmatpush1.msra.mxu0 0.0
        %1519 = vmatprep.subr.mxu0 0.0
        %1520 = vmatpush1.msra.mxu0 0.0
        %1521 = vmatprep.subr.mxu0 0.0
        %1522 = vmatpush1.msra.mxu0 0.0
        %1523 = vmatprep.subr.mxu0 0.0
        %1524 = vmatpush1.msra.mxu0 0.0
        %1525 = vmatprep.subr.mxu0 0.0
        %1526 = vmatpush1.msra.mxu0 0.0
        %1527 = vmatprep.subr.mxu0 0.0
        %1528 = vmatpush1.msra.mxu0 0.0
        %1529 = vmatprep.subr.mxu0 0.0
        %1530 = vmatpush1.msra.mxu0 0.0
        %1531 = vmatprep.subr.mxu0 0.0
        %1532 = vmatpush1.msra.mxu0 0.0
        %1533 = vmatprep.subr.mxu0 0.0
        %1534 = vmatpush1.msra.mxu0 0.0
        %1535 = vmatprep.subr.mxu0 0.0
        %1536 = vmatpush1.msra.mxu0 0.0
        %1537 = vmatprep.subr.mxu0 0.0
        %1538 = vmatpush1.msra.mxu0 0.0
        %1539 = vmatprep.subr.mxu0 0.0
        %1540 = vmatpush1.msra.mxu0 0.0
        %1541 = vmatprep.subr.mxu0 0.0
        %1542 = vmatpush1.msra.mxu0 0.0
        %1543 = vmatprep.subr.mxu0 0.0
        %1544 = vmatpush1.msra.mxu0 0.0
        %1545 = vmatprep.subr.mxu0 0.0
        %1546 = vmatpush1.msra.mxu0 0.0
        %1547 = vmatprep.mubr.f32.mxu0 0.0
        %1548 = vmatmul.mubr.f32.gmra.mrb[0].mxu0 %v1481
        %v1549 = vpop.f32.mrb[0].mxu0
        %v1550 = vadd.f32 0.0, %v1549
        %v1551 = vpop.f32.mrb[0].mxu0
        %1552 = vdwg.mxu0
        %v1553 = vsel %vm678, %v1452, 0
        %1555 = vmatprep.subr.mxu0 0.0
        %1556 = vmatpush1.msra.mxu0 %v1454
        %1557 = vmatprep.subr.mxu0 0.0
        %1558 = vmatpush1.msra.mxu0 %v1455
        %1559 = vmatprep.subr.mxu0 0.0
        %1560 = vmatpush1.msra.mxu0 %v1456
        %1561 = vmatprep.subr.mxu0 0.0
        %1562 = vmatpush1.msra.mxu0 %v1457
        %1563 = vmatprep.subr.mxu0 0.0
        %1564 = vmatpush1.msra.mxu0 %v1458
        %1565 = vmatprep.subr.mxu0 0.0
        %1566 = vmatpush1.msra.mxu0 %v1459
        %1567 = vmatprep.subr.mxu0 0.0
        %1568 = vmatpush1.msra.mxu0 %v1460
        %1569 = vmatprep.subr.mxu0 0.0
        %1570 = vmatpush1.msra.mxu0 %v1461
        %1571 = vmatprep.subr.mxu0 0.0
        %1572 = vmatpush1.msra.mxu0 %v1462
        %1573 = vmatprep.subr.mxu0 0.0
        %1574 = vmatpush1.msra.mxu0 %v1463
        %1575 = vmatprep.subr.mxu0 0.0
        %1576 = vmatpush1.msra.mxu0 %v1464
        %1577 = vmatprep.subr.mxu0 0.0
        %1578 = vmatpush1.msra.mxu0 %v1465
        %1579 = vmatprep.subr.mxu0 0.0
        %1580 = vmatpush1.msra.mxu0 0.0
        %1581 = vmatprep.subr.mxu0 0.0
        %1582 = vmatpush1.msra.mxu0 0.0
        %1583 = vmatprep.subr.mxu0 0.0
        %1584 = vmatpush1.msra.mxu0 0.0
        %1585 = vmatprep.subr.mxu0 0.0
        %1586 = vmatpush1.msra.mxu0 0.0
        %1587 = vmatprep.subr.mxu0 0.0
        %1588 = vmatpush1.msra.mxu0 0.0
        %1589 = vmatprep.subr.mxu0 0.0
        %1590 = vmatpush1.msra.mxu0 0.0
        %1591 = vmatprep.subr.mxu0 0.0
        %1592 = vmatpush1.msra.mxu0 0.0
        %1593 = vmatprep.subr.mxu0 0.0
        %1594 = vmatpush1.msra.mxu0 0.0
        %1595 = vmatprep.subr.mxu0 0.0
        %1596 = vmatpush1.msra.mxu0 0.0
        %1597 = vmatprep.subr.mxu0 0.0
        %1598 = vmatpush1.msra.mxu0 0.0
        %1599 = vmatprep.subr.mxu0 0.0
        %1600 = vmatpush1.msra.mxu0 0.0
        %1601 = vmatprep.subr.mxu0 0.0
        %1602 = vmatpush1.msra.mxu0 0.0
        %1603 = vmatprep.subr.mxu0 0.0
        %1604 = vmatpush1.msra.mxu0 0.0
        %1605 = vmatprep.subr.mxu0 0.0
        %1606 = vmatpush1.msra.mxu0 0.0
        %1607 = vmatprep.subr.mxu0 0.0
        %1608 = vmatpush1.msra.mxu0 0.0
        %1609 = vmatprep.subr.mxu0 0.0
        %1610 = vmatpush1.msra.mxu0 0.0
        %1611 = vmatprep.subr.mxu0 0.0
        %1612 = vmatpush1.msra.mxu0 0.0
        %1613 = vmatprep.subr.mxu0 0.0
        %1614 = vmatpush1.msra.mxu0 0.0
        %1615 = vmatprep.subr.mxu0 0.0
        %1616 = vmatpush1.msra.mxu0 0.0
        %1617 = vmatprep.subr.mxu0 0.0
        %1618 = vmatpush1.msra.mxu0 0.0
        %1619 = vmatprep.mubr.f32.mxu0 0.0
        %1620 = vmatmul.mubr.f32.gmra.mrb[0].mxu0 %v1553
        %v1621 = vpop.f32.mrb[0].mxu0
        %v1622 = vadd.f32 %v1550, %v1621
        %v1623 = vpop.f32.mrb[0].mxu0
        %1624 = vdwg.mxu0
        %s1625 = scalar_lea.vmem %s7, 192
        %v1626 = vld [vmem:[%s1625] sm:$0xff]
        %v1627 = vld [vmem:[%s1625 + $0x8] sm:$0xff]
        %v1628 = vld [vmem:[%s1625 + $0x10] sm:$0xff]
        %v1629 = vld [vmem:[%s1625 + $0x18] sm:$0xff]
        %v1630 = vld [vmem:[%s1625 + $0x20] sm:$0xff]
        %v1631 = vld [vmem:[%s1625 + $0x28] sm:$0xff]
        %v1632 = vld [vmem:[%s1625 + $0x30] sm:$0xff]
        %v1633 = vld [vmem:[%s1625 + $0x38] sm:$0xff]
        %v1634 = vld [vmem:[%s1625 + $0x40] sm:$0xff]
        %v1635 = vld [vmem:[%s1625 + $0x48] sm:$0xff]
        %v1636 = vld [vmem:[%s1625 + $0x50] sm:$0xff]
        %v1637 = vld [vmem:[%s1625 + $0x58] sm:$0xff]
        %v1638 = vrot.slane %v1452, 2
        %v1639 = vsel %vm678, %v1638, 0
        %1641 = vmatprep.subr.mxu0 0.0
        %1642 = vmatpush1.msra.mxu0 %v1626
        %1643 = vmatprep.subr.mxu0 0.0
        %1644 = vmatpush1.msra.mxu0 %v1627
        %1645 = vmatprep.subr.mxu0 0.0
        %1646 = vmatpush1.msra.mxu0 %v1628
        %1647 = vmatprep.subr.mxu0 0.0
        %1648 = vmatpush1.msra.mxu0 %v1629
        %1649 = vmatprep.subr.mxu0 0.0
        %1650 = vmatpush1.msra.mxu0 %v1630
        %1651 = vmatprep.subr.mxu0 0.0
        %1652 = vmatpush1.msra.mxu0 %v1631
        %1653 = vmatprep.subr.mxu0 0.0
        %1654 = vmatpush1.msra.mxu0 %v1632
        %1655 = vmatprep.subr.mxu0 0.0
        %1656 = vmatpush1.msra.mxu0 %v1633
        %1657 = vmatprep.subr.mxu0 0.0
        %1658 = vmatpush1.msra.mxu0 %v1634
        %1659 = vmatprep.subr.mxu0 0.0
        %1660 = vmatpush1.msra.mxu0 %v1635
        %1661 = vmatprep.subr.mxu0 0.0
        %1662 = vmatpush1.msra.mxu0 %v1636
        %1663 = vmatprep.subr.mxu0 0.0
        %1664 = vmatpush1.msra.mxu0 %v1637
        %1665 = vmatprep.subr.mxu0 0.0
        %1666 = vmatpush1.msra.mxu0 0.0
        %1667 = vmatprep.subr.mxu0 0.0
        %1668 = vmatpush1.msra.mxu0 0.0
        %1669 = vmatprep.subr.mxu0 0.0
        %1670 = vmatpush1.msra.mxu0 0.0
        %1671 = vmatprep.subr.mxu0 0.0
        %1672 = vmatpush1.msra.mxu0 0.0
        %1673 = vmatprep.subr.mxu0 0.0
        %1674 = vmatpush1.msra.mxu0 0.0
        %1675 = vmatprep.subr.mxu0 0.0
        %1676 = vmatpush1.msra.mxu0 0.0
        %1677 = vmatprep.subr.mxu0 0.0
        %1678 = vmatpush1.msra.mxu0 0.0
        %1679 = vmatprep.subr.mxu0 0.0
        %1680 = vmatpush1.msra.mxu0 0.0
        %1681 = vmatprep.subr.mxu0 0.0
        %1682 = vmatpush1.msra.mxu0 0.0
        %1683 = vmatprep.subr.mxu0 0.0
        %1684 = vmatpush1.msra.mxu0 0.0
        %1685 = vmatprep.subr.mxu0 0.0
        %1686 = vmatpush1.msra.mxu0 0.0
        %1687 = vmatprep.subr.mxu0 0.0
        %1688 = vmatpush1.msra.mxu0 0.0
        %1689 = vmatprep.subr.mxu0 0.0
        %1690 = vmatpush1.msra.mxu0 0.0
        %1691 = vmatprep.subr.mxu0 0.0
        %1692 = vmatpush1.msra.mxu0 0.0
        %1693 = vmatprep.subr.mxu0 0.0
        %1694 = vmatpush1.msra.mxu0 0.0
        %1695 = vmatprep.subr.mxu0 0.0
        %1696 = vmatpush1.msra.mxu0 0.0
        %1697 = vmatprep.subr.mxu0 0.0
        %1698 = vmatpush1.msra.mxu0 0.0
        %1699 = vmatprep.subr.mxu0 0.0
        %1700 = vmatpush1.msra.mxu0 0.0
        %1701 = vmatprep.subr.mxu0 0.0
        %1702 = vmatpush1.msra.mxu0 0.0
        %1703 = vmatprep.subr.mxu0 0.0
        %1704 = vmatpush1.msra.mxu0 0.0
        %1705 = vmatprep.mubr.f32.mxu0 0.0
        %1706 = vmatmul.mubr.f32.gmra.mrb[0].mxu0 %v1639
        %v1707 = vpop.f32.mrb[0].mxu0
        %v1708 = vadd.f32 0.0, %v1707
        %v1709 = vpop.f32.mrb[0].mxu0
        %1710 = vdwg.mxu0
        %v1711 = vadd.f32 %v1622, %v1708
        %s1712 = scalar_lea.vmem %s7, 288
        %v1713 = vld [vmem:[%s1712] sm:$0xff]
        %v1714 = vld [vmem:[%s1712 + $0x8] sm:$0xff]
        %v1715 = vld [vmem:[%s1712 + $0x10] sm:$0xff]
        %v1716 = vld [vmem:[%s1712 + $0x18] sm:$0xff]
        %v1717 = vld [vmem:[%s1712 + $0x20] sm:$0xff]
        %v1718 = vld [vmem:[%s1712 + $0x28] sm:$0xff]
        %v1719 = vld [vmem:[%s1712 + $0x30] sm:$0xff]
        %v1720 = vld [vmem:[%s1712 + $0x38] sm:$0xff]
        %v1721 = vld [vmem:[%s1712 + $0x40] sm:$0xff]
        %v1722 = vld [vmem:[%s1712 + $0x48] sm:$0xff]
        %v1723 = vld [vmem:[%s1712 + $0x50] sm:$0xff]
        %v1724 = vld [vmem:[%s1712 + $0x58] sm:$0xff]
        %v1725 = vrot.slane %v1452, 3
        %v1726 = vsel %vm678, %v1725, 0
        %1728 = vmatprep.subr.mxu0 0.0
        %1729 = vmatpush1.msra.mxu0 %v1713
        %1730 = vmatprep.subr.mxu0 0.0
        %1731 = vmatpush1.msra.mxu0 %v1714
        %1732 = vmatprep.subr.mxu0 0.0
        %1733 = vmatpush1.msra.mxu0 %v1715
        %1734 = vmatprep.subr.mxu0 0.0
        %1735 = vmatpush1.msra.mxu0 %v1716
        %1736 = vmatprep.subr.mxu0 0.0
        %1737 = vmatpush1.msra.mxu0 %v1717
        %1738 = vmatprep.subr.mxu0 0.0
        %1739 = vmatpush1.msra.mxu0 %v1718
        %1740 = vmatprep.subr.mxu0 0.0
        %1741 = vmatpush1.msra.mxu0 %v1719
        %1742 = vmatprep.subr.mxu0 0.0
        %1743 = vmatpush1.msra.mxu0 %v1720
        %1744 = vmatprep.subr.mxu0 0.0
        %1745 = vmatpush1.msra.mxu0 %v1721
        %1746 = vmatprep.subr.mxu0 0.0
        %1747 = vmatpush1.msra.mxu0 %v1722
        %1748 = vmatprep.subr.mxu0 0.0
        %1749 = vmatpush1.msra.mxu0 %v1723
        %1750 = vmatprep.subr.mxu0 0.0
        %1751 = vmatpush1.msra.mxu0 %v1724
        %1752 = vmatprep.subr.mxu0 0.0
        %1753 = vmatpush1.msra.mxu0 0.0
        %1754 = vmatprep.subr.mxu0 0.0
        %1755 = vmatpush1.msra.mxu0 0.0
        %1756 = vmatprep.subr.mxu0 0.0
        %1757 = vmatpush1.msra.mxu0 0.0
        %1758 = vmatprep.subr.mxu0 0.0
        %1759 = vmatpush1.msra.mxu0 0.0
        %1760 = vmatprep.subr.mxu0 0.0
        %1761 = vmatpush1.msra.mxu0 0.0
        %1762 = vmatprep.subr.mxu0 0.0
        %1763 = vmatpush1.msra.mxu0 0.0
        %1764 = vmatprep.subr.mxu0 0.0
        %1765 = vmatpush1.msra.mxu0 0.0
        %1766 = vmatprep.subr.mxu0 0.0
        %1767 = vmatpush1.msra.mxu0 0.0
        %1768 = vmatprep.subr.mxu0 0.0
        %1769 = vmatpush1.msra.mxu0 0.0
        %1770 = vmatprep.subr.mxu0 0.0
        %1771 = vmatpush1.msra.mxu0 0.0
        %1772 = vmatprep.subr.mxu0 0.0
        %1773 = vmatpush1.msra.mxu0 0.0
        %1774 = vmatprep.subr.mxu0 0.0
        %1775 = vmatpush1.msra.mxu0 0.0
        %1776 = vmatprep.subr.mxu0 0.0
        %1777 = vmatpush1.msra.mxu0 0.0
        %1778 = vmatprep.subr.mxu0 0.0
        %1779 = vmatpush1.msra.mxu0 0.0
        %1780 = vmatprep.subr.mxu0 0.0
        %1781 = vmatpush1.msra.mxu0 0.0
        %1782 = vmatprep.subr.mxu0 0.0
        %1783 = vmatpush1.msra.mxu0 0.0
        %1784 = vmatprep.subr.mxu0 0.0
        %1785 = vmatpush1.msra.mxu0 0.0
        %1786 = vmatprep.subr.mxu0 0.0
        %1787 = vmatpush1.msra.mxu0 0.0
        %1788 = vmatprep.subr.mxu0 0.0
        %1789 = vmatpush1.msra.mxu0 0.0
        %1790 = vmatprep.subr.mxu0 0.0
        %1791 = vmatpush1.msra.mxu0 0.0
        %1792 = vmatprep.mubr.f32.mxu0 0.0
        %1793 = vmatmul.mubr.f32.gmra.mrb[0].mxu0 %v1726
        %v1794 = vpop.f32.mrb[0].mxu0
        %v1795 = vadd.f32 0.0, %v1794
        %v1796 = vpop.f32.mrb[0].mxu0
        %1797 = vdwg.mxu0
        %v1798 = vadd.f32 %v1711, %v1795
        %s1799 = scalar_lea.vmem %s7, 384
        %v1800 = vld [vmem:[%s1799] sm:$0xff]
        %v1801 = vld [vmem:[%s1799 + $0x8] sm:$0xff]
        %v1802 = vld [vmem:[%s1799 + $0x10] sm:$0xff]
        %v1803 = vld [vmem:[%s1799 + $0x18] sm:$0xff]
        %v1804 = vld [vmem:[%s1799 + $0x20] sm:$0xff]
        %v1805 = vld [vmem:[%s1799 + $0x28] sm:$0xff]
        %v1806 = vld [vmem:[%s1799 + $0x30] sm:$0xff]
        %v1807 = vld [vmem:[%s1799 + $0x38] sm:$0xff]
        %v1808 = vld [vmem:[%s1799 + $0x40] sm:$0xff]
        %v1809 = vld [vmem:[%s1799 + $0x48] sm:$0xff]
        %v1810 = vld [vmem:[%s1799 + $0x50] sm:$0xff]
        %v1811 = vld [vmem:[%s1799 + $0x58] sm:$0xff]
        %v1812 = vrot.slane %v1452, 4
        %v1813 = vsel %vm678, %v1812, 0
        %1815 = vmatprep.subr.mxu0 0.0
        %1816 = vmatpush1.msra.mxu0 %v1800
        %1817 = vmatprep.subr.mxu0 0.0
        %1818 = vmatpush1.msra.mxu0 %v1801
        %1819 = vmatprep.subr.mxu0 0.0
        %1820 = vmatpush1.msra.mxu0 %v1802
        %1821 = vmatprep.subr.mxu0 0.0
        %1822 = vmatpush1.msra.mxu0 %v1803
        %1823 = vmatprep.subr.mxu0 0.0
        %1824 = vmatpush1.msra.mxu0 %v1804
        %1825 = vmatprep.subr.mxu0 0.0
        %1826 = vmatpush1.msra.mxu0 %v1805
        %1827 = vmatprep.subr.mxu0 0.0
        %1828 = vmatpush1.msra.mxu0 %v1806
        %1829 = vmatprep.subr.mxu0 0.0
        %1830 = vmatpush1.msra.mxu0 %v1807
        %1831 = vmatprep.subr.mxu0 0.0
        %1832 = vmatpush1.msra.mxu0 %v1808
        %1833 = vmatprep.subr.mxu0 0.0
        %1834 = vmatpush1.msra.mxu0 %v1809
        %1835 = vmatprep.subr.mxu0 0.0
        %1836 = vmatpush1.msra.mxu0 %v1810
        %1837 = vmatprep.subr.mxu0 0.0
        %1838 = vmatpush1.msra.mxu0 %v1811
        %1839 = vmatprep.subr.mxu0 0.0
        %1840 = vmatpush1.msra.mxu0 0.0
        %1841 = vmatprep.subr.mxu0 0.0
        %1842 = vmatpush1.msra.mxu0 0.0
        %1843 = vmatprep.subr.mxu0 0.0
        %1844 = vmatpush1.msra.mxu0 0.0
        %1845 = vmatprep.subr.mxu0 0.0
        %1846 = vmatpush1.msra.mxu0 0.0
        %1847 = vmatprep.subr.mxu0 0.0
        %1848 = vmatpush1.msra.mxu0 0.0
        %1849 = vmatprep.subr.mxu0 0.0
        %1850 = vmatpush1.msra.mxu0 0.0
        %1851 = vmatprep.subr.mxu0 0.0
        %1852 = vmatpush1.msra.mxu0 0.0
        %1853 = vmatprep.subr.mxu0 0.0
        %1854 = vmatpush1.msra.mxu0 0.0
        %1855 = vmatprep.subr.mxu0 0.0
        %1856 = vmatpush1.msra.mxu0 0.0
        %1857 = vmatprep.subr.mxu0 0.0
        %1858 = vmatpush1.msra.mxu0 0.0
        %1859 = vmatprep.subr.mxu0 0.0
        %1860 = vmatpush1.msra.mxu0 0.0
        %1861 = vmatprep.subr.mxu0 0.0
        %1862 = vmatpush1.msra.mxu0 0.0
        %1863 = vmatprep.subr.mxu0 0.0
        %1864 = vmatpush1.msra.mxu0 0.0
        %1865 = vmatprep.subr.mxu0 0.0
        %1866 = vmatpush1.msra.mxu0 0.0
        %1867 = vmatprep.subr.mxu0 0.0
        %1868 = vmatpush1.msra.mxu0 0.0
        %1869 = vmatprep.subr.mxu0 0.0
        %1870 = vmatpush1.msra.mxu0 0.0
        %1871 = vmatprep.subr.mxu0 0.0
        %1872 = vmatpush1.msra.mxu0 0.0
        %1873 = vmatprep.subr.mxu0 0.0
        %1874 = vmatpush1.msra.mxu0 0.0
        %1875 = vmatprep.subr.mxu0 0.0
        %1876 = vmatpush1.msra.mxu0 0.0
        %1877 = vmatprep.subr.mxu0 0.0
        %1878 = vmatpush1.msra.mxu0 0.0
        %1879 = vmatprep.mubr.f32.mxu0 0.0
        %1880 = vmatmul.mubr.f32.gmra.mrb[0].mxu0 %v1813
        %v1881 = vpop.f32.mrb[0].mxu0
        %v1882 = vadd.f32 0.0, %v1881
        %v1883 = vpop.f32.mrb[0].mxu0
        %1884 = vdwg.mxu0
        %v1885 = vadd.f32 %v1798, %v1882
        %s1886 = scalar_lea.vmem %s7, 480
        %v1887 = vld [vmem:[%s1886] sm:$0xff]
        %v1888 = vld [vmem:[%s1886 + $0x8] sm:$0xff]
        %v1889 = vld [vmem:[%s1886 + $0x10] sm:$0xff]
        %v1890 = vld [vmem:[%s1886 + $0x18] sm:$0xff]
        %v1891 = vld [vmem:[%s1886 + $0x20] sm:$0xff]
        %v1892 = vld [vmem:[%s1886 + $0x28] sm:$0xff]
        %v1893 = vld [vmem:[%s1886 + $0x30] sm:$0xff]
        %v1894 = vld [vmem:[%s1886 + $0x38] sm:$0xff]
        %v1895 = vld [vmem:[%s1886 + $0x40] sm:$0xff]
        %v1896 = vld [vmem:[%s1886 + $0x48] sm:$0xff]
        %v1897 = vld [vmem:[%s1886 + $0x50] sm:$0xff]
        %v1898 = vld [vmem:[%s1886 + $0x58] sm:$0xff]
        %v1899 = vrot.slane %v1452, 5
        %v1900 = vsel %vm678, %v1899, 0
        %1902 = vmatprep.subr.mxu0 0.0
        %1903 = vmatpush1.msra.mxu0 %v1887
        %1904 = vmatprep.subr.mxu0 0.0
        %1905 = vmatpush1.msra.mxu0 %v1888
        %1906 = vmatprep.subr.mxu0 0.0
        %1907 = vmatpush1.msra.mxu0 %v1889
        %1908 = vmatprep.subr.mxu0 0.0
        %1909 = vmatpush1.msra.mxu0 %v1890
        %1910 = vmatprep.subr.mxu0 0.0
        %1911 = vmatpush1.msra.mxu0 %v1891
        %1912 = vmatprep.subr.mxu0 0.0
        %1913 = vmatpush1.msra.mxu0 %v1892
        %1914 = vmatprep.subr.mxu0 0.0
        %1915 = vmatpush1.msra.mxu0 %v1893
        %1916 = vmatprep.subr.mxu0 0.0
        %1917 = vmatpush1.msra.mxu0 %v1894
        %1918 = vmatprep.subr.mxu0 0.0
        %1919 = vmatpush1.msra.mxu0 %v1895
        %1920 = vmatprep.subr.mxu0 0.0
        %1921 = vmatpush1.msra.mxu0 %v1896
        %1922 = vmatprep.subr.mxu0 0.0
        %1923 = vmatpush1.msra.mxu0 %v1897
        %1924 = vmatprep.subr.mxu0 0.0
        %1925 = vmatpush1.msra.mxu0 %v1898
        %1926 = vmatprep.subr.mxu0 0.0
        %1927 = vmatpush1.msra.mxu0 0.0
        %1928 = vmatprep.subr.mxu0 0.0
        %1929 = vmatpush1.msra.mxu0 0.0
        %1930 = vmatprep.subr.mxu0 0.0
        %1931 = vmatpush1.msra.mxu0 0.0
        %1932 = vmatprep.subr.mxu0 0.0
        %1933 = vmatpush1.msra.mxu0 0.0
        %1934 = vmatprep.subr.mxu0 0.0
        %1935 = vmatpush1.msra.mxu0 0.0
        %1936 = vmatprep.subr.mxu0 0.0
        %1937 = vmatpush1.msra.mxu0 0.0
        %1938 = vmatprep.subr.mxu0 0.0
        %1939 = vmatpush1.msra.mxu0 0.0
        %1940 = vmatprep.subr.mxu0 0.0
        %1941 = vmatpush1.msra.mxu0 0.0
        %1942 = vmatprep.subr.mxu0 0.0
        %1943 = vmatpush1.msra.mxu0 0.0
        %1944 = vmatprep.subr.mxu0 0.0
        %1945 = vmatpush1.msra.mxu0 0.0
        %1946 = vmatprep.subr.mxu0 0.0
        %1947 = vmatpush1.msra.mxu0 0.0
        %1948 = vmatprep.subr.mxu0 0.0
        %1949 = vmatpush1.msra.mxu0 0.0
        %1950 = vmatprep.subr.mxu0 0.0
        %1951 = vmatpush1.msra.mxu0 0.0
        %1952 = vmatprep.subr.mxu0 0.0
        %1953 = vmatpush1.msra.mxu0 0.0
        %1954 = vmatprep.subr.mxu0 0.0
        %1955 = vmatpush1.msra.mxu0 0.0
        %1956 = vmatprep.subr.mxu0 0.0
        %1957 = vmatpush1.msra.mxu0 0.0
        %1958 = vmatprep.subr.mxu0 0.0
        %1959 = vmatpush1.msra.mxu0 0.0
        %1960 = vmatprep.subr.mxu0 0.0
        %1961 = vmatpush1.msra.mxu0 0.0
        %1962 = vmatprep.subr.mxu0 0.0
        %1963 = vmatpush1.msra.mxu0 0.0
        %1964 = vmatprep.subr.mxu0 0.0
        %1965 = vmatpush1.msra.mxu0 0.0
        %1966 = vmatprep.mubr.f32.mxu0 0.0
        %1967 = vmatmul.mubr.f32.gmra.mrb[0].mxu0 %v1900
        %v1968 = vpop.f32.mrb[0].mxu0
        %v1969 = vadd.f32 0.0, %v1968
        %v1970 = vpop.f32.mrb[0].mxu0
        %1971 = vdwg.mxu0
        %v1972 = vadd.f32 %v1885, %v1969
        %s1973 = scalar_lea.vmem %s7, 576
        %v1974 = vld [vmem:[%s1973] sm:$0xff]
        %v1975 = vld [vmem:[%s1973 + $0x8] sm:$0xff]
        %v1976 = vld [vmem:[%s1973 + $0x10] sm:$0xff]
        %v1977 = vld [vmem:[%s1973 + $0x18] sm:$0xff]
        %v1978 = vld [vmem:[%s1973 + $0x20] sm:$0xff]
        %v1979 = vld [vmem:[%s1973 + $0x28] sm:$0xff]
        %v1980 = vld [vmem:[%s1973 + $0x30] sm:$0xff]
        %v1981 = vld [vmem:[%s1973 + $0x38] sm:$0xff]
        %v1982 = vld [vmem:[%s1973 + $0x40] sm:$0xff]
        %v1983 = vld [vmem:[%s1973 + $0x48] sm:$0xff]
        %v1984 = vld [vmem:[%s1973 + $0x50] sm:$0xff]
        %v1985 = vld [vmem:[%s1973 + $0x58] sm:$0xff]
        %v1986 = vrot.slane %v1452, 6
        %v1987 = vsel %vm678, %v1986, 0
        %1989 = vmatprep.subr.mxu0 0.0
        %1990 = vmatpush1.msra.mxu0 %v1974
        %1991 = vmatprep.subr.mxu0 0.0
        %1992 = vmatpush1.msra.mxu0 %v1975
        %1993 = vmatprep.subr.mxu0 0.0
        %1994 = vmatpush1.msra.mxu0 %v1976
        %1995 = vmatprep.subr.mxu0 0.0
        %1996 = vmatpush1.msra.mxu0 %v1977
        %1997 = vmatprep.subr.mxu0 0.0
        %1998 = vmatpush1.msra.mxu0 %v1978
        %1999 = vmatprep.subr.mxu0 0.0
        %2000 = vmatpush1.msra.mxu0 %v1979
        %2001 = vmatprep.subr.mxu0 0.0
        %2002 = vmatpush1.msra.mxu0 %v1980
        %2003 = vmatprep.subr.mxu0 0.0
        %2004 = vmatpush1.msra.mxu0 %v1981
        %2005 = vmatprep.subr.mxu0 0.0
        %2006 = vmatpush1.msra.mxu0 %v1982
        %2007 = vmatprep.subr.mxu0 0.0
        %2008 = vmatpush1.msra.mxu0 %v1983
        %2009 = vmatprep.subr.mxu0 0.0
        %2010 = vmatpush1.msra.mxu0 %v1984
        %2011 = vmatprep.subr.mxu0 0.0
        %2012 = vmatpush1.msra.mxu0 %v1985
        %2013 = vmatprep.subr.mxu0 0.0
        %2014 = vmatpush1.msra.mxu0 0.0
        %2015 = vmatprep.subr.mxu0 0.0
        %2016 = vmatpush1.msra.mxu0 0.0
        %2017 = vmatprep.subr.mxu0 0.0
        %2018 = vmatpush1.msra.mxu0 0.0
        %2019 = vmatprep.subr.mxu0 0.0
        %2020 = vmatpush1.msra.mxu0 0.0
        %2021 = vmatprep.subr.mxu0 0.0
        %2022 = vmatpush1.msra.mxu0 0.0
        %2023 = vmatprep.subr.mxu0 0.0
        %2024 = vmatpush1.msra.mxu0 0.0
        %2025 = vmatprep.subr.mxu0 0.0
        %2026 = vmatpush1.msra.mxu0 0.0
        %2027 = vmatprep.subr.mxu0 0.0
        %2028 = vmatpush1.msra.mxu0 0.0
        %2029 = vmatprep.subr.mxu0 0.0
        %2030 = vmatpush1.msra.mxu0 0.0
        %2031 = vmatprep.subr.mxu0 0.0
        %2032 = vmatpush1.msra.mxu0 0.0
        %2033 = vmatprep.subr.mxu0 0.0
        %2034 = vmatpush1.msra.mxu0 0.0
        %2035 = vmatprep.subr.mxu0 0.0
        %2036 = vmatpush1.msra.mxu0 0.0
        %2037 = vmatprep.subr.mxu0 0.0
        %2038 = vmatpush1.msra.mxu0 0.0
        %2039 = vmatprep.subr.mxu0 0.0
        %2040 = vmatpush1.msra.mxu0 0.0
        %2041 = vmatprep.subr.mxu0 0.0
        %2042 = vmatpush1.msra.mxu0 0.0
        %2043 = vmatprep.subr.mxu0 0.0
        %2044 = vmatpush1.msra.mxu0 0.0
        %2045 = vmatprep.subr.mxu0 0.0
        %2046 = vmatpush1.msra.mxu0 0.0
        %2047 = vmatprep.subr.mxu0 0.0
        %2048 = vmatpush1.msra.mxu0 0.0
        %2049 = vmatprep.subr.mxu0 0.0
        %2050 = vmatpush1.msra.mxu0 0.0
        %2051 = vmatprep.subr.mxu0 0.0
        %2052 = vmatpush1.msra.mxu0 0.0
        %2053 = vmatprep.mubr.f32.mxu0 0.0
        %2054 = vmatmul.mubr.f32.gmra.mrb[0].mxu0 %v1987
        %v2055 = vpop.f32.mrb[0].mxu0
        %v2056 = vadd.f32 0.0, %v2055
        %v2057 = vpop.f32.mrb[0].mxu0
        %2058 = vdwg.mxu0
        %v2059 = vadd.f32 %v1972, %v2056
        %s2060 = scalar_lea.vmem %s7, 672
        %v2061 = vld [vmem:[%s2060] sm:$0xff]
        %v2062 = vld [vmem:[%s2060 + $0x8] sm:$0xff]
        %v2063 = vld [vmem:[%s2060 + $0x10] sm:$0xff]
        %v2064 = vld [vmem:[%s2060 + $0x18] sm:$0xff]
        %v2065 = vld [vmem:[%s2060 + $0x20] sm:$0xff]
        %v2066 = vld [vmem:[%s2060 + $0x28] sm:$0xff]
        %v2067 = vld [vmem:[%s2060 + $0x30] sm:$0xff]
        %v2068 = vld [vmem:[%s2060 + $0x38] sm:$0xff]
        %v2069 = vld [vmem:[%s2060 + $0x40] sm:$0xff]
        %v2070 = vld [vmem:[%s2060 + $0x48] sm:$0xff]
        %v2071 = vld [vmem:[%s2060 + $0x50] sm:$0xff]
        %v2072 = vld [vmem:[%s2060 + $0x58] sm:$0xff]
        %v2073 = vrot.slane %v1452, 7
        %v2074 = vsel %vm678, %v2073, 0
        %2076 = vmatprep.subr.mxu0 0.0
        %2077 = vmatpush1.msra.mxu0 %v2061
        %2078 = vmatprep.subr.mxu0 0.0
        %2079 = vmatpush1.msra.mxu0 %v2062
        %2080 = vmatprep.subr.mxu0 0.0
        %2081 = vmatpush1.msra.mxu0 %v2063
        %2082 = vmatprep.subr.mxu0 0.0
        %2083 = vmatpush1.msra.mxu0 %v2064
        %2084 = vmatprep.subr.mxu0 0.0
        %2085 = vmatpush1.msra.mxu0 %v2065
        %2086 = vmatprep.subr.mxu0 0.0
        %2087 = vmatpush1.msra.mxu0 %v2066
        %2088 = vmatprep.subr.mxu0 0.0
        %2089 = vmatpush1.msra.mxu0 %v2067
        %2090 = vmatprep.subr.mxu0 0.0
        %2091 = vmatpush1.msra.mxu0 %v2068
        %2092 = vmatprep.subr.mxu0 0.0
        %2093 = vmatpush1.msra.mxu0 %v2069
        %2094 = vmatprep.subr.mxu0 0.0
        %2095 = vmatpush1.msra.mxu0 %v2070
        %2096 = vmatprep.subr.mxu0 0.0
        %2097 = vmatpush1.msra.mxu0 %v2071
        %2098 = vmatprep.subr.mxu0 0.0
        %2099 = vmatpush1.msra.mxu0 %v2072
        %2100 = vmatprep.subr.mxu0 0.0
        %2101 = vmatpush1.msra.mxu0 0.0
        %2102 = vmatprep.subr.mxu0 0.0
        %2103 = vmatpush1.msra.mxu0 0.0
        %2104 = vmatprep.subr.mxu0 0.0
        %2105 = vmatpush1.msra.mxu0 0.0
        %2106 = vmatprep.subr.mxu0 0.0
        %2107 = vmatpush1.msra.mxu0 0.0
        %2108 = vmatprep.subr.mxu0 0.0
        %2109 = vmatpush1.msra.mxu0 0.0
        %2110 = vmatprep.subr.mxu0 0.0
        %2111 = vmatpush1.msra.mxu0 0.0
        %2112 = vmatprep.subr.mxu0 0.0
        %2113 = vmatpush1.msra.mxu0 0.0
        %2114 = vmatprep.subr.mxu0 0.0
        %2115 = vmatpush1.msra.mxu0 0.0
        %2116 = vmatprep.subr.mxu0 0.0
        %2117 = vmatpush1.msra.mxu0 0.0
        %2118 = vmatprep.subr.mxu0 0.0
        %2119 = vmatpush1.msra.mxu0 0.0
        %2120 = vmatprep.subr.mxu0 0.0
        %2121 = vmatpush1.msra.mxu0 0.0
        %2122 = vmatprep.subr.mxu0 0.0
        %2123 = vmatpush1.msra.mxu0 0.0
        %2124 = vmatprep.subr.mxu0 0.0
        %2125 = vmatpush1.msra.mxu0 0.0
        %2126 = vmatprep.subr.mxu0 0.0
        %2127 = vmatpush1.msra.mxu0 0.0
        %2128 = vmatprep.subr.mxu0 0.0
        %2129 = vmatpush1.msra.mxu0 0.0
        %2130 = vmatprep.subr.mxu0 0.0
        %2131 = vmatpush1.msra.mxu0 0.0
        %2132 = vmatprep.subr.mxu0 0.0
        %2133 = vmatpush1.msra.mxu0 0.0
        %2134 = vmatprep.subr.mxu0 0.0
        %2135 = vmatpush1.msra.mxu0 0.0
        %2136 = vmatprep.subr.mxu0 0.0
        %2137 = vmatpush1.msra.mxu0 0.0
        %2138 = vmatprep.subr.mxu0 0.0
        %2139 = vmatpush1.msra.mxu0 0.0
        %2140 = vmatprep.mubr.f32.mxu0 0.0
        %2141 = vmatmul.mubr.f32.gmra.mrb[0].mxu0 %v2074
        %v2142 = vpop.f32.mrb[0].mxu0
        %v2143 = vadd.f32 0.0, %v2142
        %v2144 = vpop.f32.mrb[0].mxu0
        %2145 = vdwg.mxu0
        %v2146 = vadd.f32 %v2059, %v2143
        %s2147 = scalar_lea.vmem %s7, 768
        %v2148 = vld [vmem:[%s2147] sm:$0xff]
        %v2149 = vld [vmem:[%s2147 + $0x8] sm:$0xff]
        %v2150 = vld [vmem:[%s2147 + $0x10] sm:$0xff]
        %v2151 = vld [vmem:[%s2147 + $0x18] sm:$0xff]
        %v2152 = vld [vmem:[%s2147 + $0x20] sm:$0xff]
        %v2153 = vld [vmem:[%s2147 + $0x28] sm:$0xff]
        %v2154 = vld [vmem:[%s2147 + $0x30] sm:$0xff]
        %v2155 = vld [vmem:[%s2147 + $0x38] sm:$0xff]
        %v2156 = vld [vmem:[%s2147 + $0x40] sm:$0xff]
        %v2157 = vld [vmem:[%s2147 + $0x48] sm:$0xff]
        %v2158 = vld [vmem:[%s2147 + $0x50] sm:$0xff]
        %v2159 = vld [vmem:[%s2147 + $0x58] sm:$0xff]
        %v2161 = vsel %vm678, %v1453, 0
        %2163 = vmatprep.subr.mxu0 0.0
        %2164 = vmatpush1.msra.mxu0 %v2148
        %2165 = vmatprep.subr.mxu0 0.0
        %2166 = vmatpush1.msra.mxu0 %v2149
        %2167 = vmatprep.subr.mxu0 0.0
        %2168 = vmatpush1.msra.mxu0 %v2150
        %2169 = vmatprep.subr.mxu0 0.0
        %2170 = vmatpush1.msra.mxu0 %v2151
        %2171 = vmatprep.subr.mxu0 0.0
        %2172 = vmatpush1.msra.mxu0 %v2152
        %2173 = vmatprep.subr.mxu0 0.0
        %2174 = vmatpush1.msra.mxu0 %v2153
        %2175 = vmatprep.subr.mxu0 0.0
        %2176 = vmatpush1.msra.mxu0 %v2154
        %2177 = vmatprep.subr.mxu0 0.0
        %2178 = vmatpush1.msra.mxu0 %v2155
        %2179 = vmatprep.subr.mxu0 0.0
        %2180 = vmatpush1.msra.mxu0 %v2156
        %2181 = vmatprep.subr.mxu0 0.0
        %2182 = vmatpush1.msra.mxu0 %v2157
        %2183 = vmatprep.subr.mxu0 0.0
        %2184 = vmatpush1.msra.mxu0 %v2158
        %2185 = vmatprep.subr.mxu0 0.0
        %2186 = vmatpush1.msra.mxu0 %v2159
        %2187 = vmatprep.subr.mxu0 0.0
        %2188 = vmatpush1.msra.mxu0 0.0
        %2189 = vmatprep.subr.mxu0 0.0
        %2190 = vmatpush1.msra.mxu0 0.0
        %2191 = vmatprep.subr.mxu0 0.0
        %2192 = vmatpush1.msra.mxu0 0.0
        %2193 = vmatprep.subr.mxu0 0.0
        %2194 = vmatpush1.msra.mxu0 0.0
        %2195 = vmatprep.subr.mxu0 0.0
        %2196 = vmatpush1.msra.mxu0 0.0
        %2197 = vmatprep.subr.mxu0 0.0
        %2198 = vmatpush1.msra.mxu0 0.0
        %2199 = vmatprep.subr.mxu0 0.0
        %2200 = vmatpush1.msra.mxu0 0.0
        %2201 = vmatprep.subr.mxu0 0.0
        %2202 = vmatpush1.msra.mxu0 0.0
        %2203 = vmatprep.subr.mxu0 0.0
        %2204 = vmatpush1.msra.mxu0 0.0
        %2205 = vmatprep.subr.mxu0 0.0
        %2206 = vmatpush1.msra.mxu0 0.0
        %2207 = vmatprep.subr.mxu0 0.0
        %2208 = vmatpush1.msra.mxu0 0.0
        %2209 = vmatprep.subr.mxu0 0.0
        %2210 = vmatpush1.msra.mxu0 0.0
        %2211 = vmatprep.subr.mxu0 0.0
        %2212 = vmatpush1.msra.mxu0 0.0
        %2213 = vmatprep.subr.mxu0 0.0
        %2214 = vmatpush1.msra.mxu0 0.0
        %2215 = vmatprep.subr.mxu0 0.0
        %2216 = vmatpush1.msra.mxu0 0.0
        %2217 = vmatprep.subr.mxu0 0.0
        %2218 = vmatpush1.msra.mxu0 0.0
        %2219 = vmatprep.subr.mxu0 0.0
        %2220 = vmatpush1.msra.mxu0 0.0
        %2221 = vmatprep.subr.mxu0 0.0
        %2222 = vmatpush1.msra.mxu0 0.0
        %2223 = vmatprep.subr.mxu0 0.0
        %2224 = vmatpush1.msra.mxu0 0.0
        %2225 = vmatprep.subr.mxu0 0.0
        %2226 = vmatpush1.msra.mxu0 0.0
        %2227 = vmatprep.mubr.f32.mxu0 0.0
        %2228 = vmatmul.mubr.f32.gmra.mrb[0].mxu0 %v2161
        %v2229 = vpop.f32.mrb[0].mxu0
        %v2230 = vadd.f32 0.0, %v2229
        %v2231 = vpop.f32.mrb[0].mxu0
        %2232 = vdwg.mxu0
        %v2233 = vadd.f32 %v2146, %v2230
        %s2234 = scalar_lea.vmem %s7, 864
        %v2235 = vld [vmem:[%s2234] sm:$0xff]
        %v2236 = vld [vmem:[%s2234 + $0x8] sm:$0xff]
        %v2237 = vld [vmem:[%s2234 + $0x10] sm:$0xff]
        %v2238 = vld [vmem:[%s2234 + $0x18] sm:$0xff]
        %v2239 = vld [vmem:[%s2234 + $0x20] sm:$0xff]
        %v2240 = vld [vmem:[%s2234 + $0x28] sm:$0xff]
        %v2241 = vld [vmem:[%s2234 + $0x30] sm:$0xff]
        %v2242 = vld [vmem:[%s2234 + $0x38] sm:$0xff]
        %v2243 = vld [vmem:[%s2234 + $0x40] sm:$0xff]
        %v2244 = vld [vmem:[%s2234 + $0x48] sm:$0xff]
        %v2245 = vld [vmem:[%s2234 + $0x50] sm:$0xff]
        %v2246 = vld [vmem:[%s2234 + $0x58] sm:$0xff]
        %v2247 = vrot.slane %v1453, 1
        %v2248 = vsel %vm678, %v2247, 0
        %2250 = vmatprep.subr.mxu0 0.0
        %2251 = vmatpush1.msra.mxu0 %v2235
        %2252 = vmatprep.subr.mxu0 0.0
        %2253 = vmatpush1.msra.mxu0 %v2236
        %2254 = vmatprep.subr.mxu0 0.0
        %2255 = vmatpush1.msra.mxu0 %v2237
        %2256 = vmatprep.subr.mxu0 0.0
        %2257 = vmatpush1.msra.mxu0 %v2238
        %2258 = vmatprep.subr.mxu0 0.0
        %2259 = vmatpush1.msra.mxu0 %v2239
        %2260 = vmatprep.subr.mxu0 0.0
        %2261 = vmatpush1.msra.mxu0 %v2240
        %2262 = vmatprep.subr.mxu0 0.0
        %2263 = vmatpush1.msra.mxu0 %v2241
        %2264 = vmatprep.subr.mxu0 0.0
        %2265 = vmatpush1.msra.mxu0 %v2242
        %2266 = vmatprep.subr.mxu0 0.0
        %2267 = vmatpush1.msra.mxu0 %v2243
        %2268 = vmatprep.subr.mxu0 0.0
        %2269 = vmatpush1.msra.mxu0 %v2244
        %2270 = vmatprep.subr.mxu0 0.0
        %2271 = vmatpush1.msra.mxu0 %v2245
        %2272 = vmatprep.subr.mxu0 0.0
        %2273 = vmatpush1.msra.mxu0 %v2246
        %2274 = vmatprep.subr.mxu0 0.0
        %2275 = vmatpush1.msra.mxu0 0.0
        %2276 = vmatprep.subr.mxu0 0.0
        %2277 = vmatpush1.msra.mxu0 0.0
        %2278 = vmatprep.subr.mxu0 0.0
        %2279 = vmatpush1.msra.mxu0 0.0
        %2280 = vmatprep.subr.mxu0 0.0
        %2281 = vmatpush1.msra.mxu0 0.0
        %2282 = vmatprep.subr.mxu0 0.0
        %2283 = vmatpush1.msra.mxu0 0.0
        %2284 = vmatprep.subr.mxu0 0.0
        %2285 = vmatpush1.msra.mxu0 0.0
        %2286 = vmatprep.subr.mxu0 0.0
        %2287 = vmatpush1.msra.mxu0 0.0
        %2288 = vmatprep.subr.mxu0 0.0
        %2289 = vmatpush1.msra.mxu0 0.0
        %2290 = vmatprep.subr.mxu0 0.0
        %2291 = vmatpush1.msra.mxu0 0.0
        %2292 = vmatprep.subr.mxu0 0.0
        %2293 = vmatpush1.msra.mxu0 0.0
        %2294 = vmatprep.subr.mxu0 0.0
        %2295 = vmatpush1.msra.mxu0 0.0
        %2296 = vmatprep.subr.mxu0 0.0
        %2297 = vmatpush1.msra.mxu0 0.0
        %2298 = vmatprep.subr.mxu0 0.0
        %2299 = vmatpush1.msra.mxu0 0.0
        %2300 = vmatprep.subr.mxu0 0.0
        %2301 = vmatpush1.msra.mxu0 0.0
        %2302 = vmatprep.subr.mxu0 0.0
        %2303 = vmatpush1.msra.mxu0 0.0
        %2304 = vmatprep.subr.mxu0 0.0
        %2305 = vmatpush1.msra.mxu0 0.0
        %2306 = vmatprep.subr.mxu0 0.0
        %2307 = vmatpush1.msra.mxu0 0.0
        %2308 = vmatprep.subr.mxu0 0.0
        %2309 = vmatpush1.msra.mxu0 0.0
        %2310 = vmatprep.subr.mxu0 0.0
        %2311 = vmatpush1.msra.mxu0 0.0
        %2312 = vmatprep.subr.mxu0 0.0
        %2313 = vmatpush1.msra.mxu0 0.0
        %2314 = vmatprep.mubr.f32.mxu0 0.0
        %2315 = vmatmul.mubr.f32.gmra.mrb[0].mxu0 %v2248
        %v2316 = vpop.f32.mrb[0].mxu0
        %v2317 = vadd.f32 0.0, %v2316
        %v2318 = vpop.f32.mrb[0].mxu0
        %2319 = vdwg.mxu0
        %v2320 = vadd.f32 %v2233, %v2317
        %s2321 = scalar_lea.vmem %s7, 960
        %v2322 = vld [vmem:[%s2321] sm:$0xff]
        %v2323 = vld [vmem:[%s2321 + $0x8] sm:$0xff]
        %v2324 = vld [vmem:[%s2321 + $0x10] sm:$0xff]
        %v2325 = vld [vmem:[%s2321 + $0x18] sm:$0xff]
        %v2326 = vld [vmem:[%s2321 + $0x20] sm:$0xff]
        %v2327 = vld [vmem:[%s2321 + $0x28] sm:$0xff]
        %v2328 = vld [vmem:[%s2321 + $0x30] sm:$0xff]
        %v2329 = vld [vmem:[%s2321 + $0x38] sm:$0xff]
        %v2330 = vld [vmem:[%s2321 + $0x40] sm:$0xff]
        %v2331 = vld [vmem:[%s2321 + $0x48] sm:$0xff]
        %v2332 = vld [vmem:[%s2321 + $0x50] sm:$0xff]
        %v2333 = vld [vmem:[%s2321 + $0x58] sm:$0xff]
        %v2334 = vrot.slane %v1453, 2
        %v2335 = vsel %vm678, %v2334, 0
        %2337 = vmatprep.subr.mxu0 0.0
        %2338 = vmatpush1.msra.mxu0 %v2322
        %2339 = vmatprep.subr.mxu0 0.0
        %2340 = vmatpush1.msra.mxu0 %v2323
        %2341 = vmatprep.subr.mxu0 0.0
        %2342 = vmatpush1.msra.mxu0 %v2324
        %2343 = vmatprep.subr.mxu0 0.0
        %2344 = vmatpush1.msra.mxu0 %v2325
        %2345 = vmatprep.subr.mxu0 0.0
        %2346 = vmatpush1.msra.mxu0 %v2326
        %2347 = vmatprep.subr.mxu0 0.0
        %2348 = vmatpush1.msra.mxu0 %v2327
        %2349 = vmatprep.subr.mxu0 0.0
        %2350 = vmatpush1.msra.mxu0 %v2328
        %2351 = vmatprep.subr.mxu0 0.0
        %2352 = vmatpush1.msra.mxu0 %v2329
        %2353 = vmatprep.subr.mxu0 0.0
        %2354 = vmatpush1.msra.mxu0 %v2330
        %2355 = vmatprep.subr.mxu0 0.0
        %2356 = vmatpush1.msra.mxu0 %v2331
        %2357 = vmatprep.subr.mxu0 0.0
        %2358 = vmatpush1.msra.mxu0 %v2332
        %2359 = vmatprep.subr.mxu0 0.0
        %2360 = vmatpush1.msra.mxu0 %v2333
        %2361 = vmatprep.subr.mxu0 0.0
        %2362 = vmatpush1.msra.mxu0 0.0
        %2363 = vmatprep.subr.mxu0 0.0
        %2364 = vmatpush1.msra.mxu0 0.0
        %2365 = vmatprep.subr.mxu0 0.0
        %2366 = vmatpush1.msra.mxu0 0.0
        %2367 = vmatprep.subr.mxu0 0.0
        %2368 = vmatpush1.msra.mxu0 0.0
        %2369 = vmatprep.subr.mxu0 0.0
        %2370 = vmatpush1.msra.mxu0 0.0
        %2371 = vmatprep.subr.mxu0 0.0
        %2372 = vmatpush1.msra.mxu0 0.0
        %2373 = vmatprep.subr.mxu0 0.0
        %2374 = vmatpush1.msra.mxu0 0.0
        %2375 = vmatprep.subr.mxu0 0.0
        %2376 = vmatpush1.msra.mxu0 0.0
        %2377 = vmatprep.subr.mxu0 0.0
        %2378 = vmatpush1.msra.mxu0 0.0
        %2379 = vmatprep.subr.mxu0 0.0
        %2380 = vmatpush1.msra.mxu0 0.0
        %2381 = vmatprep.subr.mxu0 0.0
        %2382 = vmatpush1.msra.mxu0 0.0
        %2383 = vmatprep.subr.mxu0 0.0
        %2384 = vmatpush1.msra.mxu0 0.0
        %2385 = vmatprep.subr.mxu0 0.0
        %2386 = vmatpush1.msra.mxu0 0.0
        %2387 = vmatprep.subr.mxu0 0.0
        %2388 = vmatpush1.msra.mxu0 0.0
        %2389 = vmatprep.subr.mxu0 0.0
        %2390 = vmatpush1.msra.mxu0 0.0
        %2391 = vmatprep.subr.mxu0 0.0
        %2392 = vmatpush1.msra.mxu0 0.0
        %2393 = vmatprep.subr.mxu0 0.0
        %2394 = vmatpush1.msra.mxu0 0.0
        %2395 = vmatprep.subr.mxu0 0.0
        %2396 = vmatpush1.msra.mxu0 0.0
        %2397 = vmatprep.subr.mxu0 0.0
        %2398 = vmatpush1.msra.mxu0 0.0
        %2399 = vmatprep.subr.mxu0 0.0
        %2400 = vmatpush1.msra.mxu0 0.0
        %2401 = vmatprep.mubr.f32.mxu0 0.0
        %2402 = vmatmul.mubr.f32.gmra.mrb[0].mxu0 %v2335
        %v2403 = vpop.f32.mrb[0].mxu0
        %v2404 = vadd.f32 0.0, %v2403
        %v2405 = vpop.f32.mrb[0].mxu0
        %2406 = vdwg.mxu0
        %v2407 = vadd.f32 %v2320, %v2404
        %s2408 = scalar_lea.vmem %s7, 1056
        %v2409 = vld [vmem:[%s2408] sm:$0xff]
        %v2410 = vld [vmem:[%s2408 + $0x8] sm:$0xff]
        %v2411 = vld [vmem:[%s2408 + $0x10] sm:$0xff]
        %v2412 = vld [vmem:[%s2408 + $0x18] sm:$0xff]
        %v2413 = vld [vmem:[%s2408 + $0x20] sm:$0xff]
        %v2414 = vld [vmem:[%s2408 + $0x28] sm:$0xff]
        %v2415 = vld [vmem:[%s2408 + $0x30] sm:$0xff]
        %v2416 = vld [vmem:[%s2408 + $0x38] sm:$0xff]
        %v2417 = vld [vmem:[%s2408 + $0x40] sm:$0xff]
        %v2418 = vld [vmem:[%s2408 + $0x48] sm:$0xff]
        %v2419 = vld [vmem:[%s2408 + $0x50] sm:$0xff]
        %v2420 = vld [vmem:[%s2408 + $0x58] sm:$0xff]
        %v2421 = vrot.slane %v1453, 3
        %v2422 = vsel %vm678, %v2421, 0
        %2424 = vmatprep.subr.mxu0 0.0
        %2425 = vmatpush1.msra.mxu0 %v2409
        %2426 = vmatprep.subr.mxu0 0.0
        %2427 = vmatpush1.msra.mxu0 %v2410
        %2428 = vmatprep.subr.mxu0 0.0
        %2429 = vmatpush1.msra.mxu0 %v2411
        %2430 = vmatprep.subr.mxu0 0.0
        %2431 = vmatpush1.msra.mxu0 %v2412
        %2432 = vmatprep.subr.mxu0 0.0
        %2433 = vmatpush1.msra.mxu0 %v2413
        %2434 = vmatprep.subr.mxu0 0.0
        %2435 = vmatpush1.msra.mxu0 %v2414
        %2436 = vmatprep.subr.mxu0 0.0
        %2437 = vmatpush1.msra.mxu0 %v2415
        %2438 = vmatprep.subr.mxu0 0.0
        %2439 = vmatpush1.msra.mxu0 %v2416
        %2440 = vmatprep.subr.mxu0 0.0
        %2441 = vmatpush1.msra.mxu0 %v2417
        %2442 = vmatprep.subr.mxu0 0.0
        %2443 = vmatpush1.msra.mxu0 %v2418
        %2444 = vmatprep.subr.mxu0 0.0
        %2445 = vmatpush1.msra.mxu0 %v2419
        %2446 = vmatprep.subr.mxu0 0.0
        %2447 = vmatpush1.msra.mxu0 %v2420
        %2448 = vmatprep.subr.mxu0 0.0
        %2449 = vmatpush1.msra.mxu0 0.0
        %2450 = vmatprep.subr.mxu0 0.0
        %2451 = vmatpush1.msra.mxu0 0.0
        %2452 = vmatprep.subr.mxu0 0.0
        %2453 = vmatpush1.msra.mxu0 0.0
        %2454 = vmatprep.subr.mxu0 0.0
        %2455 = vmatpush1.msra.mxu0 0.0
        %2456 = vmatprep.subr.mxu0 0.0
        %2457 = vmatpush1.msra.mxu0 0.0
        %2458 = vmatprep.subr.mxu0 0.0
        %2459 = vmatpush1.msra.mxu0 0.0
        %2460 = vmatprep.subr.mxu0 0.0
        %2461 = vmatpush1.msra.mxu0 0.0
        %2462 = vmatprep.subr.mxu0 0.0
        %2463 = vmatpush1.msra.mxu0 0.0
        %2464 = vmatprep.subr.mxu0 0.0
        %2465 = vmatpush1.msra.mxu0 0.0
        %2466 = vmatprep.subr.mxu0 0.0
        %2467 = vmatpush1.msra.mxu0 0.0
        %2468 = vmatprep.subr.mxu0 0.0
        %2469 = vmatpush1.msra.mxu0 0.0
        %2470 = vmatprep.subr.mxu0 0.0
        %2471 = vmatpush1.msra.mxu0 0.0
        %2472 = vmatprep.subr.mxu0 0.0
        %2473 = vmatpush1.msra.mxu0 0.0
        %2474 = vmatprep.subr.mxu0 0.0
        %2475 = vmatpush1.msra.mxu0 0.0
        %2476 = vmatprep.subr.mxu0 0.0
        %2477 = vmatpush1.msra.mxu0 0.0
        %2478 = vmatprep.subr.mxu0 0.0
        %2479 = vmatpush1.msra.mxu0 0.0
        %2480 = vmatprep.subr.mxu0 0.0
        %2481 = vmatpush1.msra.mxu0 0.0
        %2482 = vmatprep.subr.mxu0 0.0
        %2483 = vmatpush1.msra.mxu0 0.0
        %2484 = vmatprep.subr.mxu0 0.0
        %2485 = vmatpush1.msra.mxu0 0.0
        %2486 = vmatprep.subr.mxu0 0.0
        %2487 = vmatpush1.msra.mxu0 0.0
        %2488 = vmatprep.mubr.f32.mxu0 0.0
        %2489 = vmatmul.mubr.f32.gmra.mrb[0].mxu0 %v2422
        %v2490 = vpop.f32.mrb[0].mxu0
        %v2491 = vadd.f32 0.0, %v2490
        %v2492 = vpop.f32.mrb[0].mxu0
        %2493 = vdwg.mxu0
        %v2494 = vadd.f32 %v2407, %v2491
        %v2495 = vld [vmem:[%s8] sm:$0x1]
        %v2496 = vadd.f32 %v2494, %v2495
        %v2497 = vsub.f32 0.0, %v2496
        %v2498 = vmul.f32 %v2497, 1.442695
        %v2499 = vpow.pop %v2498
        %v2500 = vadd.f32 %v2499, 1.0
        %v2501 = vrcp.pop %v2500
        %v2502 = vld [vmem:[%s9] sm:$0xff]
        %v2503 = vld [vmem:[%s9 + $0x8] sm:$0xff]
        %v2504 = vld [vmem:[%s9 + $0x10] sm:$0xff]
        %v2505 = vld [vmem:[%s9 + $0x18] sm:$0xff]
        %v2506 = vld [vmem:[%s9 + $0x20] sm:$0xff]
        %v2507 = vld [vmem:[%s9 + $0x28] sm:$0xff]
        %v2508 = vld [vmem:[%s9 + $0x30] sm:$0xff]
        %v2509 = vld [vmem:[%s9 + $0x38] sm:$0xff]
        %v2510 = vld [vmem:[%s10] sm:$0x1]
        %v2512 = vsel %vm1151, %v2501, 0
        %2514 = vmatprep.subr.mxu0 0.0
        %2515 = vmatpush1.msra.mxu0 %v2502
        %2516 = vmatprep.subr.mxu0 0.0
        %2517 = vmatpush1.msra.mxu0 %v2503
        %2518 = vmatprep.subr.mxu0 0.0
        %2519 = vmatpush1.msra.mxu0 %v2504
        %2520 = vmatprep.subr.mxu0 0.0
        %2521 = vmatpush1.msra.mxu0 %v2505
        %2522 = vmatprep.subr.mxu0 0.0
        %2523 = vmatpush1.msra.mxu0 %v2506
        %2524 = vmatprep.subr.mxu0 0.0
        %2525 = vmatpush1.msra.mxu0 %v2507
        %2526 = vmatprep.subr.mxu0 0.0
        %2527 = vmatpush1.msra.mxu0 %v2508
        %2528 = vmatprep.subr.mxu0 0.0
        %2529 = vmatpush1.msra.mxu0 %v2509
        %2530 = vmatprep.subr.mxu0 0.0
        %2531 = vmatpush1.msra.mxu0 0.0
        %2532 = vmatprep.subr.mxu0 0.0
        %2533 = vmatpush1.msra.mxu0 0.0
        %2534 = vmatprep.subr.mxu0 0.0
        %2535 = vmatpush1.msra.mxu0 0.0
        %2536 = vmatprep.subr.mxu0 0.0
        %2537 = vmatpush1.msra.mxu0 0.0
        %2538 = vmatprep.subr.mxu0 0.0
        %2539 = vmatpush1.msra.mxu0 0.0
        %2540 = vmatprep.subr.mxu0 0.0
        %2541 = vmatpush1.msra.mxu0 0.0
        %2542 = vmatprep.subr.mxu0 0.0
        %2543 = vmatpush1.msra.mxu0 0.0
        %2544 = vmatprep.subr.mxu0 0.0
        %2545 = vmatpush1.msra.mxu0 0.0
        %2546 = vmatprep.subr.mxu0 0.0
        %2547 = vmatpush1.msra.mxu0 0.0
        %2548 = vmatprep.subr.mxu0 0.0
        %2549 = vmatpush1.msra.mxu0 0.0
        %2550 = vmatprep.subr.mxu0 0.0
        %2551 = vmatpush1.msra.mxu0 0.0
        %2552 = vmatprep.subr.mxu0 0.0
        %2553 = vmatpush1.msra.mxu0 0.0
        %2554 = vmatprep.subr.mxu0 0.0
        %2555 = vmatpush1.msra.mxu0 0.0
        %2556 = vmatprep.subr.mxu0 0.0
        %2557 = vmatpush1.msra.mxu0 0.0
        %2558 = vmatprep.subr.mxu0 0.0
        %2559 = vmatpush1.msra.mxu0 0.0
        %2560 = vmatprep.subr.mxu0 0.0
        %2561 = vmatpush1.msra.mxu0 0.0
        %2562 = vmatprep.subr.mxu0 0.0
        %2563 = vmatpush1.msra.mxu0 0.0
        %2564 = vmatprep.subr.mxu0 0.0
        %2565 = vmatpush1.msra.mxu0 0.0
        %2566 = vmatprep.subr.mxu0 0.0
        %2567 = vmatpush1.msra.mxu0 0.0
        %2568 = vmatprep.subr.mxu0 0.0
        %2569 = vmatpush1.msra.mxu0 0.0
        %2570 = vmatprep.subr.mxu0 0.0
        %2571 = vmatpush1.msra.mxu0 0.0
        %2572 = vmatprep.subr.mxu0 0.0
        %2573 = vmatpush1.msra.mxu0 0.0
        %2574 = vmatprep.subr.mxu0 0.0
        %2575 = vmatpush1.msra.mxu0 0.0
        %2576 = vmatprep.subr.mxu0 0.0
        %2577 = vmatpush1.msra.mxu0 0.0
        %2578 = vmatprep.mubr.f32.mxu0 0.0
        %2579 = vmatmul.mubr.f32.gmra.mrb[0].mxu0 %v2512
        %v2580 = vpop.f32.mrb[0].mxu0
        %v2581 = vadd.f32 %v2510, %v2580
        %v2582 = vpop.f32.mrb[0].mxu0
        %2583 = vdwg.mxu0
        %v2584 = vmax.f32 %v2581, 0.0
        %vm2585 = vcmask 253952
        %2586 = vst.msk [vmem:[%s378] sm:$0x1] %vm2585, %v2584
        %s2587 = sand.u32 %s269, 1
        %s2588 = scalar_lea.sflag [#allocation5], %s2587
        %s2589 = sand.u32 %s269, 1
        %s2590 = scalar_lea.vmem [#allocation4], %s2589
        // Predicated region
        $region65: #{dqn_forward.1} parent=63 // pred_check
          %p2591 = pneg %p279
        $region66: #{dqn_forward.1} parent=63 // pred_check_branch
          %2593 = sbr.rel (%p2591) target = $region68
        $region67: #{dqn_forward.1} parent=63 // pred_region
          %s2595 = ssub.s32 16, 16
          %2596 = vsyncadd %s2588, %s2595
          %s2597 = smul.addr %s25, 16
          %s2598 = scalar_lea.hbm %s11, %s2597
          %s2600 = sshll.u32 %s2590, 4
          %s2601 = int_to_ptr.vmem [resolvable:$true] %s2600
          %2603 = dma.vmem_to_hbm [thread:$0]  %s2601, 16, %s2598, %s2588
        $region68: #{dqn_forward.1} parent=63 // pred_fallthru
          _
      $region64: #{dqn_forward.1} parent=5 // pred_fallthru
        _
      %p2604 = scmp.le.s32.totalorder 2, %s20
      // Predicated region
      $region69: #{dqn_forward.1} parent=5 // pred_check
        %p2605 = pneg %p2604
      $region70: #{dqn_forward.1} parent=5 // pred_check_branch
        %2607 = sbr.rel (%p2605) target = $region72
      $region71: #{dqn_forward.1} parent=5 // pred_region
        %s2608 = ssub.s32 %s20, 2
        // Predicated region
        $region73: #{dqn_forward.1} parent=71 // pred_check
          %p2609 = pneg %p285
        $region74: #{dqn_forward.1} parent=71 // pred_check_branch
          %2611 = sbr.rel (%p2609) target = $region76
        $region75: #{dqn_forward.1} parent=71 // pred_region
          %s2612 = sand.u32 %s270, 1
          %s2613 = scalar_lea.sflag [#allocation5], %s2612
          %s2614 = sand.u32 %s270, 1
          %s2615 = scalar_lea.vmem [#allocation4], %s2614
          %2616 = dma.done %s2613, 16
        $region76: #{dqn_forward.1} parent=71 // pred_fallthru
          _
      $region72: #{dqn_forward.1} parent=5 // pred_fallthru
        _
    $region6: #{dqn_forward.1} parent=1 // loop_footer
      %s24 = sadd.s32 1, %s20
    $region7: #{dqn_forward.1} parent=1 // loop_footer_branch
      %19 = sbr.rel target = $region3
    $region8: #{dqn_forward.1} parent=1 // loop_exit
      _
    %2617 = vsyncpa [#allocation5], 1
    %s2618 = scalar_lea.sflag [#allocation5], 1
    %2619 = vsyncpa %s2618, 1

</llo_original>
